<compile_context>
chip_gen: v7x
topology: tpu7x:2x2x1
jax: 0.10.0
libtpu: 0.0.40
codegen_flags: <defaults>
</compile_context>

<pallas_src>
import math

import jax
import jax.numpy as jnp
import numpy as np
from jax.experimental import pallas as pl
from jax.experimental.pallas import tpu as pltpu

D = 32           # d_emb
H = 4            # n_heads
DH = D // H      # d_head
K = 8            # n_neighbors
N = 16           # number of nodes
B = 2            # number of graphs in the batch
E = N * K        # number of edges (node-major)
BN_EPS = 1e-5

_VMEM = pl.BlockSpec(memory_space=pltpu.MemorySpace.VMEM)

# [H, D] head-expansion matrix: row h has ones on lanes h*DH .. h*DH+DH-1.
_EXPAND = np.kron(np.eye(H, dtype=np.float32), np.ones((1, DH), np.float32))

# ----------------------------- packed operand layouts ------------------------------
# Weight slab: each entry left-aligned (lane offset 0), row offsets multiples of 8.
_W_LAYOUT = [
    ("Wi",    D,     2 * D),   # [aw1_i | 0]        (hi projection, att half only)
    ("We",    D,     2 * D),   # [aw1_e | nw1_e]    (e projection)
    ("Wj",    D,     2 * D),   # [aw1_j | nw1_j]    (hj projection)
    ("W2",    2 * D, 2 * D),   # blockdiag(aw2, nw2)
    ("W3",    2 * D, 2 * D),   # blockdiag(aw3_folded, nw3)
    ("to_w",  D,     D),
    ("fw1",   D,     4 * D),
    ("fw2",   4 * D, D),
    ("ew1_i", D, D), ("ew1_e", D, D), ("ew1_j", D, D),
    ("ew2",   D, D), ("ew3",   D, D),
    ("gw1",   D, D), ("gw2",   D, D), ("gw3",   D, D),
]
_W_OFF = {}
_r = 0
for _n, _rows, _cols in _W_LAYOUT:
    _W_OFF[_n] = (_r, _rows, _cols)
    _r += _rows
W_ROWS = _r                     # 672
W_COLS = 4 * D                  # 128

# Bias/scale slab: one row vector per entry (left-aligned).
_B_LAYOUT = [
    ("b1", 2 * D), ("b2", 2 * D), ("b3", 2 * D),
    ("bn1_s", D), ("bn1_o", D),
    ("fb1", 4 * D), ("fb2", D),
    ("bn2_s", D), ("bn2_o", D),
    ("eb1", D), ("eb2", D), ("eb3", D),
    ("bne_s", D), ("bne_o", D),
    ("gb1", D), ("gb2", D), ("gb3", D),
]
_B_OFF = {name: (i, cols) for i, (name, cols) in enumerate(_B_LAYOUT)}
B_ROWS = 8 * ((len(_B_LAYOUT) + 7) // 8)   # 24
B_COLS = 4 * D                             # 128


def _gelu(x):  # exact (erf) GELU, matching torch.nn.GELU default
    return 0.5 * x * (1.0 + jax.lax.erf(x * (1.0 / math.sqrt(2.0))))


# ------------------------------ fused Pallas kernel --------------------------------

def _pignn_fused_kernel(dst_ref, h_ref, e_ref, mask_ref, masktn_ref,
                        w_ref, b_ref, h_out_ref, e_out_ref):
    def dot(a, bm):
        return jnp.dot(a, bm, preferred_element_type=jnp.float32)

    def W(name):                                   # static, lane-0-aligned slab slice
        r0, rr, cc = _W_OFF[name]
        return w_ref[r0:r0 + rr, :cc]

    def BV(name):                                  # [1, cols] bias / scale row
        r0, cc = _B_OFF[name]
        return b_ref[r0:r0 + 1, :cc]

    h = h_ref[...]                                 # [N, D]
    e = e_ref[...]                                 # [E, D]

    # dst one-hot built in-registers (no [E,N] f32 DMA, no wrapper one_hot op)
    ohj = (jax.lax.broadcasted_iota(jnp.int32, (E, N), 1)
           == dst_ref[...]).astype(jnp.float32)    # [E, N]

    # ---- attention MLP + node (value) MLP, block-diagonal fused to 64 lanes ----
    # lanes 0:D   -> attention branch (ReLU activations)
    # lanes D:2D  -> node/value branch (GELU activations)
    base_n = dot(h, W("Wi")) + BV("b1")            # per-node hi term + layer-1 biases
    base_e = jnp.broadcast_to(base_n[:, None, :], (N, K, 2 * D)).reshape(E, 2 * D)
    x1 = dot(e, W("We"))                           # sequential accumulation (MRB on v7x)
    x1 = x1 + dot(ohj, dot(h, W("Wj")))            # hj gather applied after projection
    x1 = x1 + base_e                               # [E, 2D]

    is_att = jax.lax.broadcasted_iota(jnp.int32, (E, 2 * D), 1) < D

    def act(x):                                    # mixed ReLU/GELU via lane mask
        return jnp.where(is_att, jnp.maximum(x, 0.0), _gelu(x))

    x2 = dot(act(x1), W("W2")) + BV("b2")          # [E, 2D]
    x3 = dot(act(x2), W("W3")) + BV("b3")          # [E, 2D]

    # att half already has head-expansion and 1/sqrt(d_head) folded in -> lane-dense
    w_att = x3[:, :D].reshape(N, K, D)
    v = x3[:, D:2 * D].reshape(N, K, D)

    w_att = w_att - jnp.max(w_att, axis=1, keepdims=True)   # per-(node, head) max
    p = jnp.exp(w_att)
    att = p * pl.reciprocal(jnp.sum(p, axis=1, keepdims=True), approx=False)

    # einsum('ijh,ijhd->ihd') + 'i h d -> i (h d)' as one multiply-reduce
    agg = jnp.sum(att * v, axis=1)                 # [N, D]
    dh = dot(agg, W("to_w"))

    # ---- node update (eval-mode BN folded to scale/offset) ----
    x = (h + dh) * BV("bn1_s") + BV("bn1_o")
    y = jnp.maximum(dot(x, W("fw1")) + BV("fb1"), 0.0)       # 128-lane FF
    y = dot(y, W("fw2")) + BV("fb2")
    h_new = (x + y) * BV("bn2_s") + BV("bn2_o")

    # ---- edge update (hi2 as per-node broadcast, hj2 gather after projection) ----
    base2_n = dot(h_new, W("ew1_i")) + BV("eb1")             # [N, D]
    base2_e = jnp.broadcast_to(base2_n[:, None, :], (N, K, D)).reshape(E, D)
    t = dot(e, W("ew1_e"))
    t = t + dot(ohj, dot(h_new, W("ew1_j")))
    t = _gelu(t + base2_e)
    t = _gelu(dot(t, W("ew2")) + BV("eb2"))
    t = dot(t, W("ew3")) + BV("eb3")
    e_out_ref[...] = (e + t) * BV("bne_s") + BV("bne_o")

    # ---- gate: scatter_mean via count-normalized one-hot matmul ----
    c = dot(masktn_ref[...], h_new)                # [B, D] (already the per-graph mean)
    g = jnp.maximum(dot(c, W("gw1")) + BV("gb1"), 0.0)
    g = jnp.maximum(dot(g, W("gw2")) + BV("gb2"), 0.0)
    g = jax.nn.sigmoid(dot(g, W("gw3")) + BV("gb3"))         # [B, D]
    gates = dot(mask_ref[...], g)                  # [N, D] == g[batch_idx]
    h_out_ref[...] = h_new * gates


# --------------------------- one-time parameter packing ----------------------------

def pack_params(P):
    """Fold BN / head-scale, split concat-layer weights, block-diag fuse the att/node
    MLPs, and pack everything into two f32 slabs (2 parameter DMAs instead of ~40).
    Called once, outside the per-call jitted path."""
    f32 = jnp.float32
    expand = jnp.asarray(_EXPAND)                              # [H, D]
    s = 1.0 / math.sqrt(DH)
    aw3f = (P['aw3'] * s) @ expand                             # [D, D]
    ab3f = (P['ab3'] * s) @ expand                             # [1, D]

    def bn_fold(g, b, m, v):
        sc = g * jax.lax.rsqrt(v + BN_EPS)
        return sc, b - m * sc

    bn1_s, bn1_o = bn_fold(P['bn1_g'], P['bn1_b'], P['bn1_m'], P['bn1_v'])
    bn2_s, bn2_o = bn_fold(P['bn2_g'], P['bn2_b'], P['bn2_m'], P['bn2_v'])
    bne_s, bne_o = bn_fold(P['bne_g'], P['bne_b'], P['bne_m'], P['bne_v'])

    aw1_i, aw1_e, aw1_j = P['aw1'][:D], P['aw1'][D:2 * D], P['aw1'][2 * D:]
    nw1_e, nw1_j = P['nw1'][:D], P['nw1'][D:]
    ew1_i, ew1_e, ew1_j = P['ew1'][:D], P['ew1'][D:2 * D], P['ew1'][2 * D:]

    def blockdiag(a, bm):
        top = jnp.concatenate([a, jnp.zeros_like(a)], axis=1)
        bot = jnp.concatenate([jnp.zeros_like(bm), bm], axis=1)
        return jnp.concatenate([top, bot], axis=0)

    wt = {
        'Wi': jnp.concatenate([aw1_i, jnp.zeros((D, D), f32)], axis=1),
        'We': jnp.concatenate([aw1_e, nw1_e], axis=1),
        'Wj': jnp.concatenate([aw1_j, nw1_j], axis=1),
        'W2': blockdiag(P['aw2'], P['nw2']),
        'W3': blockdiag(aw3f, P['nw3']),
        'to_w': P['to_w'], 'fw1': P['fw1'], 'fw2': P['fw2'],
        'ew1_i': ew1_i, 'ew1_e': ew1_e, 'ew1_j': ew1_j,
        'ew2': P['ew2'], 'ew3': P['ew3'],
        'gw1': P['gw1'], 'gw2': P['gw2'], 'gw3': P['gw3'],
    }
    wslab = jnp.zeros((W_ROWS, W_COLS), f32)
    for name, (r0, rr, cc) in _W_OFF.items():
        wslab = wslab.at[r0:r0 + rr, :cc].set(wt[name].astype(f32))

    bt = {
        'b1': jnp.concatenate([P['ab1'], P['nb1']], axis=1),
        'b2': jnp.concatenate([P['ab2'], P['nb2']], axis=1),
        'b3': jnp.concatenate([ab3f, P['nb3']], axis=1),
        'bn1_s': bn1_s, 'bn1_o': bn1_o,
        'fb1': P['fb1'], 'fb2': P['fb2'],
        'bn2_s': bn2_s, 'bn2_o': bn2_o,
        'eb1': P['eb1'], 'eb2': P['eb2'], 'eb3': P['eb3'],
        'bne_s': bne_s, 'bne_o': bne_o,
        'gb1': P['gb1'], 'gb2': P['gb2'], 'gb3': P['gb3'],
    }
    bslab = jnp.zeros((B_ROWS, B_COLS), f32)
    for name, (r0, cc) in _B_OFF.items():
        bslab = bslab.at[r0:r0 + 1, :cc].set(bt[name].astype(f32))

    return wslab, bslab


# ------------------------------- wrapper (glue) ------------------------------------

@jax.jit
def pignn_forward(packed, h, e, edge_idx, batch_idx):
    wslab, bslab = packed
    # Node-major assumption: edge_idx[0] == repeat(arange(N), K) (implied by the
    # module's '(i j)' Rearranges), so src gathers are realized as per-node broadcasts.
    dst = edge_idx[1].astype(jnp.int32).reshape(E, 1)
    mask = jax.nn.one_hot(batch_idx, B, dtype=jnp.float32)          # [N, B]
    counts = jnp.sum(mask, axis=0)                                  # [B]
    masktn = mask.T / counts[:, None]                               # [B, N] scatter_mean weights

    h_out, e_out = pl.pallas_call(
        _pignn_fused_kernel,
        out_shape=(jax.ShapeDtypeStruct((N, D), jnp.float32),
                   jax.ShapeDtypeStruct((E, D), jnp.float32)),
        in_specs=[_VMEM] * 7,
        out_specs=(_VMEM, _VMEM),
    )(dst, h, e, mask, masktn, wslab, bslab)
    return h_out, e_out


# ------------------------------ pure-JAX reference ---------------------------------

def _lin_ref(x, w, b=None):
    y = jnp.dot(x, w, preferred_element_type=jnp.float32)
    return y if b is None else y + b


def _bn_ref(x, g, bb, m, v):
    return (x - m) * jax.lax.rsqrt(v + BN_EPS) * g + bb


def reference_forward(P, h, e, edge_idx, batch_idx):
    hi, hj = h[edge_idx[0]], h[edge_idx[1]]
    x3 = jnp.concatenate([hi, e, hj], -1)
    x2 = jnp.concatenate([e, hj], -1)
    t = jax.nn.relu(_lin_ref(x3, P['aw1'], P['ab1']))
    t = jax.nn.relu(_lin_ref(t, P['aw2'], P['ab2']))
    w = (_lin_ref(t, P['aw3'], P['ab3']) / math.sqrt(DH)).reshape(N, K, H)
    att = jax.nn.softmax(w, axis=1)
    v = _gelu(_lin_ref(x2, P['nw1'], P['nb1']))
    v = _gelu(_lin_ref(v, P['nw2'], P['nb2']))
    v = _lin_ref(v, P['nw3'], P['nb3']).reshape(N, K, H, DH)
    _h = jnp.einsum('ijh,ijhd->ihd', att, v).reshape(N, D)
    _h = _h @ P['to_w']
    hh = _bn_ref(h + _h, P['bn1_g'], P['bn1_b'], P['bn1_m'], P['bn1_v'])
    y = jax.nn.relu(_lin_ref(hh, P['fw1'], P['fb1']))
    y = _lin_ref(y, P['fw2'], P['fb2'])
    hh = _bn_ref(hh + y, P['bn2_g'], P['bn2_b'], P['bn2_m'], P['bn2_v'])
    hi, hj = hh[edge_idx[0]], hh[edge_idx[1]]
    x3 = jnp.concatenate([hi, e, hj], -1)
    t = _gelu(_lin_ref(x3, P['ew1'], P['eb1']))
    t = _gelu(_lin_ref(t, P['ew2'], P['eb2']))
    t = _lin_ref(t, P['ew3'], P['eb3'])
    ee = _bn_ref(e + t, P['bne_g'], P['bne_b'], P['bne_m'], P['bne_v'])
    mask = jax.nn.one_hot(batch_idx, B, dtype=jnp.float32)
    c = (mask.T @ hh) / jnp.sum(mask, axis=0)[:, None]
    g = jax.nn.relu(_lin_ref(c, P['gw1'], P['gb1']))
    g = jax.nn.relu(_lin_ref(g, P['gw2'], P['gb2']))
    g = jax.nn.sigmoid(_lin_ref(g, P['gw3'], P['gb3']))
    return hh * g[batch_idx], ee


# --------------------------------- param init ---------------------------------------

def init_params(key):
    ks = iter(jax.random.split(key, 32))

    def lin(fi, fo, bias=True):
        kw, kb = jax.random.split(next(ks))
        bound = 1.0 / math.sqrt(fi)
        w = jax.random.uniform(kw, (fi, fo), jnp.float32, -bound, bound)
        b = jax.random.uniform(kb, (1, fo), jnp.float32, -bound, bound) if bias else None
        return w, b

    def bn():
        k1, k2, k3, k4 = jax.random.split(next(ks), 4)
        g = 1.0 + 0.1 * jax.random.normal(k1, (1, D), jnp.float32)
        b = 0.1 * jax.random.normal(k2, (1, D), jnp.float32)
        m = 0.1 * jax.random.normal(k3, (1, D), jnp.float32)
        v = 0.5 + jax.random.uniform(k4, (1, D), jnp.float32)
        return g, b, m, v

    P = {}
    P['aw1'], P['ab1'] = lin(3 * D, D)
    P['aw2'], P['ab2'] = lin(D, D)
    P['aw3'], P['ab3'] = lin(D, H)
    P['nw1'], P['nb1'] = lin(2 * D, D)
    P['nw2'], P['nb2'] = lin(D, D)
    P['nw3'], P['nb3'] = lin(D, D)
    P['to_w'], _ = lin(D, D, bias=False)
    P['bn1_g'], P['bn1_b'], P['bn1_m'], P['bn1_v'] = bn()
    P['fw1'], P['fb1'] = lin(D, 4 * D)
    P['fw2'], P['fb2'] = lin(4 * D, D)
    P['bn2_g'], P['bn2_b'], P['bn2_m'], P['bn2_v'] = bn()
    P['ew1'], P['eb1'] = lin(3 * D, D)
    P['ew2'], P['eb2'] = lin(D, D)
    P['ew3'], P['eb3'] = lin(D, D)
    P['bne_g'], P['bne_b'], P['bne_m'], P['bne_v'] = bn()
    P['gw1'], P['gb1'] = lin(D, D)
    P['gw2'], P['gb2'] = lin(D, D)
    P['gw3'], P['gb3'] = lin(D, D)
    return P


# ------------------------------------- main -----------------------------------------

if __name__ == "__main__":
    key = jax.random.PRNGKey(0)
    kp, kh, ke, kn = jax.random.split(key, 4)

    P = init_params(kp)

    h = jax.random.normal(kh, (N, D), jnp.float32)
    e = jax.random.normal(ke, (E, D), jnp.float32)
    src = jnp.repeat(jnp.arange(N, dtype=jnp.int32), K)            # node-major edge layout
    dst = jax.random.randint(kn, (E,), 0, N, dtype=jnp.int32)
    edge_idx = jnp.stack([src, dst])
    batch_idx = jnp.concatenate([jnp.zeros(N // 2, jnp.int32),
                                 jnp.ones(N - N // 2, jnp.int32)])

    packed = pack_params(P)              # one-time host-side prep (hoisted out of per-call path)
    out_h, out_e = pignn_forward(packed, h, e, edge_idx, batch_idx)
    jax.block_until_ready((out_h, out_e))

    ref_h, ref_e = reference_forward(P, h, e, edge_idx, batch_idx)
    np.testing.assert_allclose(np.asarray(out_h), np.asarray(ref_h), rtol=3e-4, atol=3e-4)
    np.testing.assert_allclose(np.asarray(out_e), np.asarray(ref_e), rtol=3e-4, atol=3e-4)

    print("KERNEL_OK")
</pallas_src>

<mosaic_0001>
module attributes {stable_mosaic.version = 11 : i64} {
  func.func @_pignn_fused_kernel(%arg0: memref<128x1xi32, #tpu.memory_space<vmem>>, %arg1: memref<16x32xf32, #tpu.memory_space<vmem>>, %arg2: memref<128x32xf32, #tpu.memory_space<vmem>>, %arg3: memref<16x2xf32, #tpu.memory_space<vmem>>, %arg4: memref<2x16xf32, #tpu.memory_space<vmem>>, %arg5: memref<672x128xf32, #tpu.memory_space<vmem>>, %arg6: memref<24x128xf32, #tpu.memory_space<vmem>>, %arg7: memref<16x32xf32, #tpu.memory_space<vmem>>, %arg8: memref<128x32xf32, #tpu.memory_space<vmem>>) attributes {dimension_semantics = [], scalar_prefetch = 0 : i64, scratch_operands = 0 : i64, tpu.core_type = #tpu.core_type<tc>} {
    %c0 = arith.constant 0 : index
    %c0_0 = arith.constant 0 : index
    %0 = vector.load %arg1[%c0, %c0_0] : memref<16x32xf32, #tpu.memory_space<vmem>>, vector<16x32xf32>
    %c0_1 = arith.constant 0 : index
    %c0_2 = arith.constant 0 : index
    %1 = vector.load %arg2[%c0_1, %c0_2] : memref<128x32xf32, #tpu.memory_space<vmem>>, vector<128x32xf32>
    %2 = tpu.iota {dimensions = array<i32: 1>} : vector<128x16xi32>
    %c0_3 = arith.constant 0 : index
    %c0_4 = arith.constant 0 : index
    %3 = vector.load %arg0[%c0_3, %c0_4] : memref<128x1xi32, #tpu.memory_space<vmem>>, vector<128x1xi32>
    %4 = vector.broadcast %3 : vector<128x1xi32> to vector<128x16xi32>
    %5 = arith.cmpi eq, %2, %4 : vector<128x16xi32>
    %6 = arith.extui %5 : vector<128x16xi1> to vector<128x16xi32>
    %7 = arith.sitofp %6 : vector<128x16xi32> to vector<128x16xf32>
    %c0_5 = arith.constant 0 : index
    %c0_6 = arith.constant 0 : index
    %8 = vector.load %arg5[%c0_5, %c0_6] : memref<672x128xf32, #tpu.memory_space<vmem>>, vector<32x64xf32>
    %cst = arith.constant dense<0.000000e+00> : vector<16x64xf32>
    %9 = tpu.matmul %0, %8, %cst {dimension_numbers = #tpu.dot_dimension_numbers<[1], [0], [0], [1], [0, 0, 1, 1], [], []>} : vector<16x32xf32>, vector<32x64xf32>, vector<16x64xf32> -> vector<16x64xf32>
    %c0_7 = arith.constant 0 : index
    %c0_8 = arith.constant 0 : index
    %10 = vector.load %arg6[%c0_7, %c0_8] : memref<24x128xf32, #tpu.memory_space<vmem>>, vector<1x64xf32>
    %11 = vector.broadcast %10 : vector<1x64xf32> to vector<16x64xf32>
    %12 = arith.addf %9, %11 : vector<16x64xf32>
    %13 = vector.shape_cast %12 : vector<16x64xf32> to vector<16x1x64xf32>
    %14 = vector.shape_cast %13 : vector<16x1x64xf32> to vector<16x1x64xf32>
    %15 = vector.broadcast %14 : vector<16x1x64xf32> to vector<16x8x64xf32>
    %16 = vector.shape_cast %15 : vector<16x8x64xf32> to vector<128x64xf32>
    %c32 = arith.constant 32 : index
    %c0_9 = arith.constant 0 : index
    %17 = vector.load %arg5[%c32, %c0_9] : memref<672x128xf32, #tpu.memory_space<vmem>>, vector<32x64xf32>
    %cst_10 = arith.constant dense<0.000000e+00> : vector<128x64xf32>
    %18 = tpu.matmul %1, %17, %cst_10 {dimension_numbers = #tpu.dot_dimension_numbers<[1], [0], [0], [1], [0, 0, 1, 1], [], []>} : vector<128x32xf32>, vector<32x64xf32>, vector<128x64xf32> -> vector<128x64xf32>
    %c64 = arith.constant 64 : index
    %c0_11 = arith.constant 0 : index
    %19 = vector.load %arg5[%c64, %c0_11] : memref<672x128xf32, #tpu.memory_space<vmem>>, vector<32x64xf32>
    %cst_12 = arith.constant dense<0.000000e+00> : vector<16x64xf32>
    %20 = tpu.matmul %0, %19, %cst_12 {dimension_numbers = #tpu.dot_dimension_numbers<[1], [0], [0], [1], [0, 0, 1, 1], [], []>} : vector<16x32xf32>, vector<32x64xf32>, vector<16x64xf32> -> vector<16x64xf32>
    %cst_13 = arith.constant dense<0.000000e+00> : vector<128x64xf32>
    %21 = tpu.matmul %7, %20, %cst_13 {dimension_numbers = #tpu.dot_dimension_numbers<[1], [0], [0], [1], [0, 0, 1, 1], [], []>} : vector<128x16xf32>, vector<16x64xf32>, vector<128x64xf32> -> vector<128x64xf32>
    %22 = arith.addf %18, %21 : vector<128x64xf32>
    %23 = arith.addf %22, %16 : vector<128x64xf32>
    %24 = tpu.iota {dimensions = array<i32: 1>} : vector<128x64xi32>
    %c32_i32 = arith.constant 32 : i32
    %25 = vector.broadcast %c32_i32 : i32 to vector<128x64xi32>
    %26 = arith.cmpi slt, %24, %25 : vector<128x64xi32>
    %cst_14 = arith.constant 0.000000e+00 : f32
    %27 = vector.broadcast %cst_14 : f32 to vector<128x64xf32>
    %28 = arith.maximumf %23, %27 : vector<128x64xf32>
    %cst_15 = arith.constant 5.000000e-01 : f32
    %29 = vector.broadcast %cst_15 : f32 to vector<128x64xf32>
    %30 = arith.mulf %29, %23 : vector<128x64xf32>
    %cst_16 = arith.constant 0.707106769 : f32
    %31 = vector.broadcast %cst_16 : f32 to vector<128x64xf32>
    %32 = arith.mulf %23, %31 : vector<128x64xf32>
    %33 = math.erf %32 : vector<128x64xf32>
    %cst_17 = arith.constant 1.000000e+00 : f32
    %34 = vector.broadcast %cst_17 : f32 to vector<128x64xf32>
    %35 = arith.addf %34, %33 : vector<128x64xf32>
    %36 = arith.mulf %30, %35 : vector<128x64xf32>
    %37 = arith.select %26, %28, %36 : vector<128x64xi1>, vector<128x64xf32>
    %c96 = arith.constant 96 : index
    %c0_18 = arith.constant 0 : index
    %38 = vector.load %arg5[%c96, %c0_18] : memref<672x128xf32, #tpu.memory_space<vmem>>, vector<64x64xf32>
    %cst_19 = arith.constant dense<0.000000e+00> : vector<128x64xf32>
    %39 = tpu.matmul %37, %38, %cst_19 {dimension_numbers = #tpu.dot_dimension_numbers<[1], [0], [0], [1], [0, 0, 1, 1], [], []>} : vector<128x64xf32>, vector<64x64xf32>, vector<128x64xf32> -> vector<128x64xf32>
    %c1 = arith.constant 1 : index
    %c0_20 = arith.constant 0 : index
    %40 = vector.load %arg6[%c1, %c0_20] : memref<24x128xf32, #tpu.memory_space<vmem>>, vector<1x64xf32>
    %41 = vector.broadcast %40 : vector<1x64xf32> to vector<128x64xf32>
    %42 = arith.addf %39, %41 : vector<128x64xf32>
    %cst_21 = arith.constant 0.000000e+00 : f32
    %43 = vector.broadcast %cst_21 : f32 to vector<128x64xf32>
    %44 = arith.maximumf %42, %43 : vector<128x64xf32>
    %cst_22 = arith.constant 5.000000e-01 : f32
    %45 = vector.broadcast %cst_22 : f32 to vector<128x64xf32>
    %46 = arith.mulf %45, %42 : vector<128x64xf32>
    %cst_23 = arith.constant 0.707106769 : f32
    %47 = vector.broadcast %cst_23 : f32 to vector<128x64xf32>
    %48 = arith.mulf %42, %47 : vector<128x64xf32>
    %49 = math.erf %48 : vector<128x64xf32>
    %cst_24 = arith.constant 1.000000e+00 : f32
    %50 = vector.broadcast %cst_24 : f32 to vector<128x64xf32>
    %51 = arith.addf %50, %49 : vector<128x64xf32>
    %52 = arith.mulf %46, %51 : vector<128x64xf32>
    %53 = arith.select %26, %44, %52 : vector<128x64xi1>, vector<128x64xf32>
    %c160 = arith.constant 160 : index
    %c0_25 = arith.constant 0 : index
    %54 = vector.load %arg5[%c160, %c0_25] : memref<672x128xf32, #tpu.memory_space<vmem>>, vector<64x64xf32>
    %cst_26 = arith.constant dense<0.000000e+00> : vector<128x64xf32>
    %55 = tpu.matmul %53, %54, %cst_26 {dimension_numbers = #tpu.dot_dimension_numbers<[1], [0], [0], [1], [0, 0, 1, 1], [], []>} : vector<128x64xf32>, vector<64x64xf32>, vector<128x64xf32> -> vector<128x64xf32>
    %c2 = arith.constant 2 : index
    %c0_27 = arith.constant 0 : index
    %56 = vector.load %arg6[%c2, %c0_27] : memref<24x128xf32, #tpu.memory_space<vmem>>, vector<1x64xf32>
    %57 = vector.broadcast %56 : vector<1x64xf32> to vector<128x64xf32>
    %58 = arith.addf %55, %57 : vector<128x64xf32>
    %59 = vector.extract_strided_slice %58 {offsets = [0, 0], sizes = [128, 32], strides = [1, 1]} : vector<128x64xf32> to vector<128x32xf32>
    %60 = vector.shape_cast %59 : vector<128x32xf32> to vector<16x8x32xf32>
    %61 = vector.extract_strided_slice %58 {offsets = [0, 32], sizes = [128, 32], strides = [1, 1]} : vector<128x64xf32> to vector<128x32xf32>
    %62 = vector.shape_cast %61 : vector<128x32xf32> to vector<16x8x32xf32>
    %cst_28 = arith.constant dense<0xFF800000> : vector<16x32xf32>
    %63 = vector.multi_reduction <maximumf>, %60, %cst_28 [1] : vector<16x8x32xf32> to vector<16x32xf32>
    %64 = vector.shape_cast %63 : vector<16x32xf32> to vector<16x1x32xf32>
    %65 = vector.broadcast %64 : vector<16x1x32xf32> to vector<16x8x32xf32>
    %66 = arith.subf %60, %65 : vector<16x8x32xf32>
    %67 = math.exp %66 : vector<16x8x32xf32>
    %cst_29 = arith.constant dense<0.000000e+00> : vector<16x32xf32>
    %68 = vector.multi_reduction <add>, %67, %cst_29 [1] : vector<16x8x32xf32> to vector<16x32xf32>
    %69 = vector.shape_cast %68 : vector<16x32xf32> to vector<16x1x32xf32>
    %70 = tpu.reciprocal %69 : vector<16x1x32xf32> -> vector<16x1x32xf32>
    %71 = vector.broadcast %70 : vector<16x1x32xf32> to vector<16x8x32xf32>
    %72 = arith.mulf %67, %71 : vector<16x8x32xf32>
    %73 = arith.mulf %72, %62 : vector<16x8x32xf32>
    %cst_30 = arith.constant dense<0.000000e+00> : vector<16x32xf32>
    %74 = vector.multi_reduction <add>, %73, %cst_30 [1] : vector<16x8x32xf32> to vector<16x32xf32>
    %c224 = arith.constant 224 : index
    %c0_31 = arith.constant 0 : index
    %75 = vector.load %arg5[%c224, %c0_31] : memref<672x128xf32, #tpu.memory_space<vmem>>, vector<32x32xf32>
    %cst_32 = arith.constant dense<0.000000e+00> : vector<16x32xf32>
    %76 = tpu.matmul %74, %75, %cst_32 {dimension_numbers = #tpu.dot_dimension_numbers<[1], [0], [0], [1], [0, 0, 1, 1], [], []>} : vector<16x32xf32>, vector<32x32xf32>, vector<16x32xf32> -> vector<16x32xf32>
    %77 = arith.addf %0, %76 : vector<16x32xf32>
    %c3 = arith.constant 3 : index
    %c0_33 = arith.constant 0 : index
    %78 = vector.load %arg6[%c3, %c0_33] : memref<24x128xf32, #tpu.memory_space<vmem>>, vector<1x32xf32>
    %79 = vector.broadcast %78 : vector<1x32xf32> to vector<16x32xf32>
    %80 = arith.mulf %77, %79 : vector<16x32xf32>
    %c4 = arith.constant 4 : index
    %c0_34 = arith.constant 0 : index
    %81 = vector.load %arg6[%c4, %c0_34] : memref<24x128xf32, #tpu.memory_space<vmem>>, vector<1x32xf32>
    %82 = vector.broadcast %81 : vector<1x32xf32> to vector<16x32xf32>
    %83 = arith.addf %80, %82 : vector<16x32xf32>
    %c256 = arith.constant 256 : index
    %c0_35 = arith.constant 0 : index
    %84 = vector.load %arg5[%c256, %c0_35] : memref<672x128xf32, #tpu.memory_space<vmem>>, vector<32x128xf32>
    %cst_36 = arith.constant dense<0.000000e+00> : vector<16x128xf32>
    %85 = tpu.matmul %83, %84, %cst_36 {dimension_numbers = #tpu.dot_dimension_numbers<[1], [0], [0], [1], [0, 0, 1, 1], [], []>} : vector<16x32xf32>, vector<32x128xf32>, vector<16x128xf32> -> vector<16x128xf32>
    %c5 = arith.constant 5 : index
    %c0_37 = arith.constant 0 : index
    %86 = vector.load %arg6[%c5, %c0_37] : memref<24x128xf32, #tpu.memory_space<vmem>>, vector<1x128xf32>
    %87 = vector.broadcast %86 : vector<1x128xf32> to vector<16x128xf32>
    %88 = arith.addf %85, %87 : vector<16x128xf32>
    %cst_38 = arith.constant 0.000000e+00 : f32
    %89 = vector.broadcast %cst_38 : f32 to vector<16x128xf32>
    %90 = arith.maximumf %88, %89 : vector<16x128xf32>
    %c288 = arith.constant 288 : index
    %c0_39 = arith.constant 0 : index
    %91 = vector.load %arg5[%c288, %c0_39] : memref<672x128xf32, #tpu.memory_space<vmem>>, vector<128x32xf32>
    %cst_40 = arith.constant dense<0.000000e+00> : vector<16x32xf32>
    %92 = tpu.matmul %90, %91, %cst_40 {dimension_numbers = #tpu.dot_dimension_numbers<[1], [0], [0], [1], [0, 0, 1, 1], [], []>} : vector<16x128xf32>, vector<128x32xf32>, vector<16x32xf32> -> vector<16x32xf32>
    %c6 = arith.constant 6 : index
    %c0_41 = arith.constant 0 : index
    %93 = vector.load %arg6[%c6, %c0_41] : memref<24x128xf32, #tpu.memory_space<vmem>>, vector<1x32xf32>
    %94 = vector.broadcast %93 : vector<1x32xf32> to vector<16x32xf32>
    %95 = arith.addf %92, %94 : vector<16x32xf32>
    %96 = arith.addf %83, %95 : vector<16x32xf32>
    %c7 = arith.constant 7 : index
    %c0_42 = arith.constant 0 : index
    %97 = vector.load %arg6[%c7, %c0_42] : memref<24x128xf32, #tpu.memory_space<vmem>>, vector<1x32xf32>
    %98 = vector.broadcast %97 : vector<1x32xf32> to vector<16x32xf32>
    %99 = arith.mulf %96, %98 : vector<16x32xf32>
    %c8 = arith.constant 8 : index
    %c0_43 = arith.constant 0 : index
    %100 = vector.load %arg6[%c8, %c0_43] : memref<24x128xf32, #tpu.memory_space<vmem>>, vector<1x32xf32>
    %101 = vector.broadcast %100 : vector<1x32xf32> to vector<16x32xf32>
    %102 = arith.addf %99, %101 : vector<16x32xf32>
    %c416 = arith.constant 416 : index
    %c0_44 = arith.constant 0 : index
    %103 = vector.load %arg5[%c416, %c0_44] : memref<672x128xf32, #tpu.memory_space<vmem>>, vector<32x32xf32>
    %cst_45 = arith.constant dense<0.000000e+00> : vector<16x32xf32>
    %104 = tpu.matmul %102, %103, %cst_45 {dimension_numbers = #tpu.dot_dimension_numbers<[1], [0], [0], [1], [0, 0, 1, 1], [], []>} : vector<16x32xf32>, vector<32x32xf32>, vector<16x32xf32> -> vector<16x32xf32>
    %c9 = arith.constant 9 : index
    %c0_46 = arith.constant 0 : index
    %105 = vector.load %arg6[%c9, %c0_46] : memref<24x128xf32, #tpu.memory_space<vmem>>, vector<1x32xf32>
    %106 = vector.broadcast %105 : vector<1x32xf32> to vector<16x32xf32>
    %107 = arith.addf %104, %106 : vector<16x32xf32>
    %108 = vector.shape_cast %107 : vector<16x32xf32> to vector<16x1x32xf32>
    %109 = vector.shape_cast %108 : vector<16x1x32xf32> to vector<16x1x32xf32>
    %110 = vector.broadcast %109 : vector<16x1x32xf32> to vector<16x8x32xf32>
    %111 = vector.shape_cast %110 : vector<16x8x32xf32> to vector<128x32xf32>
    %c448 = arith.constant 448 : index
    %c0_47 = arith.constant 0 : index
    %112 = vector.load %arg5[%c448, %c0_47] : memref<672x128xf32, #tpu.memory_space<vmem>>, vector<32x32xf32>
    %cst_48 = arith.constant dense<0.000000e+00> : vector<128x32xf32>
    %113 = tpu.matmul %1, %112, %cst_48 {dimension_numbers = #tpu.dot_dimension_numbers<[1], [0], [0], [1], [0, 0, 1, 1], [], []>} : vector<128x32xf32>, vector<32x32xf32>, vector<128x32xf32> -> vector<128x32xf32>
    %c480 = arith.constant 480 : index
    %c0_49 = arith.constant 0 : index
    %114 = vector.load %arg5[%c480, %c0_49] : memref<672x128xf32, #tpu.memory_space<vmem>>, vector<32x32xf32>
    %cst_50 = arith.constant dense<0.000000e+00> : vector<16x32xf32>
    %115 = tpu.matmul %102, %114, %cst_50 {dimension_numbers = #tpu.dot_dimension_numbers<[1], [0], [0], [1], [0, 0, 1, 1], [], []>} : vector<16x32xf32>, vector<32x32xf32>, vector<16x32xf32> -> vector<16x32xf32>
    %cst_51 = arith.constant dense<0.000000e+00> : vector<128x32xf32>
    %116 = tpu.matmul %7, %115, %cst_51 {dimension_numbers = #tpu.dot_dimension_numbers<[1], [0], [0], [1], [0, 0, 1, 1], [], []>} : vector<128x16xf32>, vector<16x32xf32>, vector<128x32xf32> -> vector<128x32xf32>
    %117 = arith.addf %113, %116 : vector<128x32xf32>
    %118 = arith.addf %117, %111 : vector<128x32xf32>
    %cst_52 = arith.constant 5.000000e-01 : f32
    %119 = vector.broadcast %cst_52 : f32 to vector<128x32xf32>
    %120 = arith.mulf %119, %118 : vector<128x32xf32>
    %cst_53 = arith.constant 0.707106769 : f32
    %121 = vector.broadcast %cst_53 : f32 to vector<128x32xf32>
    %122 = arith.mulf %118, %121 : vector<128x32xf32>
    %123 = math.erf %122 : vector<128x32xf32>
    %cst_54 = arith.constant 1.000000e+00 : f32
    %124 = vector.broadcast %cst_54 : f32 to vector<128x32xf32>
    %125 = arith.addf %124, %123 : vector<128x32xf32>
    %126 = arith.mulf %120, %125 : vector<128x32xf32>
    %c512 = arith.constant 512 : index
    %c0_55 = arith.constant 0 : index
    %127 = vector.load %arg5[%c512, %c0_55] : memref<672x128xf32, #tpu.memory_space<vmem>>, vector<32x32xf32>
    %cst_56 = arith.constant dense<0.000000e+00> : vector<128x32xf32>
    %128 = tpu.matmul %126, %127, %cst_56 {dimension_numbers = #tpu.dot_dimension_numbers<[1], [0], [0], [1], [0, 0, 1, 1], [], []>} : vector<128x32xf32>, vector<32x32xf32>, vector<128x32xf32> -> vector<128x32xf32>
    %c10 = arith.constant 10 : index
    %c0_57 = arith.constant 0 : index
    %129 = vector.load %arg6[%c10, %c0_57] : memref<24x128xf32, #tpu.memory_space<vmem>>, vector<1x32xf32>
    %130 = vector.broadcast %129 : vector<1x32xf32> to vector<128x32xf32>
    %131 = arith.addf %128, %130 : vector<128x32xf32>
    %cst_58 = arith.constant 5.000000e-01 : f32
    %132 = vector.broadcast %cst_58 : f32 to vector<128x32xf32>
    %133 = arith.mulf %132, %131 : vector<128x32xf32>
    %cst_59 = arith.constant 0.707106769 : f32
    %134 = vector.broadcast %cst_59 : f32 to vector<128x32xf32>
    %135 = arith.mulf %131, %134 : vector<128x32xf32>
    %136 = math.erf %135 : vector<128x32xf32>
    %cst_60 = arith.constant 1.000000e+00 : f32
    %137 = vector.broadcast %cst_60 : f32 to vector<128x32xf32>
    %138 = arith.addf %137, %136 : vector<128x32xf32>
    %139 = arith.mulf %133, %138 : vector<128x32xf32>
    %c544 = arith.constant 544 : index
    %c0_61 = arith.constant 0 : index
    %140 = vector.load %arg5[%c544, %c0_61] : memref<672x128xf32, #tpu.memory_space<vmem>>, vector<32x32xf32>
    %cst_62 = arith.constant dense<0.000000e+00> : vector<128x32xf32>
    %141 = tpu.matmul %139, %140, %cst_62 {dimension_numbers = #tpu.dot_dimension_numbers<[1], [0], [0], [1], [0, 0, 1, 1], [], []>} : vector<128x32xf32>, vector<32x32xf32>, vector<128x32xf32> -> vector<128x32xf32>
    %c11 = arith.constant 11 : index
    %c0_63 = arith.constant 0 : index
    %142 = vector.load %arg6[%c11, %c0_63] : memref<24x128xf32, #tpu.memory_space<vmem>>, vector<1x32xf32>
    %143 = vector.broadcast %142 : vector<1x32xf32> to vector<128x32xf32>
    %144 = arith.addf %141, %143 : vector<128x32xf32>
    %145 = arith.addf %1, %144 : vector<128x32xf32>
    %c12 = arith.constant 12 : index
    %c0_64 = arith.constant 0 : index
    %146 = vector.load %arg6[%c12, %c0_64] : memref<24x128xf32, #tpu.memory_space<vmem>>, vector<1x32xf32>
    %147 = vector.broadcast %146 : vector<1x32xf32> to vector<128x32xf32>
    %148 = arith.mulf %145, %147 : vector<128x32xf32>
    %c13 = arith.constant 13 : index
    %c0_65 = arith.constant 0 : index
    %149 = vector.load %arg6[%c13, %c0_65] : memref<24x128xf32, #tpu.memory_space<vmem>>, vector<1x32xf32>
    %150 = vector.broadcast %149 : vector<1x32xf32> to vector<128x32xf32>
    %151 = arith.addf %148, %150 : vector<128x32xf32>
    %c0_66 = arith.constant 0 : index
    %c0_67 = arith.constant 0 : index
    %152 = vector.load %arg8[%c0_66, %c0_67] : memref<128x32xf32, #tpu.memory_space<vmem>>, vector<128x32xf32>
    tpu.vector_store %arg8[%c0_66, %c0_67], %151 {strides = array<i32>} : memref<128x32xf32, #tpu.memory_space<vmem>>, vector<128x32xf32>,
    %c0_68 = arith.constant 0 : index
    %c0_69 = arith.constant 0 : index
    %153 = vector.load %arg4[%c0_68, %c0_69] : memref<2x16xf32, #tpu.memory_space<vmem>>, vector<2x16xf32>
    %cst_70 = arith.constant dense<0.000000e+00> : vector<2x32xf32>
    %154 = tpu.matmul %153, %102, %cst_70 {dimension_numbers = #tpu.dot_dimension_numbers<[1], [0], [0], [1], [0, 0, 1, 1], [], []>} : vector<2x16xf32>, vector<16x32xf32>, vector<2x32xf32> -> vector<2x32xf32>
    %c576 = arith.constant 576 : index
    %c0_71 = arith.constant 0 : index
    %155 = vector.load %arg5[%c576, %c0_71] : memref<672x128xf32, #tpu.memory_space<vmem>>, vector<32x32xf32>
    %cst_72 = arith.constant dense<0.000000e+00> : vector<2x32xf32>
    %156 = tpu.matmul %154, %155, %cst_72 {dimension_numbers = #tpu.dot_dimension_numbers<[1], [0], [0], [1], [0, 0, 1, 1], [], []>} : vector<2x32xf32>, vector<32x32xf32>, vector<2x32xf32> -> vector<2x32xf32>
    %c14 = arith.constant 14 : index
    %c0_73 = arith.constant 0 : index
    %157 = vector.load %arg6[%c14, %c0_73] : memref<24x128xf32, #tpu.memory_space<vmem>>, vector<1x32xf32>
    %158 = vector.broadcast %157 : vector<1x32xf32> to vector<2x32xf32>
    %159 = arith.addf %156, %158 : vector<2x32xf32>
    %cst_74 = arith.constant 0.000000e+00 : f32
    %160 = vector.broadcast %cst_74 : f32 to vector<2x32xf32>
    %161 = arith.maximumf %159, %160 : vector<2x32xf32>
    %c608 = arith.constant 608 : index
    %c0_75 = arith.constant 0 : index
    %162 = vector.load %arg5[%c608, %c0_75] : memref<672x128xf32, #tpu.memory_space<vmem>>, vector<32x32xf32>
    %cst_76 = arith.constant dense<0.000000e+00> : vector<2x32xf32>
    %163 = tpu.matmul %161, %162, %cst_76 {dimension_numbers = #tpu.dot_dimension_numbers<[1], [0], [0], [1], [0, 0, 1, 1], [], []>} : vector<2x32xf32>, vector<32x32xf32>, vector<2x32xf32> -> vector<2x32xf32>
    %c15 = arith.constant 15 : index
    %c0_77 = arith.constant 0 : index
    %164 = vector.load %arg6[%c15, %c0_77] : memref<24x128xf32, #tpu.memory_space<vmem>>, vector<1x32xf32>
    %165 = vector.broadcast %164 : vector<1x32xf32> to vector<2x32xf32>
    %166 = arith.addf %163, %165 : vector<2x32xf32>
    %cst_78 = arith.constant 0.000000e+00 : f32
    %167 = vector.broadcast %cst_78 : f32 to vector<2x32xf32>
    %168 = arith.maximumf %166, %167 : vector<2x32xf32>
    %c640 = arith.constant 640 : index
    %c0_79 = arith.constant 0 : index
    %169 = vector.load %arg5[%c640, %c0_79] : memref<672x128xf32, #tpu.memory_space<vmem>>, vector<32x32xf32>
    %cst_80 = arith.constant dense<0.000000e+00> : vector<2x32xf32>
    %170 = tpu.matmul %168, %169, %cst_80 {dimension_numbers = #tpu.dot_dimension_numbers<[1], [0], [0], [1], [0, 0, 1, 1], [], []>} : vector<2x32xf32>, vector<32x32xf32>, vector<2x32xf32> -> vector<2x32xf32>
    %c16 = arith.constant 16 : index
    %c0_81 = arith.constant 0 : index
    %171 = vector.load %arg6[%c16, %c0_81] : memref<24x128xf32, #tpu.memory_space<vmem>>, vector<1x32xf32>
    %172 = vector.broadcast %171 : vector<1x32xf32> to vector<2x32xf32>
    %173 = arith.addf %170, %172 : vector<2x32xf32>
    %174 = arith.negf %173 : vector<2x32xf32>
    %175 = math.exp %174 : vector<2x32xf32>
    %cst_82 = arith.constant 1.000000e+00 : f32
    %176 = vector.broadcast %cst_82 : f32 to vector<2x32xf32>
    %177 = arith.addf %176, %175 : vector<2x32xf32>
    %178 = arith.divf %176, %177 : vector<2x32xf32>
    %c0_83 = arith.constant 0 : index
    %c0_84 = arith.constant 0 : index
    %179 = vector.load %arg3[%c0_83, %c0_84] : memref<16x2xf32, #tpu.memory_space<vmem>>, vector<16x2xf32>
    %cst_85 = arith.constant dense<0.000000e+00> : vector<16x32xf32>
    %180 = tpu.matmul %179, %178, %cst_85 {dimension_numbers = #tpu.dot_dimension_numbers<[1], [0], [0], [1], [0, 0, 1, 1], [], []>} : vector<16x2xf32>, vector<2x32xf32>, vector<16x32xf32> -> vector<16x32xf32>
    %181 = arith.mulf %102, %180 : vector<16x32xf32>
    %c0_86 = arith.constant 0 : index
    %c0_87 = arith.constant 0 : index
    %182 = vector.load %arg7[%c0_86, %c0_87] : memref<16x32xf32, #tpu.memory_space<vmem>>, vector<16x32xf32>
    tpu.vector_store %arg7[%c0_86, %c0_87], %181 {strides = array<i32>} : memref<16x32xf32, #tpu.memory_space<vmem>>, vector<16x32xf32>,
    return
  }
}

</mosaic_0001>

<llo_original>
// kernel: pignn_forward.1
$region0: #{pignn_forward.1}
  #allocation0 [shape = 'u32[]', space=smem, size = 0x4, offset = 0x4, fixed_abs, tag = 'smem constant byte address 0x4 - core index']
  #allocation1 [shape = 'u32[144,128]{1,0:T(1,128)}', space=vmem, size = 0x12000, scoped, tag = 'internal scratch']
  %s0 = inlined_call_operand.vmem [shape: s32[128,1], index: 0, kind: input, shape index: {}]
  %s1 = inlined_call_operand.vmem [shape: f32[16,32], index: 1, kind: input, shape index: {}]
  %s2 = inlined_call_operand.vmem [shape: f32[128,32], index: 2, kind: input, shape index: {}]
  %s3 = inlined_call_operand.vmem [shape: f32[16,2], index: 3, kind: input, shape index: {}]
  %s4 = inlined_call_operand.vmem [shape: f32[2,16], index: 4, kind: input, shape index: {}]
  %s5 = inlined_call_operand.hbm [shape: f32[672,128], index: 5, kind: input, shape index: {}]
  %s6 = inlined_call_operand.vmem [shape: f32[24,128], index: 6, kind: input, shape index: {}]
  %s7 = inlined_call_operand.hbm [shape: f32[16,32], index: 7, kind: output, shape index: {0}]
  %s8 = inlined_call_operand.vmem [shape: f32[128,32], index: 8, kind: output, shape index: {1}]
  %9 = xla_tuple %s7, %s8
  %s10 = sld [smem:[#allocation0]]
  $region50: #{pignn_forward.1} parent=0
    _
  %s12 = ssub.s32 1, %s10
  %s13 = scalar_select 0, %s12, %s10
  $region1: #{pignn_forward.1} parent=0
    #allocation2 [shape = 'u8[344064]{0}', space=vmem, size = 0x54000, scoped, tag = 'input window, operand 5, single buffered']
    #allocation3 [shape = 's32[1]{0}', space=sflag, size = 0x4, scoped, tag = 'scoped memory for pignn_forward.1']
    #allocation4 [shape = 's32[1]{0}', space=sflag, size = 0x4, scoped, tag = 'scoped memory for pignn_forward.1']
    #allocation5 [shape = 'u8[8192]{0}', space=vmem, size = 0x2000, scoped, tag = 'output window, operand 0, single buffered']
    %14 = vsyncpa [#allocation3], 0
    %15 = vsyncpa [#allocation4], 0
    // Predicated region
    $region2: #{pignn_forward.1} parent=1 // pred_check
      _
    $region3: #{pignn_forward.1} parent=1 // pred_check_branch
      %17 = sbr.rel (0) target = $region5
    $region4: #{pignn_forward.1} parent=1 // pred_region
      _
    $region5: #{pignn_forward.1} parent=1 // pred_fallthru
      _
    // Predicated region
    $region6: #{pignn_forward.1} parent=1 // pred_check
      _
    $region7: #{pignn_forward.1} parent=1 // pred_check_branch
      %19 = sbr.rel (0) target = $region9
    $region8: #{pignn_forward.1} parent=1 // pred_region
      _
    $region9: #{pignn_forward.1} parent=1 // pred_fallthru
      _
    // Predicated region
    $region10: #{pignn_forward.1} parent=1 // pred_check
      _
    $region11: #{pignn_forward.1} parent=1 // pred_check_branch
      %21 = sbr.rel (0) target = $region13
    $region12: #{pignn_forward.1} parent=1 // pred_region
      _
    $region13: #{pignn_forward.1} parent=1 // pred_fallthru
      _
    // Predicated region
    $region14: #{pignn_forward.1} parent=1 // pred_check
      _
    $region15: #{pignn_forward.1} parent=1 // pred_check_branch
      %23 = sbr.rel (0) target = $region17
    $region16: #{pignn_forward.1} parent=1 // pred_region
      _
    $region17: #{pignn_forward.1} parent=1 // pred_fallthru
      _
    // Predicated region
    $region18: #{pignn_forward.1} parent=1 // pred_check
      _
    $region19: #{pignn_forward.1} parent=1 // pred_check_branch
      %25 = sbr.rel (0) target = $region21
    $region20: #{pignn_forward.1} parent=1 // pred_region
      _
    $region21: #{pignn_forward.1} parent=1 // pred_fallthru
      _
    // Predicated region
    $region22: #{pignn_forward.1} parent=1 // pred_check
      _
    $region23: #{pignn_forward.1} parent=1 // pred_check_branch
      %27 = sbr.rel (0) target = $region25
    $region24: #{pignn_forward.1} parent=1 // pred_region
      %s29 = ssub.s32 10752, 10752
      %30 = vsyncadd [#allocation3], %s29
      %s31 = sshll.u32 [#allocation2], 4
      %s32 = int_to_ptr.vmem [resolvable:$true] %s31
      %37 = dma.hbm_to_vmem [thread:$0]  %s5, 10752, %s32, [#allocation3], 128, 128, 8
    $region25: #{pignn_forward.1} parent=1 // pred_fallthru
      _
    // Predicated region
    $region26: #{pignn_forward.1} parent=1 // pred_check
      _
    $region27: #{pignn_forward.1} parent=1 // pred_check_branch
      %39 = sbr.rel (0) target = $region29
    $region28: #{pignn_forward.1} parent=1 // pred_region
      _
    $region29: #{pignn_forward.1} parent=1 // pred_fallthru
      _
    // Predicated region
    $region30: #{pignn_forward.1} parent=1 // pred_check
      _
    $region31: #{pignn_forward.1} parent=1 // pred_check_branch
      %41 = sbr.rel (0) target = $region33
    $region32: #{pignn_forward.1} parent=1 // pred_region
      %42 = dma.done [#allocation3], 10752
    $region33: #{pignn_forward.1} parent=1 // pred_fallthru
      _
    %v43 = vld [vmem:[%s1] sm:$0xff]
    %v44 = vld [vmem:[%s1 + $0x8] sm:$0xff]
    %v45 = vld [vmem:[%s2] sm:$0xff]
    %v46 = vld [vmem:[%s2 + $0x8] sm:$0xff]
    %v47 = vld [vmem:[%s2 + $0x10] sm:$0xff]
    %v48 = vld [vmem:[%s2 + $0x18] sm:$0xff]
    %v49 = vld [vmem:[%s2 + $0x20] sm:$0xff]
    %v50 = vld [vmem:[%s2 + $0x28] sm:$0xff]
    %v51 = vld [vmem:[%s2 + $0x30] sm:$0xff]
    %v52 = vld [vmem:[%s2 + $0x38] sm:$0xff]
    %v53 = vld [vmem:[%s2 + $0x40] sm:$0xff]
    %v54 = vld [vmem:[%s2 + $0x48] sm:$0xff]
    %v55 = vld [vmem:[%s2 + $0x50] sm:$0xff]
    %v56 = vld [vmem:[%s2 + $0x58] sm:$0xff]
    %v57 = vld [vmem:[%s2 + $0x60] sm:$0xff]
    %v58 = vld [vmem:[%s2 + $0x68] sm:$0xff]
    %v59 = vld [vmem:[%s2 + $0x70] sm:$0xff]
    %v60 = vld [vmem:[%s2 + $0x78] sm:$0xff]
    %v61 = vlaneseq
    %v62 = vand.u32 %v61, 127
    %v63 = vld [vmem:[%s0] sm:$0xff]
    %v64 = vld [vmem:[%s0 + $0x8] sm:$0xff]
    %v65 = vld [vmem:[%s0 + $0x10] sm:$0xff]
    %v66 = vld [vmem:[%s0 + $0x18] sm:$0xff]
    %v67 = vld [vmem:[%s0 + $0x20] sm:$0xff]
    %v68 = vld [vmem:[%s0 + $0x28] sm:$0xff]
    %v69 = vld [vmem:[%s0 + $0x30] sm:$0xff]
    %v70 = vld [vmem:[%s0 + $0x38] sm:$0xff]
    %v71 = vld [vmem:[%s0 + $0x40] sm:$0xff]
    %v72 = vld [vmem:[%s0 + $0x48] sm:$0xff]
    %v73 = vld [vmem:[%s0 + $0x50] sm:$0xff]
    %v74 = vld [vmem:[%s0 + $0x58] sm:$0xff]
    %v75 = vld [vmem:[%s0 + $0x60] sm:$0xff]
    %v76 = vld [vmem:[%s0 + $0x68] sm:$0xff]
    %v77 = vld [vmem:[%s0 + $0x70] sm:$0xff]
    %v78 = vld [vmem:[%s0 + $0x78] sm:$0xff]
    %79 = vset.pattern.permute.xlu0 0
    %80 = vperm.xlu0 %79, %v63
    %v81 = vpop.permute.xlu0 %80
    %82 = vset.pattern.permute.xlu0 0
    %83 = vperm.xlu0 %82, %v64
    %v84 = vpop.permute.xlu0 %83
    %85 = vset.pattern.permute.xlu0 0
    %86 = vperm.xlu0 %85, %v65
    %v87 = vpop.permute.xlu0 %86
    %88 = vset.pattern.permute.xlu0 0
    %89 = vperm.xlu0 %88, %v66
    %v90 = vpop.permute.xlu0 %89
    %91 = vset.pattern.permute.xlu0 0
    %92 = vperm.xlu0 %91, %v67
    %v93 = vpop.permute.xlu0 %92
    %94 = vset.pattern.permute.xlu0 0
    %95 = vperm.xlu0 %94, %v68
    %v96 = vpop.permute.xlu0 %95
    %97 = vset.pattern.permute.xlu0 0
    %98 = vperm.xlu0 %97, %v69
    %v99 = vpop.permute.xlu0 %98
    %100 = vset.pattern.permute.xlu0 0
    %101 = vperm.xlu0 %100, %v70
    %v102 = vpop.permute.xlu0 %101
    %103 = vset.pattern.permute.xlu0 0
    %104 = vperm.xlu0 %103, %v71
    %v105 = vpop.permute.xlu0 %104
    %106 = vset.pattern.permute.xlu0 0
    %107 = vperm.xlu0 %106, %v72
    %v108 = vpop.permute.xlu0 %107
    %109 = vset.pattern.permute.xlu0 0
    %110 = vperm.xlu0 %109, %v73
    %v111 = vpop.permute.xlu0 %110
    %112 = vset.pattern.permute.xlu0 0
    %113 = vperm.xlu0 %112, %v74
    %v114 = vpop.permute.xlu0 %113
    %115 = vset.pattern.permute.xlu0 0
    %116 = vperm.xlu0 %115, %v75
    %v117 = vpop.permute.xlu0 %116
    %118 = vset.pattern.permute.xlu0 0
    %119 = vperm.xlu0 %118, %v76
    %v120 = vpop.permute.xlu0 %119
    %121 = vset.pattern.permute.xlu0 0
    %122 = vperm.xlu0 %121, %v77
    %v123 = vpop.permute.xlu0 %122
    %124 = vset.pattern.permute.xlu0 0
    %125 = vperm.xlu0 %124, %v78
    %v126 = vpop.permute.xlu0 %125
    %vm127 = vcmp.eq.s32.totalorder %v62, %v81
    %vm128 = vcmp.eq.s32.totalorder %v62, %v84
    %vm129 = vcmp.eq.s32.totalorder %v62, %v87
    %vm130 = vcmp.eq.s32.totalorder %v62, %v90
    %vm131 = vcmp.eq.s32.totalorder %v62, %v93
    %vm132 = vcmp.eq.s32.totalorder %v62, %v96
    %vm133 = vcmp.eq.s32.totalorder %v62, %v99
    %vm134 = vcmp.eq.s32.totalorder %v62, %v102
    %vm135 = vcmp.eq.s32.totalorder %v62, %v105
    %vm136 = vcmp.eq.s32.totalorder %v62, %v108
    %vm137 = vcmp.eq.s32.totalorder %v62, %v111
    %vm138 = vcmp.eq.s32.totalorder %v62, %v114
    %vm139 = vcmp.eq.s32.totalorder %v62, %v117
    %vm140 = vcmp.eq.s32.totalorder %v62, %v120
    %vm141 = vcmp.eq.s32.totalorder %v62, %v123
    %vm142 = vcmp.eq.s32.totalorder %v62, %v126
    %v143 = vsel %vm127, 1, 0
    %v144 = vsel %vm128, 1, 0
    %v145 = vsel %vm129, 1, 0
    %v146 = vsel %vm130, 1, 0
    %v147 = vsel %vm131, 1, 0
    %v148 = vsel %vm132, 1, 0
    %v149 = vsel %vm133, 1, 0
    %v150 = vsel %vm134, 1, 0
    %v151 = vsel %vm135, 1, 0
    %v152 = vsel %vm136, 1, 0
    %v153 = vsel %vm137, 1, 0
    %v154 = vsel %vm138, 1, 0
    %v155 = vsel %vm139, 1, 0
    %v156 = vsel %vm140, 1, 0
    %v157 = vsel %vm141, 1, 0
    %v158 = vsel %vm142, 1, 0
    %v159 = vcvt.s32.f32 %v143
    %v160 = vcvt.s32.f32 %v144
    %v161 = vcvt.s32.f32 %v145
    %v162 = vcvt.s32.f32 %v146
    %v163 = vcvt.s32.f32 %v147
    %v164 = vcvt.s32.f32 %v148
    %v165 = vcvt.s32.f32 %v149
    %v166 = vcvt.s32.f32 %v150
    %v167 = vcvt.s32.f32 %v151
    %v168 = vcvt.s32.f32 %v152
    %v169 = vcvt.s32.f32 %v153
    %v170 = vcvt.s32.f32 %v154
    %v171 = vcvt.s32.f32 %v155
    %v172 = vcvt.s32.f32 %v156
    %v173 = vcvt.s32.f32 %v157
    %v174 = vcvt.s32.f32 %v158
    %v175 = vld [vmem:[#allocation2] sm:$0xff]
    %v176 = vld [vmem:[#allocation2 + $0x8] sm:$0xff]
    %v177 = vld [vmem:[#allocation2 + $0x10] sm:$0xff]
    %v178 = vld [vmem:[#allocation2 + $0x18] sm:$0xff]
    %v179 = vld [vmem:[%s6] sm:$0x1]
    %v180 = vlaneseq
    %v181 = vshrl.u32 %v180, 7
    %v182 = vsub.s32 0, %v181
    %v183 = vrot.slane %v179, %v182
    %vm184 = vcmask 261120
    %v186 = vsel %vm184, %v43, 0
    %v189 = vsel %vm184, %v44, 0
    %191 = vmatprep.subr.mxu0 0.0
    %192 = vmatpush1.msra.mxu0 %v175
    %193 = vmatprep.subr.mxu0 0.0
    %194 = vmatpush1.msra.mxu0 %v176
    %195 = vmatprep.subr.mxu0 0.0
    %196 = vmatpush1.msra.mxu0 %v177
    %197 = vmatprep.subr.mxu0 0.0
    %198 = vmatpush1.msra.mxu0 %v178
    %199 = vmatprep.subr.mxu0 0.0
    %200 = vmatpush1.msra.mxu0 0.0
    %201 = vmatprep.subr.mxu0 0.0
    %202 = vmatpush1.msra.mxu0 0.0
    %203 = vmatprep.subr.mxu0 0.0
    %204 = vmatpush1.msra.mxu0 0.0
    %205 = vmatprep.subr.mxu0 0.0
    %206 = vmatpush1.msra.mxu0 0.0
    %207 = vmatprep.subr.mxu0 0.0
    %208 = vmatpush1.msra.mxu0 0.0
    %209 = vmatprep.subr.mxu0 0.0
    %210 = vmatpush1.msra.mxu0 0.0
    %211 = vmatprep.subr.mxu0 0.0
    %212 = vmatpush1.msra.mxu0 0.0
    %213 = vmatprep.subr.mxu0 0.0
    %214 = vmatpush1.msra.mxu0 0.0
    %215 = vmatprep.subr.mxu0 0.0
    %216 = vmatpush1.msra.mxu0 0.0
    %217 = vmatprep.subr.mxu0 0.0
    %218 = vmatpush1.msra.mxu0 0.0
    %219 = vmatprep.subr.mxu0 0.0
    %220 = vmatpush1.msra.mxu0 0.0
    %221 = vmatprep.subr.mxu0 0.0
    %222 = vmatpush1.msra.mxu0 0.0
    %223 = vmatprep.subr.mxu0 0.0
    %224 = vmatpush1.msra.mxu0 0.0
    %225 = vmatprep.subr.mxu0 0.0
    %226 = vmatpush1.msra.mxu0 0.0
    %227 = vmatprep.subr.mxu0 0.0
    %228 = vmatpush1.msra.mxu0 0.0
    %229 = vmatprep.subr.mxu0 0.0
    %230 = vmatpush1.msra.mxu0 0.0
    %231 = vmatprep.subr.mxu0 0.0
    %232 = vmatpush1.msra.mxu0 0.0
    %233 = vmatprep.subr.mxu0 0.0
    %234 = vmatpush1.msra.mxu0 0.0
    %235 = vmatprep.subr.mxu0 0.0
    %236 = vmatpush1.msra.mxu0 0.0
    %237 = vmatprep.subr.mxu0 0.0
    %238 = vmatpush1.msra.mxu0 0.0
    %239 = vmatprep.subr.mxu0 0.0
    %240 = vmatpush1.msra.mxu0 0.0
    %241 = vmatprep.subr.mxu0 0.0
    %242 = vmatpush1.msra.mxu0 0.0
    %243 = vmatprep.subr.mxu0 0.0
    %244 = vmatpush1.msra.mxu0 0.0
    %245 = vmatprep.subr.mxu0 0.0
    %246 = vmatpush1.msra.mxu0 0.0
    %247 = vmatprep.subr.mxu0 0.0
    %248 = vmatpush1.msra.mxu0 0.0
    %249 = vmatprep.subr.mxu0 0.0
    %250 = vmatpush1.msra.mxu0 0.0
    %251 = vmatprep.subr.mxu0 0.0
    %252 = vmatpush1.msra.mxu0 0.0
    %253 = vmatprep.subr.mxu0 0.0
    %254 = vmatpush1.msra.mxu0 0.0
    %255 = vmatprep.mubr.f32.mxu0 0.0
    %256 = vmatmul.mubr.f32.gmra.mrb[0].mxu0 %v186
    %v257 = vpop.f32.mrb[0].mxu0
    %v258 = vadd.f32 %v183, %v257
    %v259 = vpop.f32.mrb[0].mxu0
    %260 = vmatprep.mubr.f32.mxu0 0.0
    %261 = vmatmul.mubr.f32.gmra.mrb[0].mxu0 %v189
    %v262 = vpop.f32.mrb[0].mxu0
    %v263 = vadd.f32 %v183, %v262
    %v264 = vpop.f32.mrb[0].mxu0
    %265 = vdwg.mxu0
    %v268 = vcombine.high %v258, %v258
    %v270 = vunpack.c.l.s4 1966171168
    %v271 = vunpack.c.0.s8 %v270
    %v272 = vlaneseq
    %v273 = vshrl.u32 %v272, 7
    %v274 = vsub.s32 %v271, %v273
    %v275 = vrot.slane %v258, %v274
    %v277 = vunpack.c.l.s4 1966171168
    %v278 = vunpack.c.0.s8 %v277
    %v279 = vlaneseq
    %v280 = vshrl.u32 %v279, 7
    %v281 = vsub.s32 %v278, %v280
    %v282 = vrot.slane %v268, %v281
    %v283 = vcombine.high %v275, %v275
    %v284 = vcombine.high %v282, %v282
    %v286 = vunpack.c.l.s4 1966171168
    %v287 = vunpack.c.0.s8 %v286
    %v288 = vlaneseq
    %v289 = vshrl.u32 %v288, 7
    %v290 = vsub.s32 %v287, %v289
    %v291 = vrot.slane %v275, %v290
    %v293 = vunpack.c.l.s4 1966171168
    %v294 = vunpack.c.0.s8 %v293
    %v295 = vlaneseq
    %v296 = vshrl.u32 %v295, 7
    %v297 = vsub.s32 %v294, %v296
    %v298 = vrot.slane %v282, %v297
    %v300 = vunpack.c.l.s4 1966171168
    %v301 = vunpack.c.0.s8 %v300
    %v302 = vlaneseq
    %v303 = vshrl.u32 %v302, 7
    %v304 = vsub.s32 %v301, %v303
    %v305 = vrot.slane %v283, %v304
    %v307 = vunpack.c.l.s4 1966171168
    %v308 = vunpack.c.0.s8 %v307
    %v309 = vlaneseq
    %v310 = vshrl.u32 %v309, 7
    %v311 = vsub.s32 %v308, %v310
    %v312 = vrot.slane %v284, %v311
    %v313 = vcombine.high %v291, %v291
    %v314 = vcombine.high %v298, %v298
    %v315 = vcombine.high %v305, %v305
    %v316 = vcombine.high %v312, %v312
    %v317 = vcombine.high %v263, %v263
    %v319 = vunpack.c.l.s4 1966171168
    %v320 = vunpack.c.0.s8 %v319
    %v321 = vlaneseq
    %v322 = vshrl.u32 %v321, 7
    %v323 = vsub.s32 %v320, %v322
    %v324 = vrot.slane %v263, %v323
    %v326 = vunpack.c.l.s4 1966171168
    %v327 = vunpack.c.0.s8 %v326
    %v328 = vlaneseq
    %v329 = vshrl.u32 %v328, 7
    %v330 = vsub.s32 %v327, %v329
    %v331 = vrot.slane %v317, %v330
    %v332 = vcombine.high %v324, %v324
    %v333 = vcombine.high %v331, %v331
    %v335 = vunpack.c.l.s4 1966171168
    %v336 = vunpack.c.0.s8 %v335
    %v337 = vlaneseq
    %v338 = vshrl.u32 %v337, 7
    %v339 = vsub.s32 %v336, %v338
    %v340 = vrot.slane %v324, %v339
    %v342 = vunpack.c.l.s4 1966171168
    %v343 = vunpack.c.0.s8 %v342
    %v344 = vlaneseq
    %v345 = vshrl.u32 %v344, 7
    %v346 = vsub.s32 %v343, %v345
    %v347 = vrot.slane %v331, %v346
    %v349 = vunpack.c.l.s4 1966171168
    %v350 = vunpack.c.0.s8 %v349
    %v351 = vlaneseq
    %v352 = vshrl.u32 %v351, 7
    %v353 = vsub.s32 %v350, %v352
    %v354 = vrot.slane %v332, %v353
    %v356 = vunpack.c.l.s4 1966171168
    %v357 = vunpack.c.0.s8 %v356
    %v358 = vlaneseq
    %v359 = vshrl.u32 %v358, 7
    %v360 = vsub.s32 %v357, %v359
    %v361 = vrot.slane %v333, %v360
    %v362 = vcombine.high %v340, %v340
    %v363 = vcombine.high %v347, %v347
    %v364 = vcombine.high %v354, %v354
    %v365 = vcombine.high %v361, %v361
    %v366 = vlaneseq
    %v367 = vshrl.u32 %v366, 7
    %v368 = vsub.s32 0, %v367
    %v369 = vrot.slane %v291, %v368
    %v370 = vlaneseq
    %v371 = vshrl.u32 %v370, 7
    %v372 = vsub.s32 0, %v371
    %v373 = vrot.slane %v305, %v372
    %v374 = vlaneseq
    %v375 = vshrl.u32 %v374, 7
    %v376 = vsub.s32 0, %v375
    %v377 = vrot.slane %v313, %v376
    %v378 = vlaneseq
    %v379 = vshrl.u32 %v378, 7
    %v380 = vsub.s32 0, %v379
    %v381 = vrot.slane %v315, %v380
    %v382 = vlaneseq
    %v383 = vshrl.u32 %v382, 7
    %v384 = vsub.s32 0, %v383
    %v385 = vrot.slane %v298, %v384
    %v386 = vlaneseq
    %v387 = vshrl.u32 %v386, 7
    %v388 = vsub.s32 0, %v387
    %v389 = vrot.slane %v312, %v388
    %v390 = vlaneseq
    %v391 = vshrl.u32 %v390, 7
    %v392 = vsub.s32 0, %v391
    %v393 = vrot.slane %v314, %v392
    %v394 = vlaneseq
    %v395 = vshrl.u32 %v394, 7
    %v396 = vsub.s32 0, %v395
    %v397 = vrot.slane %v316, %v396
    %v398 = vlaneseq
    %v399 = vshrl.u32 %v398, 7
    %v400 = vsub.s32 0, %v399
    %v401 = vrot.slane %v340, %v400
    %v402 = vlaneseq
    %v403 = vshrl.u32 %v402, 7
    %v404 = vsub.s32 0, %v403
    %v405 = vrot.slane %v354, %v404
    %v406 = vlaneseq
    %v407 = vshrl.u32 %v406, 7
    %v408 = vsub.s32 0, %v407
    %v409 = vrot.slane %v362, %v408
    %v410 = vlaneseq
    %v411 = vshrl.u32 %v410, 7
    %v412 = vsub.s32 0, %v411
    %v413 = vrot.slane %v364, %v412
    %v414 = vlaneseq
    %v415 = vshrl.u32 %v414, 7
    %v416 = vsub.s32 0, %v415
    %v417 = vrot.slane %v347, %v416
    %v418 = vlaneseq
    %v419 = vshrl.u32 %v418, 7
    %v420 = vsub.s32 0, %v419
    %v421 = vrot.slane %v361, %v420
    %v422 = vlaneseq
    %v423 = vshrl.u32 %v422, 7
    %v424 = vsub.s32 0, %v423
    %v425 = vrot.slane %v363, %v424
    %v426 = vlaneseq
    %v427 = vshrl.u32 %v426, 7
    %v428 = vsub.s32 0, %v427
    %v429 = vrot.slane %v365, %v428
    %v446 = vld [vmem:[#allocation2 + $0x20] sm:$0xff]
    %v447 = vld [vmem:[#allocation2 + $0x28] sm:$0xff]
    %v448 = vld [vmem:[#allocation2 + $0x30] sm:$0xff]
    %v449 = vld [vmem:[#allocation2 + $0x38] sm:$0xff]
    %v450 = vld [vmem:[#allocation2 + $0x40] sm:$0xff]
    %v451 = vld [vmem:[#allocation2 + $0x48] sm:$0xff]
    %v452 = vld [vmem:[#allocation2 + $0x50] sm:$0xff]
    %v453 = vld [vmem:[#allocation2 + $0x58] sm:$0xff]
    %454 = vmatprep.subr.mxu0 0.0
    %455 = vmatpush1.msra.mxu0 %v450
    %456 = vmatprep.subr.mxu0 0.0
    %457 = vmatpush1.msra.mxu0 %v451
    %458 = vmatprep.subr.mxu0 0.0
    %459 = vmatpush1.msra.mxu0 %v452
    %460 = vmatprep.subr.mxu0 0.0
    %461 = vmatpush1.msra.mxu0 %v453
    %462 = vmatprep.subr.mxu0 0.0
    %463 = vmatpush1.msra.mxu0 0.0
    %464 = vmatprep.subr.mxu0 0.0
    %465 = vmatpush1.msra.mxu0 0.0
    %466 = vmatprep.subr.mxu0 0.0
    %467 = vmatpush1.msra.mxu0 0.0
    %468 = vmatprep.subr.mxu0 0.0
    %469 = vmatpush1.msra.mxu0 0.0
    %470 = vmatprep.subr.mxu0 0.0
    %471 = vmatpush1.msra.mxu0 0.0
    %472 = vmatprep.subr.mxu0 0.0
    %473 = vmatpush1.msra.mxu0 0.0
    %474 = vmatprep.subr.mxu0 0.0
    %475 = vmatpush1.msra.mxu0 0.0
    %476 = vmatprep.subr.mxu0 0.0
    %477 = vmatpush1.msra.mxu0 0.0
    %478 = vmatprep.subr.mxu0 0.0
    %479 = vmatpush1.msra.mxu0 0.0
    %480 = vmatprep.subr.mxu0 0.0
    %481 = vmatpush1.msra.mxu0 0.0
    %482 = vmatprep.subr.mxu0 0.0
    %483 = vmatpush1.msra.mxu0 0.0
    %484 = vmatprep.subr.mxu0 0.0
    %485 = vmatpush1.msra.mxu0 0.0
    %486 = vmatprep.subr.mxu0 0.0
    %487 = vmatpush1.msra.mxu0 0.0
    %488 = vmatprep.subr.mxu0 0.0
    %489 = vmatpush1.msra.mxu0 0.0
    %490 = vmatprep.subr.mxu0 0.0
    %491 = vmatpush1.msra.mxu0 0.0
    %492 = vmatprep.subr.mxu0 0.0
    %493 = vmatpush1.msra.mxu0 0.0
    %494 = vmatprep.subr.mxu0 0.0
    %495 = vmatpush1.msra.mxu0 0.0
    %496 = vmatprep.subr.mxu0 0.0
    %497 = vmatpush1.msra.mxu0 0.0
    %498 = vmatprep.subr.mxu0 0.0
    %499 = vmatpush1.msra.mxu0 0.0
    %500 = vmatprep.subr.mxu0 0.0
    %501 = vmatpush1.msra.mxu0 0.0
    %502 = vmatprep.subr.mxu0 0.0
    %503 = vmatpush1.msra.mxu0 0.0
    %504 = vmatprep.subr.mxu0 0.0
    %505 = vmatpush1.msra.mxu0 0.0
    %506 = vmatprep.subr.mxu0 0.0
    %507 = vmatpush1.msra.mxu0 0.0
    %508 = vmatprep.subr.mxu0 0.0
    %509 = vmatpush1.msra.mxu0 0.0
    %510 = vmatprep.subr.mxu0 0.0
    %511 = vmatpush1.msra.mxu0 0.0
    %512 = vmatprep.subr.mxu0 0.0
    %513 = vmatpush1.msra.mxu0 0.0
    %514 = vmatprep.subr.mxu0 0.0
    %515 = vmatpush1.msra.mxu0 0.0
    %516 = vmatprep.subr.mxu0 0.0
    %517 = vmatpush1.msra.mxu0 0.0
    %518 = vmatprep.mubr.f32.mxu0 0.0
    %519 = vmatmul.mubr.f32.gmra.mrb[0].mxu0 %v186
    %v520 = vpop.f32.mrb[0].mxu0
    %v521 = vadd.f32 0.0, %v520
    %v522 = vpop.f32.mrb[0].mxu0
    %523 = vmatprep.mubr.f32.mxu0 0.0
    %524 = vmatmul.mubr.f32.gmra.mrb[0].mxu0 %v189
    %v525 = vpop.f32.mrb[0].mxu0
    %v526 = vadd.f32 0.0, %v525
    %v527 = vpop.f32.mrb[0].mxu0
    %528 = vdwg.mxu0
    %vm529 = vcmask 130048
    %v531 = vsel %vm529, %v159, 0
    %v534 = vsel %vm529, %v160, 0
    %v537 = vsel %vm529, %v161, 0
    %v540 = vsel %vm529, %v162, 0
    %v543 = vsel %vm529, %v163, 0
    %v546 = vsel %vm529, %v164, 0
    %v549 = vsel %vm529, %v165, 0
    %v552 = vsel %vm529, %v166, 0
    %v555 = vsel %vm529, %v167, 0
    %v558 = vsel %vm529, %v168, 0
    %v561 = vsel %vm529, %v169, 0
    %v564 = vsel %vm529, %v170, 0
    %v567 = vsel %vm529, %v171, 0
    %v570 = vsel %vm529, %v172, 0
    %v573 = vsel %vm529, %v173, 0
    %v576 = vsel %vm529, %v174, 0
    %578 = vmatprep.subr.mxu0 0.0
    %579 = vmatpush1.msra.mxu0 %v521
    %580 = vmatprep.subr.mxu0 0.0
    %581 = vmatpush1.msra.mxu0 %v526
    %582 = vmatprep.subr.mxu0 0.0
    %583 = vmatpush1.msra.mxu0 0.0
    %584 = vmatprep.subr.mxu0 0.0
    %585 = vmatpush1.msra.mxu0 0.0
    %586 = vmatprep.subr.mxu0 0.0
    %587 = vmatpush1.msra.mxu0 0.0
    %588 = vmatprep.subr.mxu0 0.0
    %589 = vmatpush1.msra.mxu0 0.0
    %590 = vmatprep.subr.mxu0 0.0
    %591 = vmatpush1.msra.mxu0 0.0
    %592 = vmatprep.subr.mxu0 0.0
    %593 = vmatpush1.msra.mxu0 0.0
    %594 = vmatprep.subr.mxu0 0.0
    %595 = vmatpush1.msra.mxu0 0.0
    %596 = vmatprep.subr.mxu0 0.0
    %597 = vmatpush1.msra.mxu0 0.0
    %598 = vmatprep.subr.mxu0 0.0
    %599 = vmatpush1.msra.mxu0 0.0
    %600 = vmatprep.subr.mxu0 0.0
    %601 = vmatpush1.msra.mxu0 0.0
    %602 = vmatprep.subr.mxu0 0.0
    %603 = vmatpush1.msra.mxu0 0.0
    %604 = vmatprep.subr.mxu0 0.0
    %605 = vmatpush1.msra.mxu0 0.0
    %606 = vmatprep.subr.mxu0 0.0
    %607 = vmatpush1.msra.mxu0 0.0
    %608 = vmatprep.subr.mxu0 0.0
    %609 = vmatpush1.msra.mxu0 0.0
    %610 = vmatprep.subr.mxu0 0.0
    %611 = vmatpush1.msra.mxu0 0.0
    %612 = vmatprep.subr.mxu0 0.0
    %613 = vmatpush1.msra.mxu0 0.0
    %614 = vmatprep.subr.mxu0 0.0
    %615 = vmatpush1.msra.mxu0 0.0
    %616 = vmatprep.subr.mxu0 0.0
    %617 = vmatpush1.msra.mxu0 0.0
    %618 = vmatprep.subr.mxu0 0.0
    %619 = vmatpush1.msra.mxu0 0.0
    %620 = vmatprep.subr.mxu0 0.0
    %621 = vmatpush1.msra.mxu0 0.0
    %622 = vmatprep.subr.mxu0 0.0
    %623 = vmatpush1.msra.mxu0 0.0
    %624 = vmatprep.subr.mxu0 0.0
    %625 = vmatpush1.msra.mxu0 0.0
    %626 = vmatprep.subr.mxu0 0.0
    %627 = vmatpush1.msra.mxu0 0.0
    %628 = vmatprep.subr.mxu0 0.0
    %629 = vmatpush1.msra.mxu0 0.0
    %630 = vmatprep.subr.mxu0 0.0
    %631 = vmatpush1.msra.mxu0 0.0
    %632 = vmatprep.subr.mxu0 0.0
    %633 = vmatpush1.msra.mxu0 0.0
    %634 = vmatprep.subr.mxu0 0.0
    %635 = vmatpush1.msra.mxu0 0.0
    %636 = vmatprep.subr.mxu0 0.0
    %637 = vmatpush1.msra.mxu0 0.0
    %638 = vmatprep.subr.mxu0 0.0
    %639 = vmatpush1.msra.mxu0 0.0
    %640 = vmatprep.subr.mxu0 0.0
    %641 = vmatpush1.msra.mxu0 0.0
    %642 = vmatprep.mubr.f32.mxu0 0.0
    %643 = vmatmul.mubr.f32.gmra.mrb[0].mxu0 %v531
    %v644 = vpop.f32.mrb[0].mxu0
    %v645 = vadd.f32 0.0, %v644
    %v646 = vpop.f32.mrb[0].mxu0
    %647 = vmatprep.mubr.f32.mxu0 0.0
    %648 = vmatmul.mubr.f32.gmra.mrb[0].mxu0 %v534
    %v649 = vpop.f32.mrb[0].mxu0
    %v650 = vadd.f32 0.0, %v649
    %v651 = vpop.f32.mrb[0].mxu0
    %652 = vmatprep.mubr.f32.mxu0 0.0
    %653 = vmatmul.mubr.f32.gmra.mrb[0].mxu0 %v537
    %v654 = vpop.f32.mrb[0].mxu0
    %v655 = vadd.f32 0.0, %v654
    %v656 = vpop.f32.mrb[0].mxu0
    %657 = vmatprep.mubr.f32.mxu0 0.0
    %658 = vmatmul.mubr.f32.gmra.mrb[0].mxu0 %v540
    %v659 = vpop.f32.mrb[0].mxu0
    %v660 = vadd.f32 0.0, %v659
    %v661 = vpop.f32.mrb[0].mxu0
    %662 = vmatprep.mubr.f32.mxu0 0.0
    %663 = vmatmul.mubr.f32.gmra.mrb[0].mxu0 %v543
    %v664 = vpop.f32.mrb[0].mxu0
    %v665 = vadd.f32 0.0, %v664
    %v666 = vpop.f32.mrb[0].mxu0
    %667 = vmatprep.mubr.f32.mxu0 0.0
    %668 = vmatmul.mubr.f32.gmra.mrb[0].mxu0 %v546
    %v669 = vpop.f32.mrb[0].mxu0
    %v670 = vadd.f32 0.0, %v669
    %v671 = vpop.f32.mrb[0].mxu0
    %672 = vmatprep.mubr.f32.mxu0 0.0
    %673 = vmatmul.mubr.f32.gmra.mrb[0].mxu0 %v549
    %v674 = vpop.f32.mrb[0].mxu0
    %v675 = vadd.f32 0.0, %v674
    %v676 = vpop.f32.mrb[0].mxu0
    %677 = vmatprep.mubr.f32.mxu0 0.0
    %678 = vmatmul.mubr.f32.gmra.mrb[0].mxu0 %v552
    %v679 = vpop.f32.mrb[0].mxu0
    %v680 = vadd.f32 0.0, %v679
    %v681 = vpop.f32.mrb[0].mxu0
    %682 = vmatprep.mubr.f32.mxu0 0.0
    %683 = vmatmul.mubr.f32.gmra.mrb[0].mxu0 %v555
    %v684 = vpop.f32.mrb[0].mxu0
    %v685 = vadd.f32 0.0, %v684
    %v686 = vpop.f32.mrb[0].mxu0
    %687 = vmatprep.mubr.f32.mxu0 0.0
    %688 = vmatmul.mubr.f32.gmra.mrb[0].mxu0 %v558
    %v689 = vpop.f32.mrb[0].mxu0
    %v690 = vadd.f32 0.0, %v689
    %v691 = vpop.f32.mrb[0].mxu0
    %692 = vmatprep.mubr.f32.mxu0 0.0
    %693 = vmatmul.mubr.f32.gmra.mrb[0].mxu0 %v561
    %v694 = vpop.f32.mrb[0].mxu0
    %v695 = vadd.f32 0.0, %v694
    %v696 = vpop.f32.mrb[0].mxu0
    %697 = vmatprep.mubr.f32.mxu0 0.0
    %698 = vmatmul.mubr.f32.gmra.mrb[0].mxu0 %v564
    %v699 = vpop.f32.mrb[0].mxu0
    %v700 = vadd.f32 0.0, %v699
    %v701 = vpop.f32.mrb[0].mxu0
    %702 = vmatprep.mubr.f32.mxu0 0.0
    %703 = vmatmul.mubr.f32.gmra.mrb[0].mxu0 %v567
    %v704 = vpop.f32.mrb[0].mxu0
    %v705 = vadd.f32 0.0, %v704
    %v706 = vpop.f32.mrb[0].mxu0
    %707 = vmatprep.mubr.f32.mxu0 0.0
    %708 = vmatmul.mubr.f32.gmra.mrb[0].mxu0 %v570
    %v709 = vpop.f32.mrb[0].mxu0
    %v710 = vadd.f32 0.0, %v709
    %v711 = vpop.f32.mrb[0].mxu0
    %712 = vmatprep.mubr.f32.mxu0 0.0
    %713 = vmatmul.mubr.f32.gmra.mrb[0].mxu0 %v573
    %v714 = vpop.f32.mrb[0].mxu0
    %v715 = vadd.f32 0.0, %v714
    %v716 = vpop.f32.mrb[0].mxu0
    %717 = vmatprep.mubr.f32.mxu0 0.0
    %718 = vmatmul.mubr.f32.gmra.mrb[0].mxu0 %v576
    %v719 = vpop.f32.mrb[0].mxu0
    %v720 = vadd.f32 0.0, %v719
    %v721 = vpop.f32.mrb[0].mxu0
    %722 = vdwg.mxu0
    %v724 = vsel %vm184, %v45, 0
    %v727 = vsel %vm184, %v46, 0
    %v730 = vsel %vm184, %v47, 0
    %v733 = vsel %vm184, %v48, 0
    %v736 = vsel %vm184, %v49, 0
    %v739 = vsel %vm184, %v50, 0
    %v742 = vsel %vm184, %v51, 0
    %v745 = vsel %vm184, %v52, 0
    %v748 = vsel %vm184, %v53, 0
    %v751 = vsel %vm184, %v54, 0
    %v754 = vsel %vm184, %v55, 0
    %v757 = vsel %vm184, %v56, 0
    %v760 = vsel %vm184, %v57, 0
    %v763 = vsel %vm184, %v58, 0
    %v766 = vsel %vm184, %v59, 0
    %v769 = vsel %vm184, %v60, 0
    %771 = vmatprep.subr.mxu0 0.0
    %772 = vmatpush1.msra.mxu0 %v446
    %773 = vmatprep.subr.mxu0 0.0
    %774 = vmatpush1.msra.mxu0 %v447
    %775 = vmatprep.subr.mxu0 0.0
    %776 = vmatpush1.msra.mxu0 %v448
    %777 = vmatprep.subr.mxu0 0.0
    %778 = vmatpush1.msra.mxu0 %v449
    %779 = vmatprep.subr.mxu0 0.0
    %780 = vmatpush1.msra.mxu0 0.0
    %781 = vmatprep.subr.mxu0 0.0
    %782 = vmatpush1.msra.mxu0 0.0
    %783 = vmatprep.subr.mxu0 0.0
    %784 = vmatpush1.msra.mxu0 0.0
    %785 = vmatprep.subr.mxu0 0.0
    %786 = vmatpush1.msra.mxu0 0.0
    %787 = vmatprep.subr.mxu0 0.0
    %788 = vmatpush1.msra.mxu0 0.0
    %789 = vmatprep.subr.mxu0 0.0
    %790 = vmatpush1.msra.mxu0 0.0
    %791 = vmatprep.subr.mxu0 0.0
    %792 = vmatpush1.msra.mxu0 0.0
    %793 = vmatprep.subr.mxu0 0.0
    %794 = vmatpush1.msra.mxu0 0.0
    %795 = vmatprep.subr.mxu0 0.0
    %796 = vmatpush1.msra.mxu0 0.0
    %797 = vmatprep.subr.mxu0 0.0
    %798 = vmatpush1.msra.mxu0 0.0
    %799 = vmatprep.subr.mxu0 0.0
    %800 = vmatpush1.msra.mxu0 0.0
    %801 = vmatprep.subr.mxu0 0.0
    %802 = vmatpush1.msra.mxu0 0.0
    %803 = vmatprep.subr.mxu0 0.0
    %804 = vmatpush1.msra.mxu0 0.0
    %805 = vmatprep.subr.mxu0 0.0
    %806 = vmatpush1.msra.mxu0 0.0
    %807 = vmatprep.subr.mxu0 0.0
    %808 = vmatpush1.msra.mxu0 0.0
    %809 = vmatprep.subr.mxu0 0.0
    %810 = vmatpush1.msra.mxu0 0.0
    %811 = vmatprep.subr.mxu0 0.0
    %812 = vmatpush1.msra.mxu0 0.0
    %813 = vmatprep.subr.mxu0 0.0
    %814 = vmatpush1.msra.mxu0 0.0
    %815 = vmatprep.subr.mxu0 0.0
    %816 = vmatpush1.msra.mxu0 0.0
    %817 = vmatprep.subr.mxu0 0.0
    %818 = vmatpush1.msra.mxu0 0.0
    %819 = vmatprep.subr.mxu0 0.0
    %820 = vmatpush1.msra.mxu0 0.0
    %821 = vmatprep.subr.mxu0 0.0
    %822 = vmatpush1.msra.mxu0 0.0
    %823 = vmatprep.subr.mxu0 0.0
    %824 = vmatpush1.msra.mxu0 0.0
    %825 = vmatprep.subr.mxu0 0.0
    %826 = vmatpush1.msra.mxu0 0.0
    %827 = vmatprep.subr.mxu0 0.0
    %828 = vmatpush1.msra.mxu0 0.0
    %829 = vmatprep.subr.mxu0 0.0
    %830 = vmatpush1.msra.mxu0 0.0
    %831 = vmatprep.subr.mxu0 0.0
    %832 = vmatpush1.msra.mxu0 0.0
    %833 = vmatprep.subr.mxu0 0.0
    %834 = vmatpush1.msra.mxu0 0.0
    %835 = vmatprep.mubr.f32.mxu0 0.0
    %836 = vmatmul.mubr.f32.gmra.mrb[0].mxu0 %v724
    %v837 = vpop.f32.mrb[0].mxu0
    %v838 = vadd.f32 %v645, %v837
    %v839 = vpop.f32.mrb[0].mxu0
    %840 = vmatprep.mubr.f32.mxu0 0.0
    %841 = vmatmul.mubr.f32.gmra.mrb[0].mxu0 %v727
    %v842 = vpop.f32.mrb[0].mxu0
    %v843 = vadd.f32 %v650, %v842
    %v844 = vpop.f32.mrb[0].mxu0
    %845 = vmatprep.mubr.f32.mxu0 0.0
    %846 = vmatmul.mubr.f32.gmra.mrb[0].mxu0 %v730
    %v847 = vpop.f32.mrb[0].mxu0
    %v848 = vadd.f32 %v655, %v847
    %v849 = vpop.f32.mrb[0].mxu0
    %850 = vmatprep.mubr.f32.mxu0 0.0
    %851 = vmatmul.mubr.f32.gmra.mrb[0].mxu0 %v733
    %v852 = vpop.f32.mrb[0].mxu0
    %v853 = vadd.f32 %v660, %v852
    %v854 = vpop.f32.mrb[0].mxu0
    %855 = vmatprep.mubr.f32.mxu0 0.0
    %856 = vmatmul.mubr.f32.gmra.mrb[0].mxu0 %v736
    %v857 = vpop.f32.mrb[0].mxu0
    %v858 = vadd.f32 %v665, %v857
    %v859 = vpop.f32.mrb[0].mxu0
    %860 = vmatprep.mubr.f32.mxu0 0.0
    %861 = vmatmul.mubr.f32.gmra.mrb[0].mxu0 %v739
    %v862 = vpop.f32.mrb[0].mxu0
    %v863 = vadd.f32 %v670, %v862
    %v864 = vpop.f32.mrb[0].mxu0
    %865 = vmatprep.mubr.f32.mxu0 0.0
    %866 = vmatmul.mubr.f32.gmra.mrb[0].mxu0 %v742
    %v867 = vpop.f32.mrb[0].mxu0
    %v868 = vadd.f32 %v675, %v867
    %v869 = vpop.f32.mrb[0].mxu0
    %870 = vmatprep.mubr.f32.mxu0 0.0
    %871 = vmatmul.mubr.f32.gmra.mrb[0].mxu0 %v745
    %v872 = vpop.f32.mrb[0].mxu0
    %v873 = vadd.f32 %v680, %v872
    %v874 = vpop.f32.mrb[0].mxu0
    %875 = vmatprep.mubr.f32.mxu0 0.0
    %876 = vmatmul.mubr.f32.gmra.mrb[0].mxu0 %v748
    %v877 = vpop.f32.mrb[0].mxu0
    %v878 = vadd.f32 %v685, %v877
    %v879 = vpop.f32.mrb[0].mxu0
    %880 = vmatprep.mubr.f32.mxu0 0.0
    %881 = vmatmul.mubr.f32.gmra.mrb[0].mxu0 %v751
    %v882 = vpop.f32.mrb[0].mxu0
    %v883 = vadd.f32 %v690, %v882
    %v884 = vpop.f32.mrb[0].mxu0
    %885 = vmatprep.mubr.f32.mxu0 0.0
    %886 = vmatmul.mubr.f32.gmra.mrb[0].mxu0 %v754
    %v887 = vpop.f32.mrb[0].mxu0
    %v888 = vadd.f32 %v695, %v887
    %v889 = vpop.f32.mrb[0].mxu0
    %890 = vmatprep.mubr.f32.mxu0 0.0
    %891 = vmatmul.mubr.f32.gmra.mrb[0].mxu0 %v757
    %v892 = vpop.f32.mrb[0].mxu0
    %v893 = vadd.f32 %v700, %v892
    %v894 = vpop.f32.mrb[0].mxu0
    %895 = vmatprep.mubr.f32.mxu0 0.0
    %896 = vmatmul.mubr.f32.gmra.mrb[0].mxu0 %v760
    %v897 = vpop.f32.mrb[0].mxu0
    %v898 = vadd.f32 %v705, %v897
    %v899 = vpop.f32.mrb[0].mxu0
    %900 = vmatprep.mubr.f32.mxu0 0.0
    %901 = vmatmul.mubr.f32.gmra.mrb[0].mxu0 %v763
    %v902 = vpop.f32.mrb[0].mxu0
    %v903 = vadd.f32 %v710, %v902
    %v904 = vpop.f32.mrb[0].mxu0
    %905 = vmatprep.mubr.f32.mxu0 0.0
    %906 = vmatmul.mubr.f32.gmra.mrb[0].mxu0 %v766
    %v907 = vpop.f32.mrb[0].mxu0
    %v908 = vadd.f32 %v715, %v907
    %v909 = vpop.f32.mrb[0].mxu0
    %910 = vmatprep.mubr.f32.mxu0 0.0
    %911 = vmatmul.mubr.f32.gmra.mrb[0].mxu0 %v769
    %v912 = vpop.f32.mrb[0].mxu0
    %v913 = vadd.f32 %v720, %v912
    %v914 = vpop.f32.mrb[0].mxu0
    %915 = vdwg.mxu0
    %v916 = vadd.f32 %v838, %v369
    %v917 = vadd.f32 %v843, %v373
    %v918 = vadd.f32 %v848, %v377
    %v919 = vadd.f32 %v853, %v381
    %v920 = vadd.f32 %v858, %v385
    %v921 = vadd.f32 %v863, %v389
    %v922 = vadd.f32 %v868, %v393
    %v923 = vadd.f32 %v873, %v397
    %v924 = vadd.f32 %v878, %v401
    %v925 = vadd.f32 %v883, %v405
    %v926 = vadd.f32 %v888, %v409
    %v927 = vadd.f32 %v893, %v413
    %v928 = vadd.f32 %v898, %v417
    %v929 = vadd.f32 %v903, %v421
    %v930 = vadd.f32 %v908, %v425
    %v931 = vadd.f32 %v913, %v429
    %vm932 = vcmp.lt.s32.totalorder %v62, 32
    %v933 = vmax.f32 %v916, 0.0
    %v934 = vmax.f32 %v917, 0.0
    %v935 = vmax.f32 %v918, 0.0
    %v936 = vmax.f32 %v919, 0.0
    %v937 = vmax.f32 %v920, 0.0
    %v938 = vmax.f32 %v921, 0.0
    %v939 = vmax.f32 %v922, 0.0
    %v940 = vmax.f32 %v923, 0.0
    %v941 = vmax.f32 %v924, 0.0
    %v942 = vmax.f32 %v925, 0.0
    %v943 = vmax.f32 %v926, 0.0
    %v944 = vmax.f32 %v927, 0.0
    %v945 = vmax.f32 %v928, 0.0
    %v946 = vmax.f32 %v929, 0.0
    %v947 = vmax.f32 %v930, 0.0
    %v948 = vmax.f32 %v931, 0.0
    %v949 = vmul.f32 %v916, 0.5
    %v950 = vmul.f32 %v917, 0.5
    %v951 = vmul.f32 %v918, 0.5
    %v952 = vmul.f32 %v919, 0.5
    %v953 = vmul.f32 %v920, 0.5
    %v954 = vmul.f32 %v921, 0.5
    %v955 = vmul.f32 %v922, 0.5
    %v956 = vmul.f32 %v923, 0.5
    %v957 = vmul.f32 %v924, 0.5
    %v958 = vmul.f32 %v925, 0.5
    %v959 = vmul.f32 %v926, 0.5
    %v960 = vmul.f32 %v927, 0.5
    %v961 = vmul.f32 %v928, 0.5
    %v962 = vmul.f32 %v929, 0.5
    %v963 = vmul.f32 %v930, 0.5
    %v964 = vmul.f32 %v931, 0.5
    %v965 = vmul.f32 %v916, 0.70710677
    %v966 = vmul.f32 %v917, 0.70710677
    %v967 = vmul.f32 %v918, 0.70710677
    %v968 = vmul.f32 %v919, 0.70710677
    %v969 = vmul.f32 %v920, 0.70710677
    %v970 = vmul.f32 %v921, 0.70710677
    %v971 = vmul.f32 %v922, 0.70710677
    %v972 = vmul.f32 %v923, 0.70710677
    %v973 = vmul.f32 %v924, 0.70710677
    %v974 = vmul.f32 %v925, 0.70710677
    %v975 = vmul.f32 %v926, 0.70710677
    %v976 = vmul.f32 %v927, 0.70710677
    %v977 = vmul.f32 %v928, 0.70710677
    %v978 = vmul.f32 %v929, 0.70710677
    %v979 = vmul.f32 %v930, 0.70710677
    %v980 = vmul.f32 %v931, 0.70710677
    %v981 = verf.f32.pop %v965
    %v982 = verf.f32.pop %v966
    %v983 = verf.f32.pop %v967
    %v984 = verf.f32.pop %v968
    %v985 = verf.f32.pop %v969
    %v986 = verf.f32.pop %v970
    %v987 = verf.f32.pop %v971
    %v988 = verf.f32.pop %v972
    %v989 = verf.f32.pop %v973
    %v990 = verf.f32.pop %v974
    %v991 = verf.f32.pop %v975
    %v992 = verf.f32.pop %v976
    %v993 = verf.f32.pop %v977
    %v994 = verf.f32.pop %v978
    %v995 = verf.f32.pop %v979
    %v996 = verf.f32.pop %v980
    %v997 = vadd.f32 %v981, 1.0
    %v998 = vadd.f32 %v982, 1.0
    %v999 = vadd.f32 %v983, 1.0
    %v1000 = vadd.f32 %v984, 1.0
    %v1001 = vadd.f32 %v985, 1.0
    %v1002 = vadd.f32 %v986, 1.0
    %v1003 = vadd.f32 %v987, 1.0
    %v1004 = vadd.f32 %v988, 1.0
    %v1005 = vadd.f32 %v989, 1.0
    %v1006 = vadd.f32 %v990, 1.0
    %v1007 = vadd.f32 %v991, 1.0
    %v1008 = vadd.f32 %v992, 1.0
    %v1009 = vadd.f32 %v993, 1.0
    %v1010 = vadd.f32 %v994, 1.0
    %v1011 = vadd.f32 %v995, 1.0
    %v1012 = vadd.f32 %v996, 1.0
    %v1013 = vmul.f32 %v949, %v997
    %v1014 = vmul.f32 %v950, %v998
    %v1015 = vmul.f32 %v951, %v999
    %v1016 = vmul.f32 %v952, %v1000
    %v1017 = vmul.f32 %v953, %v1001
    %v1018 = vmul.f32 %v954, %v1002
    %v1019 = vmul.f32 %v955, %v1003
    %v1020 = vmul.f32 %v956, %v1004
    %v1021 = vmul.f32 %v957, %v1005
    %v1022 = vmul.f32 %v958, %v1006
    %v1023 = vmul.f32 %v959, %v1007
    %v1024 = vmul.f32 %v960, %v1008
    %v1025 = vmul.f32 %v961, %v1009
    %v1026 = vmul.f32 %v962, %v1010
    %v1027 = vmul.f32 %v963, %v1011
    %v1028 = vmul.f32 %v964, %v1012
    %v1029 = vsel %vm932, %v933, %v1013
    %v1030 = vsel %vm932, %v934, %v1014
    %v1031 = vsel %vm932, %v935, %v1015
    %v1032 = vsel %vm932, %v936, %v1016
    %v1033 = vsel %vm932, %v937, %v1017
    %v1034 = vsel %vm932, %v938, %v1018
    %v1035 = vsel %vm932, %v939, %v1019
    %v1036 = vsel %vm932, %v940, %v1020
    %v1037 = vsel %vm932, %v941, %v1021
    %v1038 = vsel %vm932, %v942, %v1022
    %v1039 = vsel %vm932, %v943, %v1023
    %v1040 = vsel %vm932, %v944, %v1024
    %v1041 = vsel %vm932, %v945, %v1025
    %v1042 = vsel %vm932, %v946, %v1026
    %v1043 = vsel %vm932, %v947, %v1027
    %v1044 = vsel %vm932, %v948, %v1028
    %v1045 = vld [vmem:[#allocation2 + $0x60] sm:$0xff]
    %v1046 = vld [vmem:[#allocation2 + $0x68] sm:$0xff]
    %v1047 = vld [vmem:[#allocation2 + $0x70] sm:$0xff]
    %v1048 = vld [vmem:[#allocation2 + $0x78] sm:$0xff]
    %v1049 = vld [vmem:[#allocation2 + $0x80] sm:$0xff]
    %v1050 = vld [vmem:[#allocation2 + $0x88] sm:$0xff]
    %v1051 = vld [vmem:[#allocation2 + $0x90] sm:$0xff]
    %v1052 = vld [vmem:[#allocation2 + $0x98] sm:$0xff]
    %v1053 = vld [vmem:[%s6 + $0x1] sm:$0x1]
    %v1054 = vlaneseq
    %v1055 = vshrl.u32 %v1054, 7
    %v1056 = vsub.s32 0, %v1055
    %v1057 = vrot.slane %v1053, %v1056
    %vm1058 = vcmask 523264
    %v1060 = vsel %vm1058, %v1029, 0
    %v1063 = vsel %vm1058, %v1030, 0
    %v1066 = vsel %vm1058, %v1031, 0
    %v1069 = vsel %vm1058, %v1032, 0
    %v1072 = vsel %vm1058, %v1033, 0
    %v1075 = vsel %vm1058, %v1034, 0
    %v1078 = vsel %vm1058, %v1035, 0
    %v1081 = vsel %vm1058, %v1036, 0
    %v1084 = vsel %vm1058, %v1037, 0
    %v1087 = vsel %vm1058, %v1038, 0
    %v1090 = vsel %vm1058, %v1039, 0
    %v1093 = vsel %vm1058, %v1040, 0
    %v1096 = vsel %vm1058, %v1041, 0
    %v1099 = vsel %vm1058, %v1042, 0
    %v1102 = vsel %vm1058, %v1043, 0
    %v1105 = vsel %vm1058, %v1044, 0
    %1107 = vmatprep.subr.mxu0 0.0
    %1108 = vmatpush1.msra.mxu0 %v1045
    %1109 = vmatprep.subr.mxu0 0.0
    %1110 = vmatpush1.msra.mxu0 %v1046
    %1111 = vmatprep.subr.mxu0 0.0
    %1112 = vmatpush1.msra.mxu0 %v1047
    %1113 = vmatprep.subr.mxu0 0.0
    %1114 = vmatpush1.msra.mxu0 %v1048
    %1115 = vmatprep.subr.mxu0 0.0
    %1116 = vmatpush1.msra.mxu0 %v1049
    %1117 = vmatprep.subr.mxu0 0.0
    %1118 = vmatpush1.msra.mxu0 %v1050
    %1119 = vmatprep.subr.mxu0 0.0
    %1120 = vmatpush1.msra.mxu0 %v1051
    %1121 = vmatprep.subr.mxu0 0.0
    %1122 = vmatpush1.msra.mxu0 %v1052
    %1123 = vmatprep.subr.mxu0 0.0
    %1124 = vmatpush1.msra.mxu0 0.0
    %1125 = vmatprep.subr.mxu0 0.0
    %1126 = vmatpush1.msra.mxu0 0.0
    %1127 = vmatprep.subr.mxu0 0.0
    %1128 = vmatpush1.msra.mxu0 0.0
    %1129 = vmatprep.subr.mxu0 0.0
    %1130 = vmatpush1.msra.mxu0 0.0
    %1131 = vmatprep.subr.mxu0 0.0
    %1132 = vmatpush1.msra.mxu0 0.0
    %1133 = vmatprep.subr.mxu0 0.0
    %1134 = vmatpush1.msra.mxu0 0.0
    %1135 = vmatprep.subr.mxu0 0.0
    %1136 = vmatpush1.msra.mxu0 0.0
    %1137 = vmatprep.subr.mxu0 0.0
    %1138 = vmatpush1.msra.mxu0 0.0
    %1139 = vmatprep.subr.mxu0 0.0
    %1140 = vmatpush1.msra.mxu0 0.0
    %1141 = vmatprep.subr.mxu0 0.0
    %1142 = vmatpush1.msra.mxu0 0.0
    %1143 = vmatprep.subr.mxu0 0.0
    %1144 = vmatpush1.msra.mxu0 0.0
    %1145 = vmatprep.subr.mxu0 0.0
    %1146 = vmatpush1.msra.mxu0 0.0
    %1147 = vmatprep.subr.mxu0 0.0
    %1148 = vmatpush1.msra.mxu0 0.0
    %1149 = vmatprep.subr.mxu0 0.0
    %1150 = vmatpush1.msra.mxu0 0.0
    %1151 = vmatprep.subr.mxu0 0.0
    %1152 = vmatpush1.msra.mxu0 0.0
    %1153 = vmatprep.subr.mxu0 0.0
    %1154 = vmatpush1.msra.mxu0 0.0
    %1155 = vmatprep.subr.mxu0 0.0
    %1156 = vmatpush1.msra.mxu0 0.0
    %1157 = vmatprep.subr.mxu0 0.0
    %1158 = vmatpush1.msra.mxu0 0.0
    %1159 = vmatprep.subr.mxu0 0.0
    %1160 = vmatpush1.msra.mxu0 0.0
    %1161 = vmatprep.subr.mxu0 0.0
    %1162 = vmatpush1.msra.mxu0 0.0
    %1163 = vmatprep.subr.mxu0 0.0
    %1164 = vmatpush1.msra.mxu0 0.0
    %1165 = vmatprep.subr.mxu0 0.0
    %1166 = vmatpush1.msra.mxu0 0.0
    %1167 = vmatprep.subr.mxu0 0.0
    %1168 = vmatpush1.msra.mxu0 0.0
    %1169 = vmatprep.subr.mxu0 0.0
    %1170 = vmatpush1.msra.mxu0 0.0
    %1171 = vmatprep.mubr.f32.mxu0 0.0
    %1172 = vmatmul.mubr.f32.gmra.mrb[0].mxu0 %v1060
    %v1173 = vpop.f32.mrb[0].mxu0
    %v1174 = vadd.f32 %v1057, %v1173
    %v1175 = vpop.f32.mrb[0].mxu0
    %1176 = vmatprep.mubr.f32.mxu0 0.0
    %1177 = vmatmul.mubr.f32.gmra.mrb[0].mxu0 %v1063
    %v1178 = vpop.f32.mrb[0].mxu0
    %v1179 = vadd.f32 %v1057, %v1178
    %v1180 = vpop.f32.mrb[0].mxu0
    %1181 = vmatprep.mubr.f32.mxu0 0.0
    %1182 = vmatmul.mubr.f32.gmra.mrb[0].mxu0 %v1066
    %v1183 = vpop.f32.mrb[0].mxu0
    %v1184 = vadd.f32 %v1057, %v1183
    %v1185 = vpop.f32.mrb[0].mxu0
    %1186 = vmatprep.mubr.f32.mxu0 0.0
    %1187 = vmatmul.mubr.f32.gmra.mrb[0].mxu0 %v1069
    %v1188 = vpop.f32.mrb[0].mxu0
    %v1189 = vadd.f32 %v1057, %v1188
    %v1190 = vpop.f32.mrb[0].mxu0
    %1191 = vmatprep.mubr.f32.mxu0 0.0
    %1192 = vmatmul.mubr.f32.gmra.mrb[0].mxu0 %v1072
    %v1193 = vpop.f32.mrb[0].mxu0
    %v1194 = vadd.f32 %v1057, %v1193
    %v1195 = vpop.f32.mrb[0].mxu0
    %1196 = vmatprep.mubr.f32.mxu0 0.0
    %1197 = vmatmul.mubr.f32.gmra.mrb[0].mxu0 %v1075
    %v1198 = vpop.f32.mrb[0].mxu0
    %v1199 = vadd.f32 %v1057, %v1198
    %v1200 = vpop.f32.mrb[0].mxu0
    %1201 = vmatprep.mubr.f32.mxu0 0.0
    %1202 = vmatmul.mubr.f32.gmra.mrb[0].mxu0 %v1078
    %v1203 = vpop.f32.mrb[0].mxu0
    %v1204 = vadd.f32 %v1057, %v1203
    %v1205 = vpop.f32.mrb[0].mxu0
    %1206 = vmatprep.mubr.f32.mxu0 0.0
    %1207 = vmatmul.mubr.f32.gmra.mrb[0].mxu0 %v1081
    %v1208 = vpop.f32.mrb[0].mxu0
    %v1209 = vadd.f32 %v1057, %v1208
    %v1210 = vpop.f32.mrb[0].mxu0
    %1211 = vmatprep.mubr.f32.mxu0 0.0
    %1212 = vmatmul.mubr.f32.gmra.mrb[0].mxu0 %v1084
    %v1213 = vpop.f32.mrb[0].mxu0
    %v1214 = vadd.f32 %v1057, %v1213
    %v1215 = vpop.f32.mrb[0].mxu0
    %1216 = vmatprep.mubr.f32.mxu0 0.0
    %1217 = vmatmul.mubr.f32.gmra.mrb[0].mxu0 %v1087
    %v1218 = vpop.f32.mrb[0].mxu0
    %v1219 = vadd.f32 %v1057, %v1218
    %v1220 = vpop.f32.mrb[0].mxu0
    %1221 = vmatprep.mubr.f32.mxu0 0.0
    %1222 = vmatmul.mubr.f32.gmra.mrb[0].mxu0 %v1090
    %v1223 = vpop.f32.mrb[0].mxu0
    %v1224 = vadd.f32 %v1057, %v1223
    %v1225 = vpop.f32.mrb[0].mxu0
    %1226 = vmatprep.mubr.f32.mxu0 0.0
    %1227 = vmatmul.mubr.f32.gmra.mrb[0].mxu0 %v1093
    %v1228 = vpop.f32.mrb[0].mxu0
    %v1229 = vadd.f32 %v1057, %v1228
    %v1230 = vpop.f32.mrb[0].mxu0
    %1231 = vmatprep.mubr.f32.mxu0 0.0
    %1232 = vmatmul.mubr.f32.gmra.mrb[0].mxu0 %v1096
    %v1233 = vpop.f32.mrb[0].mxu0
    %v1234 = vadd.f32 %v1057, %v1233
    %v1235 = vpop.f32.mrb[0].mxu0
    %1236 = vmatprep.mubr.f32.mxu0 0.0
    %1237 = vmatmul.mubr.f32.gmra.mrb[0].mxu0 %v1099
    %v1238 = vpop.f32.mrb[0].mxu0
    %v1239 = vadd.f32 %v1057, %v1238
    %v1240 = vpop.f32.mrb[0].mxu0
    %1241 = vmatprep.mubr.f32.mxu0 0.0
    %1242 = vmatmul.mubr.f32.gmra.mrb[0].mxu0 %v1102
    %v1243 = vpop.f32.mrb[0].mxu0
    %v1244 = vadd.f32 %v1057, %v1243
    %v1245 = vpop.f32.mrb[0].mxu0
    %1246 = vmatprep.mubr.f32.mxu0 0.0
    %1247 = vmatmul.mubr.f32.gmra.mrb[0].mxu0 %v1105
    %v1248 = vpop.f32.mrb[0].mxu0
    %v1249 = vadd.f32 %v1057, %v1248
    %v1250 = vpop.f32.mrb[0].mxu0
    %1251 = vdwg.mxu0
    %v1252 = vmax.f32 %v1174, 0.0
    %v1253 = vmax.f32 %v1179, 0.0
    %v1254 = vmax.f32 %v1184, 0.0
    %v1255 = vmax.f32 %v1189, 0.0
    %v1256 = vmax.f32 %v1194, 0.0
    %v1257 = vmax.f32 %v1199, 0.0
    %v1258 = vmax.f32 %v1204, 0.0
    %v1259 = vmax.f32 %v1209, 0.0
    %v1260 = vmax.f32 %v1214, 0.0
    %v1261 = vmax.f32 %v1219, 0.0
    %v1262 = vmax.f32 %v1224, 0.0
    %v1263 = vmax.f32 %v1229, 0.0
    %v1264 = vmax.f32 %v1234, 0.0
    %v1265 = vmax.f32 %v1239, 0.0
    %v1266 = vmax.f32 %v1244, 0.0
    %v1267 = vmax.f32 %v1249, 0.0
    %v1268 = vmul.f32 %v1174, 0.5
    %v1269 = vmul.f32 %v1179, 0.5
    %v1270 = vmul.f32 %v1184, 0.5
    %v1271 = vmul.f32 %v1189, 0.5
    %v1272 = vmul.f32 %v1194, 0.5
    %v1273 = vmul.f32 %v1199, 0.5
    %v1274 = vmul.f32 %v1204, 0.5
    %v1275 = vmul.f32 %v1209, 0.5
    %v1276 = vmul.f32 %v1214, 0.5
    %v1277 = vmul.f32 %v1219, 0.5
    %v1278 = vmul.f32 %v1224, 0.5
    %v1279 = vmul.f32 %v1229, 0.5
    %v1280 = vmul.f32 %v1234, 0.5
    %v1281 = vmul.f32 %v1239, 0.5
    %v1282 = vmul.f32 %v1244, 0.5
    %v1283 = vmul.f32 %v1249, 0.5
    %v1284 = vmul.f32 %v1174, 0.70710677
    %v1285 = vmul.f32 %v1179, 0.70710677
    %v1286 = vmul.f32 %v1184, 0.70710677
    %v1287 = vmul.f32 %v1189, 0.70710677
    %v1288 = vmul.f32 %v1194, 0.70710677
    %v1289 = vmul.f32 %v1199, 0.70710677
    %v1290 = vmul.f32 %v1204, 0.70710677
    %v1291 = vmul.f32 %v1209, 0.70710677
    %v1292 = vmul.f32 %v1214, 0.70710677
    %v1293 = vmul.f32 %v1219, 0.70710677
    %v1294 = vmul.f32 %v1224, 0.70710677
    %v1295 = vmul.f32 %v1229, 0.70710677
    %v1296 = vmul.f32 %v1234, 0.70710677
    %v1297 = vmul.f32 %v1239, 0.70710677
    %v1298 = vmul.f32 %v1244, 0.70710677
    %v1299 = vmul.f32 %v1249, 0.70710677
    %v1300 = verf.f32.pop %v1284
    %v1301 = verf.f32.pop %v1285
    %v1302 = verf.f32.pop %v1286
    %v1303 = verf.f32.pop %v1287
    %v1304 = verf.f32.pop %v1288
    %v1305 = verf.f32.pop %v1289
    %v1306 = verf.f32.pop %v1290
    %v1307 = verf.f32.pop %v1291
    %v1308 = verf.f32.pop %v1292
    %v1309 = verf.f32.pop %v1293
    %v1310 = verf.f32.pop %v1294
    %v1311 = verf.f32.pop %v1295
    %v1312 = verf.f32.pop %v1296
    %v1313 = verf.f32.pop %v1297
    %v1314 = verf.f32.pop %v1298
    %v1315 = verf.f32.pop %v1299
    %v1316 = vadd.f32 %v1300, 1.0
    %v1317 = vadd.f32 %v1301, 1.0
    %v1318 = vadd.f32 %v1302, 1.0
    %v1319 = vadd.f32 %v1303, 1.0
    %v1320 = vadd.f32 %v1304, 1.0
    %v1321 = vadd.f32 %v1305, 1.0
    %v1322 = vadd.f32 %v1306, 1.0
    %v1323 = vadd.f32 %v1307, 1.0
    %v1324 = vadd.f32 %v1308, 1.0
    %v1325 = vadd.f32 %v1309, 1.0
    %v1326 = vadd.f32 %v1310, 1.0
    %v1327 = vadd.f32 %v1311, 1.0
    %v1328 = vadd.f32 %v1312, 1.0
    %v1329 = vadd.f32 %v1313, 1.0
    %v1330 = vadd.f32 %v1314, 1.0
    %v1331 = vadd.f32 %v1315, 1.0
    %v1332 = vmul.f32 %v1268, %v1316
    %v1333 = vmul.f32 %v1269, %v1317
    %v1334 = vmul.f32 %v1270, %v1318
    %v1335 = vmul.f32 %v1271, %v1319
    %v1336 = vmul.f32 %v1272, %v1320
    %v1337 = vmul.f32 %v1273, %v1321
    %v1338 = vmul.f32 %v1274, %v1322
    %v1339 = vmul.f32 %v1275, %v1323
    %v1340 = vmul.f32 %v1276, %v1324
    %v1341 = vmul.f32 %v1277, %v1325
    %v1342 = vmul.f32 %v1278, %v1326
    %v1343 = vmul.f32 %v1279, %v1327
    %v1344 = vmul.f32 %v1280, %v1328
    %v1345 = vmul.f32 %v1281, %v1329
    %v1346 = vmul.f32 %v1282, %v1330
    %v1347 = vmul.f32 %v1283, %v1331
    %v1348 = vsel %vm932, %v1252, %v1332
    %v1349 = vsel %vm932, %v1253, %v1333
    %v1350 = vsel %vm932, %v1254, %v1334
    %v1351 = vsel %vm932, %v1255, %v1335
    %v1352 = vsel %vm932, %v1256, %v1336
    %v1353 = vsel %vm932, %v1257, %v1337
    %v1354 = vsel %vm932, %v1258, %v1338
    %v1355 = vsel %vm932, %v1259, %v1339
    %v1356 = vsel %vm932, %v1260, %v1340
    %v1357 = vsel %vm932, %v1261, %v1341
    %v1358 = vsel %vm932, %v1262, %v1342
    %v1359 = vsel %vm932, %v1263, %v1343
    %v1360 = vsel %vm932, %v1264, %v1344
    %v1361 = vsel %vm932, %v1265, %v1345
    %v1362 = vsel %vm932, %v1266, %v1346
    %v1363 = vsel %vm932, %v1267, %v1347
    %v1364 = vld [vmem:[#allocation2 + $0xa0] sm:$0xff]
    %v1365 = vld [vmem:[#allocation2 + $0xa8] sm:$0xff]
    %v1366 = vld [vmem:[#allocation2 + $0xb0] sm:$0xff]
    %v1367 = vld [vmem:[#allocation2 + $0xb8] sm:$0xff]
    %v1368 = vld [vmem:[#allocation2 + $0xc0] sm:$0xff]
    %v1369 = vld [vmem:[#allocation2 + $0xc8] sm:$0xff]
    %v1370 = vld [vmem:[#allocation2 + $0xd0] sm:$0xff]
    %v1371 = vld [vmem:[#allocation2 + $0xd8] sm:$0xff]
    %v1372 = vld [vmem:[%s6 + $0x2] sm:$0x1]
    %v1373 = vlaneseq
    %v1374 = vshrl.u32 %v1373, 7
    %v1375 = vsub.s32 0, %v1374
    %v1376 = vrot.slane %v1372, %v1375
    %v1378 = vsel %vm1058, %v1348, 0
    %v1381 = vsel %vm1058, %v1349, 0
    %v1384 = vsel %vm1058, %v1350, 0
    %v1387 = vsel %vm1058, %v1351, 0
    %v1390 = vsel %vm1058, %v1352, 0
    %v1393 = vsel %vm1058, %v1353, 0
    %v1396 = vsel %vm1058, %v1354, 0
    %v1399 = vsel %vm1058, %v1355, 0
    %v1402 = vsel %vm1058, %v1356, 0
    %v1405 = vsel %vm1058, %v1357, 0
    %v1408 = vsel %vm1058, %v1358, 0
    %v1411 = vsel %vm1058, %v1359, 0
    %v1414 = vsel %vm1058, %v1360, 0
    %v1417 = vsel %vm1058, %v1361, 0
    %v1420 = vsel %vm1058, %v1362, 0
    %v1423 = vsel %vm1058, %v1363, 0
    %1425 = vmatprep.subr.mxu0 0.0
    %1426 = vmatpush1.msra.mxu0 %v1364
    %1427 = vmatprep.subr.mxu0 0.0
    %1428 = vmatpush1.msra.mxu0 %v1365
    %1429 = vmatprep.subr.mxu0 0.0
    %1430 = vmatpush1.msra.mxu0 %v1366
    %1431 = vmatprep.subr.mxu0 0.0
    %1432 = vmatpush1.msra.mxu0 %v1367
    %1433 = vmatprep.subr.mxu0 0.0
    %1434 = vmatpush1.msra.mxu0 %v1368
    %1435 = vmatprep.subr.mxu0 0.0
    %1436 = vmatpush1.msra.mxu0 %v1369
    %1437 = vmatprep.subr.mxu0 0.0
    %1438 = vmatpush1.msra.mxu0 %v1370
    %1439 = vmatprep.subr.mxu0 0.0
    %1440 = vmatpush1.msra.mxu0 %v1371
    %1441 = vmatprep.subr.mxu0 0.0
    %1442 = vmatpush1.msra.mxu0 0.0
    %1443 = vmatprep.subr.mxu0 0.0
    %1444 = vmatpush1.msra.mxu0 0.0
    %1445 = vmatprep.subr.mxu0 0.0
    %1446 = vmatpush1.msra.mxu0 0.0
    %1447 = vmatprep.subr.mxu0 0.0
    %1448 = vmatpush1.msra.mxu0 0.0
    %1449 = vmatprep.subr.mxu0 0.0
    %1450 = vmatpush1.msra.mxu0 0.0
    %1451 = vmatprep.subr.mxu0 0.0
    %1452 = vmatpush1.msra.mxu0 0.0
    %1453 = vmatprep.subr.mxu0 0.0
    %1454 = vmatpush1.msra.mxu0 0.0
    %1455 = vmatprep.subr.mxu0 0.0
    %1456 = vmatpush1.msra.mxu0 0.0
    %1457 = vmatprep.subr.mxu0 0.0
    %1458 = vmatpush1.msra.mxu0 0.0
    %1459 = vmatprep.subr.mxu0 0.0
    %1460 = vmatpush1.msra.mxu0 0.0
    %1461 = vmatprep.subr.mxu0 0.0
    %1462 = vmatpush1.msra.mxu0 0.0
    %1463 = vmatprep.subr.mxu0 0.0
    %1464 = vmatpush1.msra.mxu0 0.0
    %1465 = vmatprep.subr.mxu0 0.0
    %1466 = vmatpush1.msra.mxu0 0.0
    %1467 = vmatprep.subr.mxu0 0.0
    %1468 = vmatpush1.msra.mxu0 0.0
    %1469 = vmatprep.subr.mxu0 0.0
    %1470 = vmatpush1.msra.mxu0 0.0
    %1471 = vmatprep.subr.mxu0 0.0
    %1472 = vmatpush1.msra.mxu0 0.0
    %1473 = vmatprep.subr.mxu0 0.0
    %1474 = vmatpush1.msra.mxu0 0.0
    %1475 = vmatprep.subr.mxu0 0.0
    %1476 = vmatpush1.msra.mxu0 0.0
    %1477 = vmatprep.subr.mxu0 0.0
    %1478 = vmatpush1.msra.mxu0 0.0
    %1479 = vmatprep.subr.mxu0 0.0
    %1480 = vmatpush1.msra.mxu0 0.0
    %1481 = vmatprep.subr.mxu0 0.0
    %1482 = vmatpush1.msra.mxu0 0.0
    %1483 = vmatprep.subr.mxu0 0.0
    %1484 = vmatpush1.msra.mxu0 0.0
    %1485 = vmatprep.subr.mxu0 0.0
    %1486 = vmatpush1.msra.mxu0 0.0
    %1487 = vmatprep.subr.mxu0 0.0
    %1488 = vmatpush1.msra.mxu0 0.0
    %1489 = vmatprep.mubr.f32.mxu0 0.0
    %1490 = vmatmul.mubr.f32.gmra.mrb[0].mxu0 %v1378
    %v1491 = vpop.f32.mrb[0].mxu0
    %v1492 = vadd.f32 %v1376, %v1491
    %v1493 = vpop.f32.mrb[0].mxu0
    %1494 = vmatprep.mubr.f32.mxu0 0.0
    %1495 = vmatmul.mubr.f32.gmra.mrb[0].mxu0 %v1381
    %v1496 = vpop.f32.mrb[0].mxu0
    %v1497 = vadd.f32 %v1376, %v1496
    %v1498 = vpop.f32.mrb[0].mxu0
    %1499 = vmatprep.mubr.f32.mxu0 0.0
    %1500 = vmatmul.mubr.f32.gmra.mrb[0].mxu0 %v1384
    %v1501 = vpop.f32.mrb[0].mxu0
    %v1502 = vadd.f32 %v1376, %v1501
    %v1503 = vpop.f32.mrb[0].mxu0
    %1504 = vmatprep.mubr.f32.mxu0 0.0
    %1505 = vmatmul.mubr.f32.gmra.mrb[0].mxu0 %v1387
    %v1506 = vpop.f32.mrb[0].mxu0
    %v1507 = vadd.f32 %v1376, %v1506
    %v1508 = vpop.f32.mrb[0].mxu0
    %1509 = vmatprep.mubr.f32.mxu0 0.0
    %1510 = vmatmul.mubr.f32.gmra.mrb[0].mxu0 %v1390
    %v1511 = vpop.f32.mrb[0].mxu0
    %v1512 = vadd.f32 %v1376, %v1511
    %v1513 = vpop.f32.mrb[0].mxu0
    %1514 = vmatprep.mubr.f32.mxu0 0.0
    %1515 = vmatmul.mubr.f32.gmra.mrb[0].mxu0 %v1393
    %v1516 = vpop.f32.mrb[0].mxu0
    %v1517 = vadd.f32 %v1376, %v1516
    %v1518 = vpop.f32.mrb[0].mxu0
    %1519 = vmatprep.mubr.f32.mxu0 0.0
    %1520 = vmatmul.mubr.f32.gmra.mrb[0].mxu0 %v1396
    %v1521 = vpop.f32.mrb[0].mxu0
    %v1522 = vadd.f32 %v1376, %v1521
    %v1523 = vpop.f32.mrb[0].mxu0
    %1524 = vmatprep.mubr.f32.mxu0 0.0
    %1525 = vmatmul.mubr.f32.gmra.mrb[0].mxu0 %v1399
    %v1526 = vpop.f32.mrb[0].mxu0
    %v1527 = vadd.f32 %v1376, %v1526
    %v1528 = vpop.f32.mrb[0].mxu0
    %1529 = vmatprep.mubr.f32.mxu0 0.0
    %1530 = vmatmul.mubr.f32.gmra.mrb[0].mxu0 %v1402
    %v1531 = vpop.f32.mrb[0].mxu0
    %v1532 = vadd.f32 %v1376, %v1531
    %v1533 = vpop.f32.mrb[0].mxu0
    %1534 = vmatprep.mubr.f32.mxu0 0.0
    %1535 = vmatmul.mubr.f32.gmra.mrb[0].mxu0 %v1405
    %v1536 = vpop.f32.mrb[0].mxu0
    %v1537 = vadd.f32 %v1376, %v1536
    %v1538 = vpop.f32.mrb[0].mxu0
    %1539 = vmatprep.mubr.f32.mxu0 0.0
    %1540 = vmatmul.mubr.f32.gmra.mrb[0].mxu0 %v1408
    %v1541 = vpop.f32.mrb[0].mxu0
    %v1542 = vadd.f32 %v1376, %v1541
    %v1543 = vpop.f32.mrb[0].mxu0
    %1544 = vmatprep.mubr.f32.mxu0 0.0
    %1545 = vmatmul.mubr.f32.gmra.mrb[0].mxu0 %v1411
    %v1546 = vpop.f32.mrb[0].mxu0
    %v1547 = vadd.f32 %v1376, %v1546
    %v1548 = vpop.f32.mrb[0].mxu0
    %1549 = vmatprep.mubr.f32.mxu0 0.0
    %1550 = vmatmul.mubr.f32.gmra.mrb[0].mxu0 %v1414
    %v1551 = vpop.f32.mrb[0].mxu0
    %v1552 = vadd.f32 %v1376, %v1551
    %v1553 = vpop.f32.mrb[0].mxu0
    %1554 = vmatprep.mubr.f32.mxu0 0.0
    %1555 = vmatmul.mubr.f32.gmra.mrb[0].mxu0 %v1417
    %v1556 = vpop.f32.mrb[0].mxu0
    %v1557 = vadd.f32 %v1376, %v1556
    %v1558 = vpop.f32.mrb[0].mxu0
    %1559 = vmatprep.mubr.f32.mxu0 0.0
    %1560 = vmatmul.mubr.f32.gmra.mrb[0].mxu0 %v1420
    %v1561 = vpop.f32.mrb[0].mxu0
    %v1562 = vadd.f32 %v1376, %v1561
    %v1563 = vpop.f32.mrb[0].mxu0
    %1564 = vmatprep.mubr.f32.mxu0 0.0
    %1565 = vmatmul.mubr.f32.gmra.mrb[0].mxu0 %v1423
    %v1566 = vpop.f32.mrb[0].mxu0
    %v1567 = vadd.f32 %v1376, %v1566
    %v1568 = vpop.f32.mrb[0].mxu0
    %1569 = vdwg.mxu0
    %v1570 = vsel %vm184, %v1492, -inf
    %v1571 = vrot.slane %v1570, 4
    %v1572 = vmax.f32 %v1570, %v1571
    %v1573 = vrot.slane %v1572, 2
    %v1574 = vmax.f32 %v1572, %v1573
    %v1575 = vrot.slane %v1574, 1
    %v1576 = vmax.f32 %v1574, %v1575
    %v1577 = vsel %vm184, %v1497, -inf
    %v1578 = vrot.slane %v1577, 4
    %v1579 = vmax.f32 %v1577, %v1578
    %v1580 = vrot.slane %v1579, 2
    %v1581 = vmax.f32 %v1579, %v1580
    %v1582 = vrot.slane %v1581, 1
    %v1583 = vmax.f32 %v1581, %v1582
    %v1584 = vsel %vm184, %v1502, -inf
    %v1585 = vrot.slane %v1584, 4
    %v1586 = vmax.f32 %v1584, %v1585
    %v1587 = vrot.slane %v1586, 2
    %v1588 = vmax.f32 %v1586, %v1587
    %v1589 = vrot.slane %v1588, 1
    %v1590 = vmax.f32 %v1588, %v1589
    %v1591 = vsel %vm184, %v1507, -inf
    %v1592 = vrot.slane %v1591, 4
    %v1593 = vmax.f32 %v1591, %v1592
    %v1594 = vrot.slane %v1593, 2
    %v1595 = vmax.f32 %v1593, %v1594
    %v1596 = vrot.slane %v1595, 1
    %v1597 = vmax.f32 %v1595, %v1596
    %v1598 = vsel %vm184, %v1512, -inf
    %v1599 = vrot.slane %v1598, 4
    %v1600 = vmax.f32 %v1598, %v1599
    %v1601 = vrot.slane %v1600, 2
    %v1602 = vmax.f32 %v1600, %v1601
    %v1603 = vrot.slane %v1602, 1
    %v1604 = vmax.f32 %v1602, %v1603
    %v1605 = vsel %vm184, %v1517, -inf
    %v1606 = vrot.slane %v1605, 4
    %v1607 = vmax.f32 %v1605, %v1606
    %v1608 = vrot.slane %v1607, 2
    %v1609 = vmax.f32 %v1607, %v1608
    %v1610 = vrot.slane %v1609, 1
    %v1611 = vmax.f32 %v1609, %v1610
    %v1612 = vsel %vm184, %v1522, -inf
    %v1613 = vrot.slane %v1612, 4
    %v1614 = vmax.f32 %v1612, %v1613
    %v1615 = vrot.slane %v1614, 2
    %v1616 = vmax.f32 %v1614, %v1615
    %v1617 = vrot.slane %v1616, 1
    %v1618 = vmax.f32 %v1616, %v1617
    %v1619 = vsel %vm184, %v1527, -inf
    %v1620 = vrot.slane %v1619, 4
    %v1621 = vmax.f32 %v1619, %v1620
    %v1622 = vrot.slane %v1621, 2
    %v1623 = vmax.f32 %v1621, %v1622
    %v1624 = vrot.slane %v1623, 1
    %v1625 = vmax.f32 %v1623, %v1624
    %v1626 = vsel %vm184, %v1532, -inf
    %v1627 = vrot.slane %v1626, 4
    %v1628 = vmax.f32 %v1626, %v1627
    %v1629 = vrot.slane %v1628, 2
    %v1630 = vmax.f32 %v1628, %v1629
    %v1631 = vrot.slane %v1630, 1
    %v1632 = vmax.f32 %v1630, %v1631
    %v1633 = vsel %vm184, %v1537, -inf
    %v1634 = vrot.slane %v1633, 4
    %v1635 = vmax.f32 %v1633, %v1634
    %v1636 = vrot.slane %v1635, 2
    %v1637 = vmax.f32 %v1635, %v1636
    %v1638 = vrot.slane %v1637, 1
    %v1639 = vmax.f32 %v1637, %v1638
    %v1640 = vsel %vm184, %v1542, -inf
    %v1641 = vrot.slane %v1640, 4
    %v1642 = vmax.f32 %v1640, %v1641
    %v1643 = vrot.slane %v1642, 2
    %v1644 = vmax.f32 %v1642, %v1643
    %v1645 = vrot.slane %v1644, 1
    %v1646 = vmax.f32 %v1644, %v1645
    %v1647 = vsel %vm184, %v1547, -inf
    %v1648 = vrot.slane %v1647, 4
    %v1649 = vmax.f32 %v1647, %v1648
    %v1650 = vrot.slane %v1649, 2
    %v1651 = vmax.f32 %v1649, %v1650
    %v1652 = vrot.slane %v1651, 1
    %v1653 = vmax.f32 %v1651, %v1652
    %v1654 = vsel %vm184, %v1552, -inf
    %v1655 = vrot.slane %v1654, 4
    %v1656 = vmax.f32 %v1654, %v1655
    %v1657 = vrot.slane %v1656, 2
    %v1658 = vmax.f32 %v1656, %v1657
    %v1659 = vrot.slane %v1658, 1
    %v1660 = vmax.f32 %v1658, %v1659
    %v1661 = vsel %vm184, %v1557, -inf
    %v1662 = vrot.slane %v1661, 4
    %v1663 = vmax.f32 %v1661, %v1662
    %v1664 = vrot.slane %v1663, 2
    %v1665 = vmax.f32 %v1663, %v1664
    %v1666 = vrot.slane %v1665, 1
    %v1667 = vmax.f32 %v1665, %v1666
    %v1668 = vsel %vm184, %v1562, -inf
    %v1669 = vrot.slane %v1668, 4
    %v1670 = vmax.f32 %v1668, %v1669
    %v1671 = vrot.slane %v1670, 2
    %v1672 = vmax.f32 %v1670, %v1671
    %v1673 = vrot.slane %v1672, 1
    %v1674 = vmax.f32 %v1672, %v1673
    %v1675 = vsel %vm184, %v1567, -inf
    %v1676 = vrot.slane %v1675, 4
    %v1677 = vmax.f32 %v1675, %v1676
    %v1678 = vrot.slane %v1677, 2
    %v1679 = vmax.f32 %v1677, %v1678
    %v1680 = vrot.slane %v1679, 1
    %v1681 = vmax.f32 %v1679, %v1680
    %v1682 = vsub.f32 %v1492, %v1576
    %v1683 = vsub.f32 %v1497, %v1583
    %v1684 = vsub.f32 %v1502, %v1590
    %v1685 = vsub.f32 %v1507, %v1597
    %v1686 = vsub.f32 %v1512, %v1604
    %v1687 = vsub.f32 %v1517, %v1611
    %v1688 = vsub.f32 %v1522, %v1618
    %v1689 = vsub.f32 %v1527, %v1625
    %v1690 = vsub.f32 %v1532, %v1632
    %v1691 = vsub.f32 %v1537, %v1639
    %v1692 = vsub.f32 %v1542, %v1646
    %v1693 = vsub.f32 %v1547, %v1653
    %v1694 = vsub.f32 %v1552, %v1660
    %v1695 = vsub.f32 %v1557, %v1667
    %v1696 = vsub.f32 %v1562, %v1674
    %v1697 = vsub.f32 %v1567, %v1681
    %v1698 = vmul.f32 %v1682, 1.442695
    %v1699 = vpow.pop %v1698
    %v1700 = vmul.f32 %v1683, 1.442695
    %v1701 = vpow.pop %v1700
    %v1702 = vmul.f32 %v1684, 1.442695
    %v1703 = vpow.pop %v1702
    %v1704 = vmul.f32 %v1685, 1.442695
    %v1705 = vpow.pop %v1704
    %v1706 = vmul.f32 %v1686, 1.442695
    %v1707 = vpow.pop %v1706
    %v1708 = vmul.f32 %v1687, 1.442695
    %v1709 = vpow.pop %v1708
    %v1710 = vmul.f32 %v1688, 1.442695
    %v1711 = vpow.pop %v1710
    %v1712 = vmul.f32 %v1689, 1.442695
    %v1713 = vpow.pop %v1712
    %v1714 = vmul.f32 %v1690, 1.442695
    %v1715 = vpow.pop %v1714
    %v1716 = vmul.f32 %v1691, 1.442695
    %v1717 = vpow.pop %v1716
    %v1718 = vmul.f32 %v1692, 1.442695
    %v1719 = vpow.pop %v1718
    %v1720 = vmul.f32 %v1693, 1.442695
    %v1721 = vpow.pop %v1720
    %v1722 = vmul.f32 %v1694, 1.442695
    %v1723 = vpow.pop %v1722
    %v1724 = vmul.f32 %v1695, 1.442695
    %v1725 = vpow.pop %v1724
    %v1726 = vmul.f32 %v1696, 1.442695
    %v1727 = vpow.pop %v1726
    %v1728 = vmul.f32 %v1697, 1.442695
    %v1729 = vpow.pop %v1728
    %v1730 = vsel %vm184, %v1699, 0.0
    %v1731 = vrot.slane %v1730, 4
    %v1732 = vadd.f32 %v1730, %v1731
    %v1733 = vrot.slane %v1732, 2
    %v1734 = vadd.f32 %v1732, %v1733
    %v1735 = vrot.slane %v1734, 1
    %v1736 = vadd.f32 %v1734, %v1735
    %v1737 = vsel %vm184, %v1701, 0.0
    %v1738 = vrot.slane %v1737, 4
    %v1739 = vadd.f32 %v1737, %v1738
    %v1740 = vrot.slane %v1739, 2
    %v1741 = vadd.f32 %v1739, %v1740
    %v1742 = vrot.slane %v1741, 1
    %v1743 = vadd.f32 %v1741, %v1742
    %v1744 = vsel %vm184, %v1703, 0.0
    %v1745 = vrot.slane %v1744, 4
    %v1746 = vadd.f32 %v1744, %v1745
    %v1747 = vrot.slane %v1746, 2
    %v1748 = vadd.f32 %v1746, %v1747
    %v1749 = vrot.slane %v1748, 1
    %v1750 = vadd.f32 %v1748, %v1749
    %v1751 = vsel %vm184, %v1705, 0.0
    %v1752 = vrot.slane %v1751, 4
    %v1753 = vadd.f32 %v1751, %v1752
    %v1754 = vrot.slane %v1753, 2
    %v1755 = vadd.f32 %v1753, %v1754
    %v1756 = vrot.slane %v1755, 1
    %v1757 = vadd.f32 %v1755, %v1756
    %v1758 = vsel %vm184, %v1707, 0.0
    %v1759 = vrot.slane %v1758, 4
    %v1760 = vadd.f32 %v1758, %v1759
    %v1761 = vrot.slane %v1760, 2
    %v1762 = vadd.f32 %v1760, %v1761
    %v1763 = vrot.slane %v1762, 1
    %v1764 = vadd.f32 %v1762, %v1763
    %v1765 = vsel %vm184, %v1709, 0.0
    %v1766 = vrot.slane %v1765, 4
    %v1767 = vadd.f32 %v1765, %v1766
    %v1768 = vrot.slane %v1767, 2
    %v1769 = vadd.f32 %v1767, %v1768
    %v1770 = vrot.slane %v1769, 1
    %v1771 = vadd.f32 %v1769, %v1770
    %v1772 = vsel %vm184, %v1711, 0.0
    %v1773 = vrot.slane %v1772, 4
    %v1774 = vadd.f32 %v1772, %v1773
    %v1775 = vrot.slane %v1774, 2
    %v1776 = vadd.f32 %v1774, %v1775
    %v1777 = vrot.slane %v1776, 1
    %v1778 = vadd.f32 %v1776, %v1777
    %v1779 = vsel %vm184, %v1713, 0.0
    %v1780 = vrot.slane %v1779, 4
    %v1781 = vadd.f32 %v1779, %v1780
    %v1782 = vrot.slane %v1781, 2
    %v1783 = vadd.f32 %v1781, %v1782
    %v1784 = vrot.slane %v1783, 1
    %v1785 = vadd.f32 %v1783, %v1784
    %v1786 = vsel %vm184, %v1715, 0.0
    %v1787 = vrot.slane %v1786, 4
    %v1788 = vadd.f32 %v1786, %v1787
    %v1789 = vrot.slane %v1788, 2
    %v1790 = vadd.f32 %v1788, %v1789
    %v1791 = vrot.slane %v1790, 1
    %v1792 = vadd.f32 %v1790, %v1791
    %v1793 = vsel %vm184, %v1717, 0.0
    %v1794 = vrot.slane %v1793, 4
    %v1795 = vadd.f32 %v1793, %v1794
    %v1796 = vrot.slane %v1795, 2
    %v1797 = vadd.f32 %v1795, %v1796
    %v1798 = vrot.slane %v1797, 1
    %v1799 = vadd.f32 %v1797, %v1798
    %v1800 = vsel %vm184, %v1719, 0.0
    %v1801 = vrot.slane %v1800, 4
    %v1802 = vadd.f32 %v1800, %v1801
    %v1803 = vrot.slane %v1802, 2
    %v1804 = vadd.f32 %v1802, %v1803
    %v1805 = vrot.slane %v1804, 1
    %v1806 = vadd.f32 %v1804, %v1805
    %v1807 = vsel %vm184, %v1721, 0.0
    %v1808 = vrot.slane %v1807, 4
    %v1809 = vadd.f32 %v1807, %v1808
    %v1810 = vrot.slane %v1809, 2
    %v1811 = vadd.f32 %v1809, %v1810
    %v1812 = vrot.slane %v1811, 1
    %v1813 = vadd.f32 %v1811, %v1812
    %v1814 = vsel %vm184, %v1723, 0.0
    %v1815 = vrot.slane %v1814, 4
    %v1816 = vadd.f32 %v1814, %v1815
    %v1817 = vrot.slane %v1816, 2
    %v1818 = vadd.f32 %v1816, %v1817
    %v1819 = vrot.slane %v1818, 1
    %v1820 = vadd.f32 %v1818, %v1819
    %v1821 = vsel %vm184, %v1725, 0.0
    %v1822 = vrot.slane %v1821, 4
    %v1823 = vadd.f32 %v1821, %v1822
    %v1824 = vrot.slane %v1823, 2
    %v1825 = vadd.f32 %v1823, %v1824
    %v1826 = vrot.slane %v1825, 1
    %v1827 = vadd.f32 %v1825, %v1826
    %v1828 = vsel %vm184, %v1727, 0.0
    %v1829 = vrot.slane %v1828, 4
    %v1830 = vadd.f32 %v1828, %v1829
    %v1831 = vrot.slane %v1830, 2
    %v1832 = vadd.f32 %v1830, %v1831
    %v1833 = vrot.slane %v1832, 1
    %v1834 = vadd.f32 %v1832, %v1833
    %v1835 = vsel %vm184, %v1729, 0.0
    %v1836 = vrot.slane %v1835, 4
    %v1837 = vadd.f32 %v1835, %v1836
    %v1838 = vrot.slane %v1837, 2
    %v1839 = vadd.f32 %v1837, %v1838
    %v1840 = vrot.slane %v1839, 1
    %v1841 = vadd.f32 %v1839, %v1840
    %v1842 = vrcp.pop %v1736
    %v1843 = vrcp.pop %v1743
    %v1844 = vrcp.pop %v1750
    %v1845 = vrcp.pop %v1757
    %v1846 = vrcp.pop %v1764
    %v1847 = vrcp.pop %v1771
    %v1848 = vrcp.pop %v1778
    %v1849 = vrcp.pop %v1785
    %v1850 = vrcp.pop %v1792
    %v1851 = vrcp.pop %v1799
    %v1852 = vrcp.pop %v1806
    %v1853 = vrcp.pop %v1813
    %v1854 = vrcp.pop %v1820
    %v1855 = vrcp.pop %v1827
    %v1856 = vrcp.pop %v1834
    %v1857 = vrcp.pop %v1841
    %v1858 = vmul.f32 %v1699, %v1842
    %v1859 = vmul.f32 %v1701, %v1843
    %v1860 = vmul.f32 %v1703, %v1844
    %v1861 = vmul.f32 %v1705, %v1845
    %v1862 = vmul.f32 %v1707, %v1846
    %v1863 = vmul.f32 %v1709, %v1847
    %v1864 = vmul.f32 %v1711, %v1848
    %v1865 = vmul.f32 %v1713, %v1849
    %v1866 = vmul.f32 %v1715, %v1850
    %v1867 = vmul.f32 %v1717, %v1851
    %v1868 = vmul.f32 %v1719, %v1852
    %v1869 = vmul.f32 %v1721, %v1853
    %v1870 = vmul.f32 %v1723, %v1854
    %v1871 = vmul.f32 %v1725, %v1855
    %v1872 = vmul.f32 %v1727, %v1856
    %v1873 = vmul.f32 %v1729, %v1857
    %1890 = vrot.lane.b32.xlu0 %v1492, 96
    %v1891 = vpop.permute.xlu0 %1890
    %1892 = vrot.lane.b32.xlu0 %v1497, 96
    %v1893 = vpop.permute.xlu0 %1892
    %1894 = vrot.lane.b32.xlu0 %v1502, 96
    %v1895 = vpop.permute.xlu0 %1894
    %1896 = vrot.lane.b32.xlu0 %v1507, 96
    %v1897 = vpop.permute.xlu0 %1896
    %1898 = vrot.lane.b32.xlu0 %v1512, 96
    %v1899 = vpop.permute.xlu0 %1898
    %1900 = vrot.lane.b32.xlu0 %v1517, 96
    %v1901 = vpop.permute.xlu0 %1900
    %1902 = vrot.lane.b32.xlu0 %v1522, 96
    %v1903 = vpop.permute.xlu0 %1902
    %1904 = vrot.lane.b32.xlu0 %v1527, 96
    %v1905 = vpop.permute.xlu0 %1904
    %1906 = vrot.lane.b32.xlu0 %v1532, 96
    %v1907 = vpop.permute.xlu0 %1906
    %1908 = vrot.lane.b32.xlu0 %v1537, 96
    %v1909 = vpop.permute.xlu0 %1908
    %1910 = vrot.lane.b32.xlu0 %v1542, 96
    %v1911 = vpop.permute.xlu0 %1910
    %1912 = vrot.lane.b32.xlu0 %v1547, 96
    %v1913 = vpop.permute.xlu0 %1912
    %1914 = vrot.lane.b32.xlu0 %v1552, 96
    %v1915 = vpop.permute.xlu0 %1914
    %1916 = vrot.lane.b32.xlu0 %v1557, 96
    %v1917 = vpop.permute.xlu0 %1916
    %1918 = vrot.lane.b32.xlu0 %v1562, 96
    %v1919 = vpop.permute.xlu0 %1918
    %1920 = vrot.lane.b32.xlu0 %v1567, 96
    %v1921 = vpop.permute.xlu0 %1920
    %v1938 = vmul.f32 %v1858, %v1891
    %v1939 = vmul.f32 %v1859, %v1893
    %v1940 = vmul.f32 %v1860, %v1895
    %v1941 = vmul.f32 %v1861, %v1897
    %v1942 = vmul.f32 %v1862, %v1899
    %v1943 = vmul.f32 %v1863, %v1901
    %v1944 = vmul.f32 %v1864, %v1903
    %v1945 = vmul.f32 %v1865, %v1905
    %v1946 = vmul.f32 %v1866, %v1907
    %v1947 = vmul.f32 %v1867, %v1909
    %v1948 = vmul.f32 %v1868, %v1911
    %v1949 = vmul.f32 %v1869, %v1913
    %v1950 = vmul.f32 %v1870, %v1915
    %v1951 = vmul.f32 %v1871, %v1917
    %v1952 = vmul.f32 %v1872, %v1919
    %v1953 = vmul.f32 %v1873, %v1921
    %v1954 = vsel %vm184, %v1938, 0.0
    %v1955 = vrot.slane %v1954, 4
    %v1956 = vadd.f32 %v1954, %v1955
    %v1957 = vrot.slane %v1956, 2
    %v1958 = vadd.f32 %v1956, %v1957
    %v1959 = vrot.slane %v1958, 1
    %v1960 = vadd.f32 %v1958, %v1959
    %v1961 = vsel %vm184, %v1939, 0.0
    %v1962 = vrot.slane %v1961, 4
    %v1963 = vadd.f32 %v1961, %v1962
    %v1964 = vrot.slane %v1963, 2
    %v1965 = vadd.f32 %v1963, %v1964
    %v1966 = vrot.slane %v1965, 1
    %v1967 = vadd.f32 %v1965, %v1966
    %v1968 = vsel %vm184, %v1940, 0.0
    %v1969 = vrot.slane %v1968, 4
    %v1970 = vadd.f32 %v1968, %v1969
    %v1971 = vrot.slane %v1970, 2
    %v1972 = vadd.f32 %v1970, %v1971
    %v1973 = vrot.slane %v1972, 1
    %v1974 = vadd.f32 %v1972, %v1973
    %v1975 = vsel %vm184, %v1941, 0.0
    %v1976 = vrot.slane %v1975, 4
    %v1977 = vadd.f32 %v1975, %v1976
    %v1978 = vrot.slane %v1977, 2
    %v1979 = vadd.f32 %v1977, %v1978
    %v1980 = vrot.slane %v1979, 1
    %v1981 = vadd.f32 %v1979, %v1980
    %v1982 = vsel %vm184, %v1942, 0.0
    %v1983 = vrot.slane %v1982, 4
    %v1984 = vadd.f32 %v1982, %v1983
    %v1985 = vrot.slane %v1984, 2
    %v1986 = vadd.f32 %v1984, %v1985
    %v1987 = vrot.slane %v1986, 1
    %v1988 = vadd.f32 %v1986, %v1987
    %v1989 = vsel %vm184, %v1943, 0.0
    %v1990 = vrot.slane %v1989, 4
    %v1991 = vadd.f32 %v1989, %v1990
    %v1992 = vrot.slane %v1991, 2
    %v1993 = vadd.f32 %v1991, %v1992
    %v1994 = vrot.slane %v1993, 1
    %v1995 = vadd.f32 %v1993, %v1994
    %v1996 = vsel %vm184, %v1944, 0.0
    %v1997 = vrot.slane %v1996, 4
    %v1998 = vadd.f32 %v1996, %v1997
    %v1999 = vrot.slane %v1998, 2
    %v2000 = vadd.f32 %v1998, %v1999
    %v2001 = vrot.slane %v2000, 1
    %v2002 = vadd.f32 %v2000, %v2001
    %v2003 = vsel %vm184, %v1945, 0.0
    %v2004 = vrot.slane %v2003, 4
    %v2005 = vadd.f32 %v2003, %v2004
    %v2006 = vrot.slane %v2005, 2
    %v2007 = vadd.f32 %v2005, %v2006
    %v2008 = vrot.slane %v2007, 1
    %v2009 = vadd.f32 %v2007, %v2008
    %v2010 = vsel %vm184, %v1946, 0.0
    %v2011 = vrot.slane %v2010, 4
    %v2012 = vadd.f32 %v2010, %v2011
    %v2013 = vrot.slane %v2012, 2
    %v2014 = vadd.f32 %v2012, %v2013
    %v2015 = vrot.slane %v2014, 1
    %v2016 = vadd.f32 %v2014, %v2015
    %v2017 = vsel %vm184, %v1947, 0.0
    %v2018 = vrot.slane %v2017, 4
    %v2019 = vadd.f32 %v2017, %v2018
    %v2020 = vrot.slane %v2019, 2
    %v2021 = vadd.f32 %v2019, %v2020
    %v2022 = vrot.slane %v2021, 1
    %v2023 = vadd.f32 %v2021, %v2022
    %v2024 = vsel %vm184, %v1948, 0.0
    %v2025 = vrot.slane %v2024, 4
    %v2026 = vadd.f32 %v2024, %v2025
    %v2027 = vrot.slane %v2026, 2
    %v2028 = vadd.f32 %v2026, %v2027
    %v2029 = vrot.slane %v2028, 1
    %v2030 = vadd.f32 %v2028, %v2029
    %v2031 = vsel %vm184, %v1949, 0.0
    %v2032 = vrot.slane %v2031, 4
    %v2033 = vadd.f32 %v2031, %v2032
    %v2034 = vrot.slane %v2033, 2
    %v2035 = vadd.f32 %v2033, %v2034
    %v2036 = vrot.slane %v2035, 1
    %v2037 = vadd.f32 %v2035, %v2036
    %v2038 = vsel %vm184, %v1950, 0.0
    %v2039 = vrot.slane %v2038, 4
    %v2040 = vadd.f32 %v2038, %v2039
    %v2041 = vrot.slane %v2040, 2
    %v2042 = vadd.f32 %v2040, %v2041
    %v2043 = vrot.slane %v2042, 1
    %v2044 = vadd.f32 %v2042, %v2043
    %v2045 = vsel %vm184, %v1951, 0.0
    %v2046 = vrot.slane %v2045, 4
    %v2047 = vadd.f32 %v2045, %v2046
    %v2048 = vrot.slane %v2047, 2
    %v2049 = vadd.f32 %v2047, %v2048
    %v2050 = vrot.slane %v2049, 1
    %v2051 = vadd.f32 %v2049, %v2050
    %v2052 = vsel %vm184, %v1952, 0.0
    %v2053 = vrot.slane %v2052, 4
    %v2054 = vadd.f32 %v2052, %v2053
    %v2055 = vrot.slane %v2054, 2
    %v2056 = vadd.f32 %v2054, %v2055
    %v2057 = vrot.slane %v2056, 1
    %v2058 = vadd.f32 %v2056, %v2057
    %v2059 = vsel %vm184, %v1953, 0.0
    %v2060 = vrot.slane %v2059, 4
    %v2061 = vadd.f32 %v2059, %v2060
    %v2062 = vrot.slane %v2061, 2
    %v2063 = vadd.f32 %v2061, %v2062
    %v2064 = vrot.slane %v2063, 1
    %v2065 = vadd.f32 %v2063, %v2064
    %v2066 = vld [vmem:[#allocation2 + $0xe0] sm:$0xff]
    %v2067 = vld [vmem:[#allocation2 + $0xe8] sm:$0xff]
    %v2068 = vld [vmem:[#allocation2 + $0xf0] sm:$0xff]
    %v2069 = vld [vmem:[#allocation2 + $0xf8] sm:$0xff]
    %vm2086 = vcmask 1041409
    %v2087 = vsel %vm2086, %v1967, %v1960
    %vm2088 = vcmask 1042434
    %v2089 = vsel %vm2088, %v1974, %v2087
    %vm2090 = vcmask 1043459
    %v2091 = vsel %vm2090, %v1981, %v2089
    %vm2092 = vcmask 1044484
    %v2093 = vsel %vm2092, %v1988, %v2091
    %vm2094 = vcmask 1045509
    %v2095 = vsel %vm2094, %v1995, %v2093
    %vm2096 = vcmask 1046534
    %v2097 = vsel %vm2096, %v2002, %v2095
    %vm2098 = vcmask 1047559
    %v2099 = vsel %vm2098, %v2009, %v2097
    %v2100 = vsel %vm2086, %v2023, %v2016
    %v2101 = vsel %vm2088, %v2030, %v2100
    %v2102 = vsel %vm2090, %v2037, %v2101
    %v2103 = vsel %vm2092, %v2044, %v2102
    %v2104 = vsel %vm2094, %v2051, %v2103
    %v2105 = vsel %vm2096, %v2058, %v2104
    %v2106 = vsel %vm2098, %v2065, %v2105
    %v2107 = vsel %vm184, %v2099, 0
    %v2109 = vsel %vm184, %v2106, 0
    %2111 = vmatprep.subr.mxu0 0.0
    %2112 = vmatpush1.msra.mxu0 %v2066
    %2113 = vmatprep.subr.mxu0 0.0
    %2114 = vmatpush1.msra.mxu0 %v2067
    %2115 = vmatprep.subr.mxu0 0.0
    %2116 = vmatpush1.msra.mxu0 %v2068
    %2117 = vmatprep.subr.mxu0 0.0
    %2118 = vmatpush1.msra.mxu0 %v2069
    %2119 = vmatprep.subr.mxu0 0.0
    %2120 = vmatpush1.msra.mxu0 0.0
    %2121 = vmatprep.subr.mxu0 0.0
    %2122 = vmatpush1.msra.mxu0 0.0
    %2123 = vmatprep.subr.mxu0 0.0
    %2124 = vmatpush1.msra.mxu0 0.0
    %2125 = vmatprep.subr.mxu0 0.0
    %2126 = vmatpush1.msra.mxu0 0.0
    %2127 = vmatprep.subr.mxu0 0.0
    %2128 = vmatpush1.msra.mxu0 0.0
    %2129 = vmatprep.subr.mxu0 0.0
    %2130 = vmatpush1.msra.mxu0 0.0
    %2131 = vmatprep.subr.mxu0 0.0
    %2132 = vmatpush1.msra.mxu0 0.0
    %2133 = vmatprep.subr.mxu0 0.0
    %2134 = vmatpush1.msra.mxu0 0.0
    %2135 = vmatprep.subr.mxu0 0.0
    %2136 = vmatpush1.msra.mxu0 0.0
    %2137 = vmatprep.subr.mxu0 0.0
    %2138 = vmatpush1.msra.mxu0 0.0
    %2139 = vmatprep.subr.mxu0 0.0
    %2140 = vmatpush1.msra.mxu0 0.0
    %2141 = vmatprep.subr.mxu0 0.0
    %2142 = vmatpush1.msra.mxu0 0.0
    %2143 = vmatprep.subr.mxu0 0.0
    %2144 = vmatpush1.msra.mxu0 0.0
    %2145 = vmatprep.subr.mxu0 0.0
    %2146 = vmatpush1.msra.mxu0 0.0
    %2147 = vmatprep.subr.mxu0 0.0
    %2148 = vmatpush1.msra.mxu0 0.0
    %2149 = vmatprep.subr.mxu0 0.0
    %2150 = vmatpush1.msra.mxu0 0.0
    %2151 = vmatprep.subr.mxu0 0.0
    %2152 = vmatpush1.msra.mxu0 0.0
    %2153 = vmatprep.subr.mxu0 0.0
    %2154 = vmatpush1.msra.mxu0 0.0
    %2155 = vmatprep.subr.mxu0 0.0
    %2156 = vmatpush1.msra.mxu0 0.0
    %2157 = vmatprep.subr.mxu0 0.0
    %2158 = vmatpush1.msra.mxu0 0.0
    %2159 = vmatprep.subr.mxu0 0.0
    %2160 = vmatpush1.msra.mxu0 0.0
    %2161 = vmatprep.subr.mxu0 0.0
    %2162 = vmatpush1.msra.mxu0 0.0
    %2163 = vmatprep.subr.mxu0 0.0
    %2164 = vmatpush1.msra.mxu0 0.0
    %2165 = vmatprep.subr.mxu0 0.0
    %2166 = vmatpush1.msra.mxu0 0.0
    %2167 = vmatprep.subr.mxu0 0.0
    %2168 = vmatpush1.msra.mxu0 0.0
    %2169 = vmatprep.subr.mxu0 0.0
    %2170 = vmatpush1.msra.mxu0 0.0
    %2171 = vmatprep.subr.mxu0 0.0
    %2172 = vmatpush1.msra.mxu0 0.0
    %2173 = vmatprep.subr.mxu0 0.0
    %2174 = vmatpush1.msra.mxu0 0.0
    %2175 = vmatprep.mubr.f32.mxu0 0.0
    %2176 = vmatmul.mubr.f32.gmra.mrb[0].mxu0 %v2107
    %v2177 = vpop.f32.mrb[0].mxu0
    %v2178 = vadd.f32 0.0, %v2177
    %v2179 = vpop.f32.mrb[0].mxu0
    %2180 = vmatprep.mubr.f32.mxu0 0.0
    %2181 = vmatmul.mubr.f32.gmra.mrb[0].mxu0 %v2109
    %v2182 = vpop.f32.mrb[0].mxu0
    %v2183 = vadd.f32 0.0, %v2182
    %v2184 = vpop.f32.mrb[0].mxu0
    %2185 = vdwg.mxu0
    %v2186 = vadd.f32 %v43, %v2178
    %v2187 = vadd.f32 %v44, %v2183
    %v2188 = vld [vmem:[%s6 + $0x3] sm:$0x1]
    %v2189 = vlaneseq
    %v2190 = vshrl.u32 %v2189, 7
    %v2191 = vsub.s32 0, %v2190
    %v2192 = vrot.slane %v2188, %v2191
    %v2193 = vmul.f32 %v2186, %v2192
    %v2194 = vmul.f32 %v2187, %v2192
    %v2195 = vld [vmem:[%s6 + $0x4] sm:$0x1]
    %v2196 = vlaneseq
    %v2197 = vshrl.u32 %v2196, 7
    %v2198 = vsub.s32 0, %v2197
    %v2199 = vrot.slane %v2195, %v2198
    %v2200 = vadd.f32 %v2193, %v2199
    %v2201 = vadd.f32 %v2194, %v2199
    %v2202 = vld [vmem:[#allocation2 + $0x100] sm:$0xff]
    %v2203 = vld [vmem:[#allocation2 + $0x108] sm:$0xff]
    %v2204 = vld [vmem:[#allocation2 + $0x110] sm:$0xff]
    %v2205 = vld [vmem:[#allocation2 + $0x118] sm:$0xff]
    %v2206 = vld [vmem:[%s6 + $0x5] sm:$0x1]
    %v2207 = vlaneseq
    %v2208 = vshrl.u32 %v2207, 7
    %v2209 = vsub.s32 0, %v2208
    %v2210 = vrot.slane %v2206, %v2209
    %v2212 = vsel %vm184, %v2200, 0
    %v2215 = vsel %vm184, %v2201, 0
    %2217 = vmatprep.subr.mxu0 0.0
    %2218 = vmatpush1.msra.mxu0 %v2202
    %2219 = vmatprep.subr.mxu0 0.0
    %2220 = vmatpush1.msra.mxu0 %v2203
    %2221 = vmatprep.subr.mxu0 0.0
    %2222 = vmatpush1.msra.mxu0 %v2204
    %2223 = vmatprep.subr.mxu0 0.0
    %2224 = vmatpush1.msra.mxu0 %v2205
    %2225 = vmatprep.subr.mxu0 0.0
    %2226 = vmatpush1.msra.mxu0 0.0
    %2227 = vmatprep.subr.mxu0 0.0
    %2228 = vmatpush1.msra.mxu0 0.0
    %2229 = vmatprep.subr.mxu0 0.0
    %2230 = vmatpush1.msra.mxu0 0.0
    %2231 = vmatprep.subr.mxu0 0.0
    %2232 = vmatpush1.msra.mxu0 0.0
    %2233 = vmatprep.subr.mxu0 0.0
    %2234 = vmatpush1.msra.mxu0 0.0
    %2235 = vmatprep.subr.mxu0 0.0
    %2236 = vmatpush1.msra.mxu0 0.0
    %2237 = vmatprep.subr.mxu0 0.0
    %2238 = vmatpush1.msra.mxu0 0.0
    %2239 = vmatprep.subr.mxu0 0.0
    %2240 = vmatpush1.msra.mxu0 0.0
    %2241 = vmatprep.subr.mxu0 0.0
    %2242 = vmatpush1.msra.mxu0 0.0
    %2243 = vmatprep.subr.mxu0 0.0
    %2244 = vmatpush1.msra.mxu0 0.0
    %2245 = vmatprep.subr.mxu0 0.0
    %2246 = vmatpush1.msra.mxu0 0.0
    %2247 = vmatprep.subr.mxu0 0.0
    %2248 = vmatpush1.msra.mxu0 0.0
    %2249 = vmatprep.subr.mxu0 0.0
    %2250 = vmatpush1.msra.mxu0 0.0
    %2251 = vmatprep.subr.mxu0 0.0
    %2252 = vmatpush1.msra.mxu0 0.0
    %2253 = vmatprep.subr.mxu0 0.0
    %2254 = vmatpush1.msra.mxu0 0.0
    %2255 = vmatprep.subr.mxu0 0.0
    %2256 = vmatpush1.msra.mxu0 0.0
    %2257 = vmatprep.subr.mxu0 0.0
    %2258 = vmatpush1.msra.mxu0 0.0
    %2259 = vmatprep.subr.mxu0 0.0
    %2260 = vmatpush1.msra.mxu0 0.0
    %2261 = vmatprep.subr.mxu0 0.0
    %2262 = vmatpush1.msra.mxu0 0.0
    %2263 = vmatprep.subr.mxu0 0.0
    %2264 = vmatpush1.msra.mxu0 0.0
    %2265 = vmatprep.subr.mxu0 0.0
    %2266 = vmatpush1.msra.mxu0 0.0
    %2267 = vmatprep.subr.mxu0 0.0
    %2268 = vmatpush1.msra.mxu0 0.0
    %2269 = vmatprep.subr.mxu0 0.0
    %2270 = vmatpush1.msra.mxu0 0.0
    %2271 = vmatprep.subr.mxu0 0.0
    %2272 = vmatpush1.msra.mxu0 0.0
    %2273 = vmatprep.subr.mxu0 0.0
    %2274 = vmatpush1.msra.mxu0 0.0
    %2275 = vmatprep.subr.mxu0 0.0
    %2276 = vmatpush1.msra.mxu0 0.0
    %2277 = vmatprep.subr.mxu0 0.0
    %2278 = vmatpush1.msra.mxu0 0.0
    %2279 = vmatprep.subr.mxu0 0.0
    %2280 = vmatpush1.msra.mxu0 0.0
    %2281 = vmatprep.mubr.f32.mxu0 0.0
    %2282 = vmatmul.mubr.f32.gmra.mrb[0].mxu0 %v2212
    %v2283 = vpop.f32.mrb[0].mxu0
    %v2284 = vadd.f32 %v2210, %v2283
    %v2285 = vpop.f32.mrb[0].mxu0
    %2286 = vmatprep.mubr.f32.mxu0 0.0
    %2287 = vmatmul.mubr.f32.gmra.mrb[0].mxu0 %v2215
    %v2288 = vpop.f32.mrb[0].mxu0
    %v2289 = vadd.f32 %v2210, %v2288
    %v2290 = vpop.f32.mrb[0].mxu0
    %2291 = vdwg.mxu0
    %v2292 = vmax.f32 %v2284, 0.0
    %v2293 = vmax.f32 %v2289, 0.0
    %v2294 = vld [vmem:[#allocation2 + $0x120] sm:$0xff]
    %v2295 = vld [vmem:[#allocation2 + $0x128] sm:$0xff]
    %v2296 = vld [vmem:[#allocation2 + $0x130] sm:$0xff]
    %v2297 = vld [vmem:[#allocation2 + $0x138] sm:$0xff]
    %v2298 = vld [vmem:[#allocation2 + $0x140] sm:$0xff]
    %v2299 = vld [vmem:[#allocation2 + $0x148] sm:$0xff]
    %v2300 = vld [vmem:[#allocation2 + $0x150] sm:$0xff]
    %v2301 = vld [vmem:[#allocation2 + $0x158] sm:$0xff]
    %v2302 = vld [vmem:[#allocation2 + $0x160] sm:$0xff]
    %v2303 = vld [vmem:[#allocation2 + $0x168] sm:$0xff]
    %v2304 = vld [vmem:[#allocation2 + $0x170] sm:$0xff]
    %v2305 = vld [vmem:[#allocation2 + $0x178] sm:$0xff]
    %v2306 = vld [vmem:[#allocation2 + $0x180] sm:$0xff]
    %v2307 = vld [vmem:[#allocation2 + $0x188] sm:$0xff]
    %v2308 = vld [vmem:[#allocation2 + $0x190] sm:$0xff]
    %v2309 = vld [vmem:[#allocation2 + $0x198] sm:$0xff]
    %v2310 = vld [vmem:[%s6 + $0x6] sm:$0x1]
    %v2311 = vlaneseq
    %v2312 = vshrl.u32 %v2311, 7
    %v2313 = vsub.s32 0, %v2312
    %v2314 = vrot.slane %v2310, %v2313
    %2315 = vmatprep.subr.mxu0 0.0
    %2316 = vmatpush1.msra.mxu0 %v2294
    %2317 = vmatprep.subr.mxu0 0.0
    %2318 = vmatpush1.msra.mxu0 %v2295
    %2319 = vmatprep.subr.mxu0 0.0
    %2320 = vmatpush1.msra.mxu0 %v2296
    %2321 = vmatprep.subr.mxu0 0.0
    %2322 = vmatpush1.msra.mxu0 %v2297
    %2323 = vmatprep.subr.mxu0 0.0
    %2324 = vmatpush1.msra.mxu0 %v2298
    %2325 = vmatprep.subr.mxu0 0.0
    %2326 = vmatpush1.msra.mxu0 %v2299
    %2327 = vmatprep.subr.mxu0 0.0
    %2328 = vmatpush1.msra.mxu0 %v2300
    %2329 = vmatprep.subr.mxu0 0.0
    %2330 = vmatpush1.msra.mxu0 %v2301
    %2331 = vmatprep.subr.mxu0 0.0
    %2332 = vmatpush1.msra.mxu0 %v2302
    %2333 = vmatprep.subr.mxu0 0.0
    %2334 = vmatpush1.msra.mxu0 %v2303
    %2335 = vmatprep.subr.mxu0 0.0
    %2336 = vmatpush1.msra.mxu0 %v2304
    %2337 = vmatprep.subr.mxu0 0.0
    %2338 = vmatpush1.msra.mxu0 %v2305
    %2339 = vmatprep.subr.mxu0 0.0
    %2340 = vmatpush1.msra.mxu0 %v2306
    %2341 = vmatprep.subr.mxu0 0.0
    %2342 = vmatpush1.msra.mxu0 %v2307
    %2343 = vmatprep.subr.mxu0 0.0
    %2344 = vmatpush1.msra.mxu0 %v2308
    %2345 = vmatprep.subr.mxu0 0.0
    %2346 = vmatpush1.msra.mxu0 %v2309
    %2347 = vmatprep.subr.mxu0 0.0
    %2348 = vmatpush1.msra.mxu0 0.0
    %2349 = vmatprep.subr.mxu0 0.0
    %2350 = vmatpush1.msra.mxu0 0.0
    %2351 = vmatprep.subr.mxu0 0.0
    %2352 = vmatpush1.msra.mxu0 0.0
    %2353 = vmatprep.subr.mxu0 0.0
    %2354 = vmatpush1.msra.mxu0 0.0
    %2355 = vmatprep.subr.mxu0 0.0
    %2356 = vmatpush1.msra.mxu0 0.0
    %2357 = vmatprep.subr.mxu0 0.0
    %2358 = vmatpush1.msra.mxu0 0.0
    %2359 = vmatprep.subr.mxu0 0.0
    %2360 = vmatpush1.msra.mxu0 0.0
    %2361 = vmatprep.subr.mxu0 0.0
    %2362 = vmatpush1.msra.mxu0 0.0
    %2363 = vmatprep.subr.mxu0 0.0
    %2364 = vmatpush1.msra.mxu0 0.0
    %2365 = vmatprep.subr.mxu0 0.0
    %2366 = vmatpush1.msra.mxu0 0.0
    %2367 = vmatprep.subr.mxu0 0.0
    %2368 = vmatpush1.msra.mxu0 0.0
    %2369 = vmatprep.subr.mxu0 0.0
    %2370 = vmatpush1.msra.mxu0 0.0
    %2371 = vmatprep.subr.mxu0 0.0
    %2372 = vmatpush1.msra.mxu0 0.0
    %2373 = vmatprep.subr.mxu0 0.0
    %2374 = vmatpush1.msra.mxu0 0.0
    %2375 = vmatprep.subr.mxu0 0.0
    %2376 = vmatpush1.msra.mxu0 0.0
    %2377 = vmatprep.subr.mxu0 0.0
    %2378 = vmatpush1.msra.mxu0 0.0
    %2379 = vmatprep.mubr.f32.mxu0 0.0
    %2380 = vmatmul.mubr.f32.gmra.mrb[0].mxu0 %v2292
    %v2381 = vpop.f32.mrb[0].mxu0
    %v2382 = vadd.f32 %v2314, %v2381
    %v2383 = vpop.f32.mrb[0].mxu0
    %2384 = vmatprep.mubr.f32.mxu0 0.0
    %2385 = vmatmul.mubr.f32.gmra.mrb[0].mxu0 %v2293
    %v2386 = vpop.f32.mrb[0].mxu0
    %v2387 = vadd.f32 %v2314, %v2386
    %v2388 = vpop.f32.mrb[0].mxu0
    %2389 = vdwg.mxu0
    %v2390 = vadd.f32 %v2200, %v2382
    %v2391 = vadd.f32 %v2201, %v2387
    %v2392 = vld [vmem:[%s6 + $0x7] sm:$0x1]
    %v2393 = vlaneseq
    %v2394 = vshrl.u32 %v2393, 7
    %v2395 = vsub.s32 0, %v2394
    %v2396 = vrot.slane %v2392, %v2395
    %v2397 = vmul.f32 %v2390, %v2396
    %v2398 = vmul.f32 %v2391, %v2396
    %v2399 = vld [vmem:[%s6 + $0x8] sm:$0x1]
    %v2400 = vlaneseq
    %v2401 = vshrl.u32 %v2400, 7
    %v2402 = vsub.s32 0, %v2401
    %v2403 = vrot.slane %v2399, %v2402
    %v2404 = vadd.f32 %v2397, %v2403
    %v2405 = vadd.f32 %v2398, %v2403
    %v2406 = vld [vmem:[#allocation2 + $0x1a0] sm:$0xff]
    %v2407 = vld [vmem:[#allocation2 + $0x1a8] sm:$0xff]
    %v2408 = vld [vmem:[#allocation2 + $0x1b0] sm:$0xff]
    %v2409 = vld [vmem:[#allocation2 + $0x1b8] sm:$0xff]
    %v2410 = vld [vmem:[%s6 + $0x9] sm:$0x1]
    %v2411 = vlaneseq
    %v2412 = vshrl.u32 %v2411, 7
    %v2413 = vsub.s32 0, %v2412
    %v2414 = vrot.slane %v2410, %v2413
    %v2416 = vsel %vm184, %v2404, 0
    %v2419 = vsel %vm184, %v2405, 0
    %2421 = vmatprep.subr.mxu0 0.0
    %2422 = vmatpush1.msra.mxu0 %v2406
    %2423 = vmatprep.subr.mxu0 0.0
    %2424 = vmatpush1.msra.mxu0 %v2407
    %2425 = vmatprep.subr.mxu0 0.0
    %2426 = vmatpush1.msra.mxu0 %v2408
    %2427 = vmatprep.subr.mxu0 0.0
    %2428 = vmatpush1.msra.mxu0 %v2409
    %2429 = vmatprep.subr.mxu0 0.0
    %2430 = vmatpush1.msra.mxu0 0.0
    %2431 = vmatprep.subr.mxu0 0.0
    %2432 = vmatpush1.msra.mxu0 0.0
    %2433 = vmatprep.subr.mxu0 0.0
    %2434 = vmatpush1.msra.mxu0 0.0
    %2435 = vmatprep.subr.mxu0 0.0
    %2436 = vmatpush1.msra.mxu0 0.0
    %2437 = vmatprep.subr.mxu0 0.0
    %2438 = vmatpush1.msra.mxu0 0.0
    %2439 = vmatprep.subr.mxu0 0.0
    %2440 = vmatpush1.msra.mxu0 0.0
    %2441 = vmatprep.subr.mxu0 0.0
    %2442 = vmatpush1.msra.mxu0 0.0
    %2443 = vmatprep.subr.mxu0 0.0
    %2444 = vmatpush1.msra.mxu0 0.0
    %2445 = vmatprep.subr.mxu0 0.0
    %2446 = vmatpush1.msra.mxu0 0.0
    %2447 = vmatprep.subr.mxu0 0.0
    %2448 = vmatpush1.msra.mxu0 0.0
    %2449 = vmatprep.subr.mxu0 0.0
    %2450 = vmatpush1.msra.mxu0 0.0
    %2451 = vmatprep.subr.mxu0 0.0
    %2452 = vmatpush1.msra.mxu0 0.0
    %2453 = vmatprep.subr.mxu0 0.0
    %2454 = vmatpush1.msra.mxu0 0.0
    %2455 = vmatprep.subr.mxu0 0.0
    %2456 = vmatpush1.msra.mxu0 0.0
    %2457 = vmatprep.subr.mxu0 0.0
    %2458 = vmatpush1.msra.mxu0 0.0
    %2459 = vmatprep.subr.mxu0 0.0
    %2460 = vmatpush1.msra.mxu0 0.0
    %2461 = vmatprep.subr.mxu0 0.0
    %2462 = vmatpush1.msra.mxu0 0.0
    %2463 = vmatprep.subr.mxu0 0.0
    %2464 = vmatpush1.msra.mxu0 0.0
    %2465 = vmatprep.subr.mxu0 0.0
    %2466 = vmatpush1.msra.mxu0 0.0
    %2467 = vmatprep.subr.mxu0 0.0
    %2468 = vmatpush1.msra.mxu0 0.0
    %2469 = vmatprep.subr.mxu0 0.0
    %2470 = vmatpush1.msra.mxu0 0.0
    %2471 = vmatprep.subr.mxu0 0.0
    %2472 = vmatpush1.msra.mxu0 0.0
    %2473 = vmatprep.subr.mxu0 0.0
    %2474 = vmatpush1.msra.mxu0 0.0
    %2475 = vmatprep.subr.mxu0 0.0
    %2476 = vmatpush1.msra.mxu0 0.0
    %2477 = vmatprep.subr.mxu0 0.0
    %2478 = vmatpush1.msra.mxu0 0.0
    %2479 = vmatprep.subr.mxu0 0.0
    %2480 = vmatpush1.msra.mxu0 0.0
    %2481 = vmatprep.subr.mxu0 0.0
    %2482 = vmatpush1.msra.mxu0 0.0
    %2483 = vmatprep.subr.mxu0 0.0
    %2484 = vmatpush1.msra.mxu0 0.0
    %2485 = vmatprep.mubr.f32.mxu0 0.0
    %2486 = vmatmul.mubr.f32.gmra.mrb[0].mxu0 %v2416
    %v2487 = vpop.f32.mrb[0].mxu0
    %v2488 = vadd.f32 %v2414, %v2487
    %v2489 = vpop.f32.mrb[0].mxu0
    %2490 = vmatprep.mubr.f32.mxu0 0.0
    %2491 = vmatmul.mubr.f32.gmra.mrb[0].mxu0 %v2419
    %v2492 = vpop.f32.mrb[0].mxu0
    %v2493 = vadd.f32 %v2414, %v2492
    %v2494 = vpop.f32.mrb[0].mxu0
    %2495 = vdwg.mxu0
    %v2498 = vcombine.high %v2488, %v2488
    %v2500 = vunpack.c.l.s4 1966171168
    %v2501 = vunpack.c.0.s8 %v2500
    %v2502 = vlaneseq
    %v2503 = vshrl.u32 %v2502, 7
    %v2504 = vsub.s32 %v2501, %v2503
    %v2505 = vrot.slane %v2488, %v2504
    %v2507 = vunpack.c.l.s4 1966171168
    %v2508 = vunpack.c.0.s8 %v2507
    %v2509 = vlaneseq
    %v2510 = vshrl.u32 %v2509, 7
    %v2511 = vsub.s32 %v2508, %v2510
    %v2512 = vrot.slane %v2498, %v2511
    %v2513 = vcombine.high %v2505, %v2505
    %v2514 = vcombine.high %v2512, %v2512
    %v2516 = vunpack.c.l.s4 1966171168
    %v2517 = vunpack.c.0.s8 %v2516
    %v2518 = vlaneseq
    %v2519 = vshrl.u32 %v2518, 7
    %v2520 = vsub.s32 %v2517, %v2519
    %v2521 = vrot.slane %v2505, %v2520
    %v2523 = vunpack.c.l.s4 1966171168
    %v2524 = vunpack.c.0.s8 %v2523
    %v2525 = vlaneseq
    %v2526 = vshrl.u32 %v2525, 7
    %v2527 = vsub.s32 %v2524, %v2526
    %v2528 = vrot.slane %v2512, %v2527
    %v2530 = vunpack.c.l.s4 1966171168
    %v2531 = vunpack.c.0.s8 %v2530
    %v2532 = vlaneseq
    %v2533 = vshrl.u32 %v2532, 7
    %v2534 = vsub.s32 %v2531, %v2533
    %v2535 = vrot.slane %v2513, %v2534
    %v2537 = vunpack.c.l.s4 1966171168
    %v2538 = vunpack.c.0.s8 %v2537
    %v2539 = vlaneseq
    %v2540 = vshrl.u32 %v2539, 7
    %v2541 = vsub.s32 %v2538, %v2540
    %v2542 = vrot.slane %v2514, %v2541
    %v2543 = vcombine.high %v2521, %v2521
    %v2544 = vcombine.high %v2528, %v2528
    %v2545 = vcombine.high %v2535, %v2535
    %v2546 = vcombine.high %v2542, %v2542
    %v2547 = vcombine.high %v2493, %v2493
    %v2549 = vunpack.c.l.s4 1966171168
    %v2550 = vunpack.c.0.s8 %v2549
    %v2551 = vlaneseq
    %v2552 = vshrl.u32 %v2551, 7
    %v2553 = vsub.s32 %v2550, %v2552
    %v2554 = vrot.slane %v2493, %v2553
    %v2556 = vunpack.c.l.s4 1966171168
    %v2557 = vunpack.c.0.s8 %v2556
    %v2558 = vlaneseq
    %v2559 = vshrl.u32 %v2558, 7
    %v2560 = vsub.s32 %v2557, %v2559
    %v2561 = vrot.slane %v2547, %v2560
    %v2562 = vcombine.high %v2554, %v2554
    %v2563 = vcombine.high %v2561, %v2561
    %v2565 = vunpack.c.l.s4 1966171168
    %v2566 = vunpack.c.0.s8 %v2565
    %v2567 = vlaneseq
    %v2568 = vshrl.u32 %v2567, 7
    %v2569 = vsub.s32 %v2566, %v2568
    %v2570 = vrot.slane %v2554, %v2569
    %v2572 = vunpack.c.l.s4 1966171168
    %v2573 = vunpack.c.0.s8 %v2572
    %v2574 = vlaneseq
    %v2575 = vshrl.u32 %v2574, 7
    %v2576 = vsub.s32 %v2573, %v2575
    %v2577 = vrot.slane %v2561, %v2576
    %v2579 = vunpack.c.l.s4 1966171168
    %v2580 = vunpack.c.0.s8 %v2579
    %v2581 = vlaneseq
    %v2582 = vshrl.u32 %v2581, 7
    %v2583 = vsub.s32 %v2580, %v2582
    %v2584 = vrot.slane %v2562, %v2583
    %v2586 = vunpack.c.l.s4 1966171168
    %v2587 = vunpack.c.0.s8 %v2586
    %v2588 = vlaneseq
    %v2589 = vshrl.u32 %v2588, 7
    %v2590 = vsub.s32 %v2587, %v2589
    %v2591 = vrot.slane %v2563, %v2590
    %v2592 = vcombine.high %v2570, %v2570
    %v2593 = vcombine.high %v2577, %v2577
    %v2594 = vcombine.high %v2584, %v2584
    %v2595 = vcombine.high %v2591, %v2591
    %v2596 = vlaneseq
    %v2597 = vshrl.u32 %v2596, 7
    %v2598 = vsub.s32 0, %v2597
    %v2599 = vrot.slane %v2521, %v2598
    %v2600 = vlaneseq
    %v2601 = vshrl.u32 %v2600, 7
    %v2602 = vsub.s32 0, %v2601
    %v2603 = vrot.slane %v2535, %v2602
    %v2604 = vlaneseq
    %v2605 = vshrl.u32 %v2604, 7
    %v2606 = vsub.s32 0, %v2605
    %v2607 = vrot.slane %v2543, %v2606
    %v2608 = vlaneseq
    %v2609 = vshrl.u32 %v2608, 7
    %v2610 = vsub.s32 0, %v2609
    %v2611 = vrot.slane %v2545, %v2610
    %v2612 = vlaneseq
    %v2613 = vshrl.u32 %v2612, 7
    %v2614 = vsub.s32 0, %v2613
    %v2615 = vrot.slane %v2528, %v2614
    %v2616 = vlaneseq
    %v2617 = vshrl.u32 %v2616, 7
    %v2618 = vsub.s32 0, %v2617
    %v2619 = vrot.slane %v2542, %v2618
    %v2620 = vlaneseq
    %v2621 = vshrl.u32 %v2620, 7
    %v2622 = vsub.s32 0, %v2621
    %v2623 = vrot.slane %v2544, %v2622
    %v2624 = vlaneseq
    %v2625 = vshrl.u32 %v2624, 7
    %v2626 = vsub.s32 0, %v2625
    %v2627 = vrot.slane %v2546, %v2626
    %v2628 = vlaneseq
    %v2629 = vshrl.u32 %v2628, 7
    %v2630 = vsub.s32 0, %v2629
    %v2631 = vrot.slane %v2570, %v2630
    %v2632 = vlaneseq
    %v2633 = vshrl.u32 %v2632, 7
    %v2634 = vsub.s32 0, %v2633
    %v2635 = vrot.slane %v2584, %v2634
    %v2636 = vlaneseq
    %v2637 = vshrl.u32 %v2636, 7
    %v2638 = vsub.s32 0, %v2637
    %v2639 = vrot.slane %v2592, %v2638
    %v2640 = vlaneseq
    %v2641 = vshrl.u32 %v2640, 7
    %v2642 = vsub.s32 0, %v2641
    %v2643 = vrot.slane %v2594, %v2642
    %v2644 = vlaneseq
    %v2645 = vshrl.u32 %v2644, 7
    %v2646 = vsub.s32 0, %v2645
    %v2647 = vrot.slane %v2577, %v2646
    %v2648 = vlaneseq
    %v2649 = vshrl.u32 %v2648, 7
    %v2650 = vsub.s32 0, %v2649
    %v2651 = vrot.slane %v2591, %v2650
    %v2652 = vlaneseq
    %v2653 = vshrl.u32 %v2652, 7
    %v2654 = vsub.s32 0, %v2653
    %v2655 = vrot.slane %v2593, %v2654
    %v2656 = vlaneseq
    %v2657 = vshrl.u32 %v2656, 7
    %v2658 = vsub.s32 0, %v2657
    %v2659 = vrot.slane %v2595, %v2658
    %v2676 = vld [vmem:[#allocation2 + $0x1c0] sm:$0xff]
    %v2677 = vld [vmem:[#allocation2 + $0x1c8] sm:$0xff]
    %v2678 = vld [vmem:[#allocation2 + $0x1d0] sm:$0xff]
    %v2679 = vld [vmem:[#allocation2 + $0x1d8] sm:$0xff]
    %v2680 = vld [vmem:[#allocation2 + $0x1e0] sm:$0xff]
    %v2681 = vld [vmem:[#allocation2 + $0x1e8] sm:$0xff]
    %v2682 = vld [vmem:[#allocation2 + $0x1f0] sm:$0xff]
    %v2683 = vld [vmem:[#allocation2 + $0x1f8] sm:$0xff]
    %2684 = vmatprep.subr.mxu0 0.0
    %2685 = vmatpush1.msra.mxu0 %v2680
    %2686 = vmatprep.subr.mxu0 0.0
    %2687 = vmatpush1.msra.mxu0 %v2681
    %2688 = vmatprep.subr.mxu0 0.0
    %2689 = vmatpush1.msra.mxu0 %v2682
    %2690 = vmatprep.subr.mxu0 0.0
    %2691 = vmatpush1.msra.mxu0 %v2683
    %2692 = vmatprep.subr.mxu0 0.0
    %2693 = vmatpush1.msra.mxu0 0.0
    %2694 = vmatprep.subr.mxu0 0.0
    %2695 = vmatpush1.msra.mxu0 0.0
    %2696 = vmatprep.subr.mxu0 0.0
    %2697 = vmatpush1.msra.mxu0 0.0
    %2698 = vmatprep.subr.mxu0 0.0
    %2699 = vmatpush1.msra.mxu0 0.0
    %2700 = vmatprep.subr.mxu0 0.0
    %2701 = vmatpush1.msra.mxu0 0.0
    %2702 = vmatprep.subr.mxu0 0.0
    %2703 = vmatpush1.msra.mxu0 0.0
    %2704 = vmatprep.subr.mxu0 0.0
    %2705 = vmatpush1.msra.mxu0 0.0
    %2706 = vmatprep.subr.mxu0 0.0
    %2707 = vmatpush1.msra.mxu0 0.0
    %2708 = vmatprep.subr.mxu0 0.0
    %2709 = vmatpush1.msra.mxu0 0.0
    %2710 = vmatprep.subr.mxu0 0.0
    %2711 = vmatpush1.msra.mxu0 0.0
    %2712 = vmatprep.subr.mxu0 0.0
    %2713 = vmatpush1.msra.mxu0 0.0
    %2714 = vmatprep.subr.mxu0 0.0
    %2715 = vmatpush1.msra.mxu0 0.0
    %2716 = vmatprep.subr.mxu0 0.0
    %2717 = vmatpush1.msra.mxu0 0.0
    %2718 = vmatprep.subr.mxu0 0.0
    %2719 = vmatpush1.msra.mxu0 0.0
    %2720 = vmatprep.subr.mxu0 0.0
    %2721 = vmatpush1.msra.mxu0 0.0
    %2722 = vmatprep.subr.mxu0 0.0
    %2723 = vmatpush1.msra.mxu0 0.0
    %2724 = vmatprep.subr.mxu0 0.0
    %2725 = vmatpush1.msra.mxu0 0.0
    %2726 = vmatprep.subr.mxu0 0.0
    %2727 = vmatpush1.msra.mxu0 0.0
    %2728 = vmatprep.subr.mxu0 0.0
    %2729 = vmatpush1.msra.mxu0 0.0
    %2730 = vmatprep.subr.mxu0 0.0
    %2731 = vmatpush1.msra.mxu0 0.0
    %2732 = vmatprep.subr.mxu0 0.0
    %2733 = vmatpush1.msra.mxu0 0.0
    %2734 = vmatprep.subr.mxu0 0.0
    %2735 = vmatpush1.msra.mxu0 0.0
    %2736 = vmatprep.subr.mxu0 0.0
    %2737 = vmatpush1.msra.mxu0 0.0
    %2738 = vmatprep.subr.mxu0 0.0
    %2739 = vmatpush1.msra.mxu0 0.0
    %2740 = vmatprep.subr.mxu0 0.0
    %2741 = vmatpush1.msra.mxu0 0.0
    %2742 = vmatprep.subr.mxu0 0.0
    %2743 = vmatpush1.msra.mxu0 0.0
    %2744 = vmatprep.subr.mxu0 0.0
    %2745 = vmatpush1.msra.mxu0 0.0
    %2746 = vmatprep.subr.mxu0 0.0
    %2747 = vmatpush1.msra.mxu0 0.0
    %2748 = vmatprep.mubr.f32.mxu0 0.0
    %2749 = vmatmul.mubr.f32.gmra.mrb[0].mxu0 %v2416
    %v2750 = vpop.f32.mrb[0].mxu0
    %v2751 = vadd.f32 0.0, %v2750
    %v2752 = vpop.f32.mrb[0].mxu0
    %2753 = vmatprep.mubr.f32.mxu0 0.0
    %2754 = vmatmul.mubr.f32.gmra.mrb[0].mxu0 %v2419
    %v2755 = vpop.f32.mrb[0].mxu0
    %v2756 = vadd.f32 0.0, %v2755
    %v2757 = vpop.f32.mrb[0].mxu0
    %2758 = vdwg.mxu0
    %2759 = vmatprep.subr.mxu0 0.0
    %2760 = vmatpush1.msra.mxu0 %v2751
    %2761 = vmatprep.subr.mxu0 0.0
    %2762 = vmatpush1.msra.mxu0 %v2756
    %2763 = vmatprep.subr.mxu0 0.0
    %2764 = vmatpush1.msra.mxu0 0.0
    %2765 = vmatprep.subr.mxu0 0.0
    %2766 = vmatpush1.msra.mxu0 0.0
    %2767 = vmatprep.subr.mxu0 0.0
    %2768 = vmatpush1.msra.mxu0 0.0
    %2769 = vmatprep.subr.mxu0 0.0
    %2770 = vmatpush1.msra.mxu0 0.0
    %2771 = vmatprep.subr.mxu0 0.0
    %2772 = vmatpush1.msra.mxu0 0.0
    %2773 = vmatprep.subr.mxu0 0.0
    %2774 = vmatpush1.msra.mxu0 0.0
    %2775 = vmatprep.subr.mxu0 0.0
    %2776 = vmatpush1.msra.mxu0 0.0
    %2777 = vmatprep.subr.mxu0 0.0
    %2778 = vmatpush1.msra.mxu0 0.0
    %2779 = vmatprep.subr.mxu0 0.0
    %2780 = vmatpush1.msra.mxu0 0.0
    %2781 = vmatprep.subr.mxu0 0.0
    %2782 = vmatpush1.msra.mxu0 0.0
    %2783 = vmatprep.subr.mxu0 0.0
    %2784 = vmatpush1.msra.mxu0 0.0
    %2785 = vmatprep.subr.mxu0 0.0
    %2786 = vmatpush1.msra.mxu0 0.0
    %2787 = vmatprep.subr.mxu0 0.0
    %2788 = vmatpush1.msra.mxu0 0.0
    %2789 = vmatprep.subr.mxu0 0.0
    %2790 = vmatpush1.msra.mxu0 0.0
    %2791 = vmatprep.subr.mxu0 0.0
    %2792 = vmatpush1.msra.mxu0 0.0
    %2793 = vmatprep.subr.mxu0 0.0
    %2794 = vmatpush1.msra.mxu0 0.0
    %2795 = vmatprep.subr.mxu0 0.0
    %2796 = vmatpush1.msra.mxu0 0.0
    %2797 = vmatprep.subr.mxu0 0.0
    %2798 = vmatpush1.msra.mxu0 0.0
    %2799 = vmatprep.subr.mxu0 0.0
    %2800 = vmatpush1.msra.mxu0 0.0
    %2801 = vmatprep.subr.mxu0 0.0
    %2802 = vmatpush1.msra.mxu0 0.0
    %2803 = vmatprep.subr.mxu0 0.0
    %2804 = vmatpush1.msra.mxu0 0.0
    %2805 = vmatprep.subr.mxu0 0.0
    %2806 = vmatpush1.msra.mxu0 0.0
    %2807 = vmatprep.subr.mxu0 0.0
    %2808 = vmatpush1.msra.mxu0 0.0
    %2809 = vmatprep.subr.mxu0 0.0
    %2810 = vmatpush1.msra.mxu0 0.0
    %2811 = vmatprep.subr.mxu0 0.0
    %2812 = vmatpush1.msra.mxu0 0.0
    %2813 = vmatprep.subr.mxu0 0.0
    %2814 = vmatpush1.msra.mxu0 0.0
    %2815 = vmatprep.subr.mxu0 0.0
    %2816 = vmatpush1.msra.mxu0 0.0
    %2817 = vmatprep.subr.mxu0 0.0
    %2818 = vmatpush1.msra.mxu0 0.0
    %2819 = vmatprep.subr.mxu0 0.0
    %2820 = vmatpush1.msra.mxu0 0.0
    %2821 = vmatprep.subr.mxu0 0.0
    %2822 = vmatpush1.msra.mxu0 0.0
    %2823 = vmatprep.mubr.f32.mxu0 0.0
    %2824 = vmatmul.mubr.f32.gmra.mrb[0].mxu0 %v531
    %v2825 = vpop.f32.mrb[0].mxu0
    %v2826 = vadd.f32 0.0, %v2825
    %v2827 = vpop.f32.mrb[0].mxu0
    %2828 = vmatprep.mubr.f32.mxu0 0.0
    %2829 = vmatmul.mubr.f32.gmra.mrb[0].mxu0 %v534
    %v2830 = vpop.f32.mrb[0].mxu0
    %v2831 = vadd.f32 0.0, %v2830
    %v2832 = vpop.f32.mrb[0].mxu0
    %2833 = vmatprep.mubr.f32.mxu0 0.0
    %2834 = vmatmul.mubr.f32.gmra.mrb[0].mxu0 %v537
    %v2835 = vpop.f32.mrb[0].mxu0
    %v2836 = vadd.f32 0.0, %v2835
    %v2837 = vpop.f32.mrb[0].mxu0
    %2838 = vmatprep.mubr.f32.mxu0 0.0
    %2839 = vmatmul.mubr.f32.gmra.mrb[0].mxu0 %v540
    %v2840 = vpop.f32.mrb[0].mxu0
    %v2841 = vadd.f32 0.0, %v2840
    %v2842 = vpop.f32.mrb[0].mxu0
    %2843 = vmatprep.mubr.f32.mxu0 0.0
    %2844 = vmatmul.mubr.f32.gmra.mrb[0].mxu0 %v543
    %v2845 = vpop.f32.mrb[0].mxu0
    %v2846 = vadd.f32 0.0, %v2845
    %v2847 = vpop.f32.mrb[0].mxu0
    %2848 = vmatprep.mubr.f32.mxu0 0.0
    %2849 = vmatmul.mubr.f32.gmra.mrb[0].mxu0 %v546
    %v2850 = vpop.f32.mrb[0].mxu0
    %v2851 = vadd.f32 0.0, %v2850
    %v2852 = vpop.f32.mrb[0].mxu0
    %2853 = vmatprep.mubr.f32.mxu0 0.0
    %2854 = vmatmul.mubr.f32.gmra.mrb[0].mxu0 %v549
    %v2855 = vpop.f32.mrb[0].mxu0
    %v2856 = vadd.f32 0.0, %v2855
    %v2857 = vpop.f32.mrb[0].mxu0
    %2858 = vmatprep.mubr.f32.mxu0 0.0
    %2859 = vmatmul.mubr.f32.gmra.mrb[0].mxu0 %v552
    %v2860 = vpop.f32.mrb[0].mxu0
    %v2861 = vadd.f32 0.0, %v2860
    %v2862 = vpop.f32.mrb[0].mxu0
    %2863 = vmatprep.mubr.f32.mxu0 0.0
    %2864 = vmatmul.mubr.f32.gmra.mrb[0].mxu0 %v555
    %v2865 = vpop.f32.mrb[0].mxu0
    %v2866 = vadd.f32 0.0, %v2865
    %v2867 = vpop.f32.mrb[0].mxu0
    %2868 = vmatprep.mubr.f32.mxu0 0.0
    %2869 = vmatmul.mubr.f32.gmra.mrb[0].mxu0 %v558
    %v2870 = vpop.f32.mrb[0].mxu0
    %v2871 = vadd.f32 0.0, %v2870
    %v2872 = vpop.f32.mrb[0].mxu0
    %2873 = vmatprep.mubr.f32.mxu0 0.0
    %2874 = vmatmul.mubr.f32.gmra.mrb[0].mxu0 %v561
    %v2875 = vpop.f32.mrb[0].mxu0
    %v2876 = vadd.f32 0.0, %v2875
    %v2877 = vpop.f32.mrb[0].mxu0
    %2878 = vmatprep.mubr.f32.mxu0 0.0
    %2879 = vmatmul.mubr.f32.gmra.mrb[0].mxu0 %v564
    %v2880 = vpop.f32.mrb[0].mxu0
    %v2881 = vadd.f32 0.0, %v2880
    %v2882 = vpop.f32.mrb[0].mxu0
    %2883 = vmatprep.mubr.f32.mxu0 0.0
    %2884 = vmatmul.mubr.f32.gmra.mrb[0].mxu0 %v567
    %v2885 = vpop.f32.mrb[0].mxu0
    %v2886 = vadd.f32 0.0, %v2885
    %v2887 = vpop.f32.mrb[0].mxu0
    %2888 = vmatprep.mubr.f32.mxu0 0.0
    %2889 = vmatmul.mubr.f32.gmra.mrb[0].mxu0 %v570
    %v2890 = vpop.f32.mrb[0].mxu0
    %v2891 = vadd.f32 0.0, %v2890
    %v2892 = vpop.f32.mrb[0].mxu0
    %2893 = vmatprep.mubr.f32.mxu0 0.0
    %2894 = vmatmul.mubr.f32.gmra.mrb[0].mxu0 %v573
    %v2895 = vpop.f32.mrb[0].mxu0
    %v2896 = vadd.f32 0.0, %v2895
    %v2897 = vpop.f32.mrb[0].mxu0
    %2898 = vmatprep.mubr.f32.mxu0 0.0
    %2899 = vmatmul.mubr.f32.gmra.mrb[0].mxu0 %v576
    %v2900 = vpop.f32.mrb[0].mxu0
    %v2901 = vadd.f32 0.0, %v2900
    %v2902 = vpop.f32.mrb[0].mxu0
    %2903 = vdwg.mxu0
    %2904 = vmatprep.subr.mxu0 0.0
    %2905 = vmatpush1.msra.mxu0 %v2676
    %2906 = vmatprep.subr.mxu0 0.0
    %2907 = vmatpush1.msra.mxu0 %v2677
    %2908 = vmatprep.subr.mxu0 0.0
    %2909 = vmatpush1.msra.mxu0 %v2678
    %2910 = vmatprep.subr.mxu0 0.0
    %2911 = vmatpush1.msra.mxu0 %v2679
    %2912 = vmatprep.subr.mxu0 0.0
    %2913 = vmatpush1.msra.mxu0 0.0
    %2914 = vmatprep.subr.mxu0 0.0
    %2915 = vmatpush1.msra.mxu0 0.0
    %2916 = vmatprep.subr.mxu0 0.0
    %2917 = vmatpush1.msra.mxu0 0.0
    %2918 = vmatprep.subr.mxu0 0.0
    %2919 = vmatpush1.msra.mxu0 0.0
    %2920 = vmatprep.subr.mxu0 0.0
    %2921 = vmatpush1.msra.mxu0 0.0
    %2922 = vmatprep.subr.mxu0 0.0
    %2923 = vmatpush1.msra.mxu0 0.0
    %2924 = vmatprep.subr.mxu0 0.0
    %2925 = vmatpush1.msra.mxu0 0.0
    %2926 = vmatprep.subr.mxu0 0.0
    %2927 = vmatpush1.msra.mxu0 0.0
    %2928 = vmatprep.subr.mxu0 0.0
    %2929 = vmatpush1.msra.mxu0 0.0
    %2930 = vmatprep.subr.mxu0 0.0
    %2931 = vmatpush1.msra.mxu0 0.0
    %2932 = vmatprep.subr.mxu0 0.0
    %2933 = vmatpush1.msra.mxu0 0.0
    %2934 = vmatprep.subr.mxu0 0.0
    %2935 = vmatpush1.msra.mxu0 0.0
    %2936 = vmatprep.subr.mxu0 0.0
    %2937 = vmatpush1.msra.mxu0 0.0
    %2938 = vmatprep.subr.mxu0 0.0
    %2939 = vmatpush1.msra.mxu0 0.0
    %2940 = vmatprep.subr.mxu0 0.0
    %2941 = vmatpush1.msra.mxu0 0.0
    %2942 = vmatprep.subr.mxu0 0.0
    %2943 = vmatpush1.msra.mxu0 0.0
    %2944 = vmatprep.subr.mxu0 0.0
    %2945 = vmatpush1.msra.mxu0 0.0
    %2946 = vmatprep.subr.mxu0 0.0
    %2947 = vmatpush1.msra.mxu0 0.0
    %2948 = vmatprep.subr.mxu0 0.0
    %2949 = vmatpush1.msra.mxu0 0.0
    %2950 = vmatprep.subr.mxu0 0.0
    %2951 = vmatpush1.msra.mxu0 0.0
    %2952 = vmatprep.subr.mxu0 0.0
    %2953 = vmatpush1.msra.mxu0 0.0
    %2954 = vmatprep.subr.mxu0 0.0
    %2955 = vmatpush1.msra.mxu0 0.0
    %2956 = vmatprep.subr.mxu0 0.0
    %2957 = vmatpush1.msra.mxu0 0.0
    %2958 = vmatprep.subr.mxu0 0.0
    %2959 = vmatpush1.msra.mxu0 0.0
    %2960 = vmatprep.subr.mxu0 0.0
    %2961 = vmatpush1.msra.mxu0 0.0
    %2962 = vmatprep.subr.mxu0 0.0
    %2963 = vmatpush1.msra.mxu0 0.0
    %2964 = vmatprep.subr.mxu0 0.0
    %2965 = vmatpush1.msra.mxu0 0.0
    %2966 = vmatprep.subr.mxu0 0.0
    %2967 = vmatpush1.msra.mxu0 0.0
    %2968 = vmatprep.mubr.f32.mxu0 0.0
    %2969 = vmatmul.mubr.f32.gmra.mrb[0].mxu0 %v724
    %v2970 = vpop.f32.mrb[0].mxu0
    %v2971 = vadd.f32 %v2826, %v2970
    %v2972 = vpop.f32.mrb[0].mxu0
    %2973 = vmatprep.mubr.f32.mxu0 0.0
    %2974 = vmatmul.mubr.f32.gmra.mrb[0].mxu0 %v727
    %v2975 = vpop.f32.mrb[0].mxu0
    %v2976 = vadd.f32 %v2831, %v2975
    %v2977 = vpop.f32.mrb[0].mxu0
    %2978 = vmatprep.mubr.f32.mxu0 0.0
    %2979 = vmatmul.mubr.f32.gmra.mrb[0].mxu0 %v730
    %v2980 = vpop.f32.mrb[0].mxu0
    %v2981 = vadd.f32 %v2836, %v2980
    %v2982 = vpop.f32.mrb[0].mxu0
    %2983 = vmatprep.mubr.f32.mxu0 0.0
    %2984 = vmatmul.mubr.f32.gmra.mrb[0].mxu0 %v733
    %v2985 = vpop.f32.mrb[0].mxu0
    %v2986 = vadd.f32 %v2841, %v2985
    %v2987 = vpop.f32.mrb[0].mxu0
    %2988 = vmatprep.mubr.f32.mxu0 0.0
    %2989 = vmatmul.mubr.f32.gmra.mrb[0].mxu0 %v736
    %v2990 = vpop.f32.mrb[0].mxu0
    %v2991 = vadd.f32 %v2846, %v2990
    %v2992 = vpop.f32.mrb[0].mxu0
    %2993 = vmatprep.mubr.f32.mxu0 0.0
    %2994 = vmatmul.mubr.f32.gmra.mrb[0].mxu0 %v739
    %v2995 = vpop.f32.mrb[0].mxu0
    %v2996 = vadd.f32 %v2851, %v2995
    %v2997 = vpop.f32.mrb[0].mxu0
    %2998 = vmatprep.mubr.f32.mxu0 0.0
    %2999 = vmatmul.mubr.f32.gmra.mrb[0].mxu0 %v742
    %v3000 = vpop.f32.mrb[0].mxu0
    %v3001 = vadd.f32 %v2856, %v3000
    %v3002 = vpop.f32.mrb[0].mxu0
    %3003 = vmatprep.mubr.f32.mxu0 0.0
    %3004 = vmatmul.mubr.f32.gmra.mrb[0].mxu0 %v745
    %v3005 = vpop.f32.mrb[0].mxu0
    %v3006 = vadd.f32 %v2861, %v3005
    %v3007 = vpop.f32.mrb[0].mxu0
    %3008 = vmatprep.mubr.f32.mxu0 0.0
    %3009 = vmatmul.mubr.f32.gmra.mrb[0].mxu0 %v748
    %v3010 = vpop.f32.mrb[0].mxu0
    %v3011 = vadd.f32 %v2866, %v3010
    %v3012 = vpop.f32.mrb[0].mxu0
    %3013 = vmatprep.mubr.f32.mxu0 0.0
    %3014 = vmatmul.mubr.f32.gmra.mrb[0].mxu0 %v751
    %v3015 = vpop.f32.mrb[0].mxu0
    %v3016 = vadd.f32 %v2871, %v3015
    %v3017 = vpop.f32.mrb[0].mxu0
    %3018 = vmatprep.mubr.f32.mxu0 0.0
    %3019 = vmatmul.mubr.f32.gmra.mrb[0].mxu0 %v754
    %v3020 = vpop.f32.mrb[0].mxu0
    %v3021 = vadd.f32 %v2876, %v3020
    %v3022 = vpop.f32.mrb[0].mxu0
    %3023 = vmatprep.mubr.f32.mxu0 0.0
    %3024 = vmatmul.mubr.f32.gmra.mrb[0].mxu0 %v757
    %v3025 = vpop.f32.mrb[0].mxu0
    %v3026 = vadd.f32 %v2881, %v3025
    %v3027 = vpop.f32.mrb[0].mxu0
    %3028 = vmatprep.mubr.f32.mxu0 0.0
    %3029 = vmatmul.mubr.f32.gmra.mrb[0].mxu0 %v760
    %v3030 = vpop.f32.mrb[0].mxu0
    %v3031 = vadd.f32 %v2886, %v3030
    %v3032 = vpop.f32.mrb[0].mxu0
    %3033 = vmatprep.mubr.f32.mxu0 0.0
    %3034 = vmatmul.mubr.f32.gmra.mrb[0].mxu0 %v763
    %v3035 = vpop.f32.mrb[0].mxu0
    %v3036 = vadd.f32 %v2891, %v3035
    %v3037 = vpop.f32.mrb[0].mxu0
    %3038 = vmatprep.mubr.f32.mxu0 0.0
    %3039 = vmatmul.mubr.f32.gmra.mrb[0].mxu0 %v766
    %v3040 = vpop.f32.mrb[0].mxu0
    %v3041 = vadd.f32 %v2896, %v3040
    %v3042 = vpop.f32.mrb[0].mxu0
    %3043 = vmatprep.mubr.f32.mxu0 0.0
    %3044 = vmatmul.mubr.f32.gmra.mrb[0].mxu0 %v769
    %v3045 = vpop.f32.mrb[0].mxu0
    %v3046 = vadd.f32 %v2901, %v3045
    %v3047 = vpop.f32.mrb[0].mxu0
    %3048 = vdwg.mxu0
    %v3049 = vadd.f32 %v2971, %v2599
    %v3050 = vadd.f32 %v2976, %v2603
    %v3051 = vadd.f32 %v2981, %v2607
    %v3052 = vadd.f32 %v2986, %v2611
    %v3053 = vadd.f32 %v2991, %v2615
    %v3054 = vadd.f32 %v2996, %v2619
    %v3055 = vadd.f32 %v3001, %v2623
    %v3056 = vadd.f32 %v3006, %v2627
    %v3057 = vadd.f32 %v3011, %v2631
    %v3058 = vadd.f32 %v3016, %v2635
    %v3059 = vadd.f32 %v3021, %v2639
    %v3060 = vadd.f32 %v3026, %v2643
    %v3061 = vadd.f32 %v3031, %v2647
    %v3062 = vadd.f32 %v3036, %v2651
    %v3063 = vadd.f32 %v3041, %v2655
    %v3064 = vadd.f32 %v3046, %v2659
    %v3065 = vmul.f32 %v3049, 0.5
    %v3066 = vmul.f32 %v3050, 0.5
    %v3067 = vmul.f32 %v3051, 0.5
    %v3068 = vmul.f32 %v3052, 0.5
    %v3069 = vmul.f32 %v3053, 0.5
    %v3070 = vmul.f32 %v3054, 0.5
    %v3071 = vmul.f32 %v3055, 0.5
    %v3072 = vmul.f32 %v3056, 0.5
    %v3073 = vmul.f32 %v3057, 0.5
    %v3074 = vmul.f32 %v3058, 0.5
    %v3075 = vmul.f32 %v3059, 0.5
    %v3076 = vmul.f32 %v3060, 0.5
    %v3077 = vmul.f32 %v3061, 0.5
    %v3078 = vmul.f32 %v3062, 0.5
    %v3079 = vmul.f32 %v3063, 0.5
    %v3080 = vmul.f32 %v3064, 0.5
    %v3081 = vmul.f32 %v3049, 0.70710677
    %v3082 = vmul.f32 %v3050, 0.70710677
    %v3083 = vmul.f32 %v3051, 0.70710677
    %v3084 = vmul.f32 %v3052, 0.70710677
    %v3085 = vmul.f32 %v3053, 0.70710677
    %v3086 = vmul.f32 %v3054, 0.70710677
    %v3087 = vmul.f32 %v3055, 0.70710677
    %v3088 = vmul.f32 %v3056, 0.70710677
    %v3089 = vmul.f32 %v3057, 0.70710677
    %v3090 = vmul.f32 %v3058, 0.70710677
    %v3091 = vmul.f32 %v3059, 0.70710677
    %v3092 = vmul.f32 %v3060, 0.70710677
    %v3093 = vmul.f32 %v3061, 0.70710677
    %v3094 = vmul.f32 %v3062, 0.70710677
    %v3095 = vmul.f32 %v3063, 0.70710677
    %v3096 = vmul.f32 %v3064, 0.70710677
    %v3097 = verf.f32.pop %v3081
    %v3098 = verf.f32.pop %v3082
    %v3099 = verf.f32.pop %v3083
    %v3100 = verf.f32.pop %v3084
    %v3101 = verf.f32.pop %v3085
    %v3102 = verf.f32.pop %v3086
    %v3103 = verf.f32.pop %v3087
    %v3104 = verf.f32.pop %v3088
    %v3105 = verf.f32.pop %v3089
    %v3106 = verf.f32.pop %v3090
    %v3107 = verf.f32.pop %v3091
    %v3108 = verf.f32.pop %v3092
    %v3109 = verf.f32.pop %v3093
    %v3110 = verf.f32.pop %v3094
    %v3111 = verf.f32.pop %v3095
    %v3112 = verf.f32.pop %v3096
    %v3113 = vadd.f32 %v3097, 1.0
    %v3114 = vadd.f32 %v3098, 1.0
    %v3115 = vadd.f32 %v3099, 1.0
    %v3116 = vadd.f32 %v3100, 1.0
    %v3117 = vadd.f32 %v3101, 1.0
    %v3118 = vadd.f32 %v3102, 1.0
    %v3119 = vadd.f32 %v3103, 1.0
    %v3120 = vadd.f32 %v3104, 1.0
    %v3121 = vadd.f32 %v3105, 1.0
    %v3122 = vadd.f32 %v3106, 1.0
    %v3123 = vadd.f32 %v3107, 1.0
    %v3124 = vadd.f32 %v3108, 1.0
    %v3125 = vadd.f32 %v3109, 1.0
    %v3126 = vadd.f32 %v3110, 1.0
    %v3127 = vadd.f32 %v3111, 1.0
    %v3128 = vadd.f32 %v3112, 1.0
    %v3129 = vmul.f32 %v3065, %v3113
    %v3130 = vmul.f32 %v3066, %v3114
    %v3131 = vmul.f32 %v3067, %v3115
    %v3132 = vmul.f32 %v3068, %v3116
    %v3133 = vmul.f32 %v3069, %v3117
    %v3134 = vmul.f32 %v3070, %v3118
    %v3135 = vmul.f32 %v3071, %v3119
    %v3136 = vmul.f32 %v3072, %v3120
    %v3137 = vmul.f32 %v3073, %v3121
    %v3138 = vmul.f32 %v3074, %v3122
    %v3139 = vmul.f32 %v3075, %v3123
    %v3140 = vmul.f32 %v3076, %v3124
    %v3141 = vmul.f32 %v3077, %v3125
    %v3142 = vmul.f32 %v3078, %v3126
    %v3143 = vmul.f32 %v3079, %v3127
    %v3144 = vmul.f32 %v3080, %v3128
    %v3145 = vld [vmem:[#allocation2 + $0x200] sm:$0xff]
    %v3146 = vld [vmem:[#allocation2 + $0x208] sm:$0xff]
    %v3147 = vld [vmem:[#allocation2 + $0x210] sm:$0xff]
    %v3148 = vld [vmem:[#allocation2 + $0x218] sm:$0xff]
    %v3149 = vld [vmem:[%s6 + $0xa] sm:$0x1]
    %v3150 = vlaneseq
    %v3151 = vshrl.u32 %v3150, 7
    %v3152 = vsub.s32 0, %v3151
    %v3153 = vrot.slane %v3149, %v3152
    %v3155 = vsel %vm184, %v3129, 0
    %v3158 = vsel %vm184, %v3130, 0
    %v3161 = vsel %vm184, %v3131, 0
    %v3164 = vsel %vm184, %v3132, 0
    %v3167 = vsel %vm184, %v3133, 0
    %v3170 = vsel %vm184, %v3134, 0
    %v3173 = vsel %vm184, %v3135, 0
    %v3176 = vsel %vm184, %v3136, 0
    %v3179 = vsel %vm184, %v3137, 0
    %v3182 = vsel %vm184, %v3138, 0
    %v3185 = vsel %vm184, %v3139, 0
    %v3188 = vsel %vm184, %v3140, 0
    %v3191 = vsel %vm184, %v3141, 0
    %v3194 = vsel %vm184, %v3142, 0
    %v3197 = vsel %vm184, %v3143, 0
    %v3200 = vsel %vm184, %v3144, 0
    %3202 = vmatprep.subr.mxu0 0.0
    %3203 = vmatpush1.msra.mxu0 %v3145
    %3204 = vmatprep.subr.mxu0 0.0
    %3205 = vmatpush1.msra.mxu0 %v3146
    %3206 = vmatprep.subr.mxu0 0.0
    %3207 = vmatpush1.msra.mxu0 %v3147
    %3208 = vmatprep.subr.mxu0 0.0
    %3209 = vmatpush1.msra.mxu0 %v3148
    %3210 = vmatprep.subr.mxu0 0.0
    %3211 = vmatpush1.msra.mxu0 0.0
    %3212 = vmatprep.subr.mxu0 0.0
    %3213 = vmatpush1.msra.mxu0 0.0
    %3214 = vmatprep.subr.mxu0 0.0
    %3215 = vmatpush1.msra.mxu0 0.0
    %3216 = vmatprep.subr.mxu0 0.0
    %3217 = vmatpush1.msra.mxu0 0.0
    %3218 = vmatprep.subr.mxu0 0.0
    %3219 = vmatpush1.msra.mxu0 0.0
    %3220 = vmatprep.subr.mxu0 0.0
    %3221 = vmatpush1.msra.mxu0 0.0
    %3222 = vmatprep.subr.mxu0 0.0
    %3223 = vmatpush1.msra.mxu0 0.0
    %3224 = vmatprep.subr.mxu0 0.0
    %3225 = vmatpush1.msra.mxu0 0.0
    %3226 = vmatprep.subr.mxu0 0.0
    %3227 = vmatpush1.msra.mxu0 0.0
    %3228 = vmatprep.subr.mxu0 0.0
    %3229 = vmatpush1.msra.mxu0 0.0
    %3230 = vmatprep.subr.mxu0 0.0
    %3231 = vmatpush1.msra.mxu0 0.0
    %3232 = vmatprep.subr.mxu0 0.0
    %3233 = vmatpush1.msra.mxu0 0.0
    %3234 = vmatprep.subr.mxu0 0.0
    %3235 = vmatpush1.msra.mxu0 0.0
    %3236 = vmatprep.subr.mxu0 0.0
    %3237 = vmatpush1.msra.mxu0 0.0
    %3238 = vmatprep.subr.mxu0 0.0
    %3239 = vmatpush1.msra.mxu0 0.0
    %3240 = vmatprep.subr.mxu0 0.0
    %3241 = vmatpush1.msra.mxu0 0.0
    %3242 = vmatprep.subr.mxu0 0.0
    %3243 = vmatpush1.msra.mxu0 0.0
    %3244 = vmatprep.subr.mxu0 0.0
    %3245 = vmatpush1.msra.mxu0 0.0
    %3246 = vmatprep.subr.mxu0 0.0
    %3247 = vmatpush1.msra.mxu0 0.0
    %3248 = vmatprep.subr.mxu0 0.0
    %3249 = vmatpush1.msra.mxu0 0.0
    %3250 = vmatprep.subr.mxu0 0.0
    %3251 = vmatpush1.msra.mxu0 0.0
    %3252 = vmatprep.subr.mxu0 0.0
    %3253 = vmatpush1.msra.mxu0 0.0
    %3254 = vmatprep.subr.mxu0 0.0
    %3255 = vmatpush1.msra.mxu0 0.0
    %3256 = vmatprep.subr.mxu0 0.0
    %3257 = vmatpush1.msra.mxu0 0.0
    %3258 = vmatprep.subr.mxu0 0.0
    %3259 = vmatpush1.msra.mxu0 0.0
    %3260 = vmatprep.subr.mxu0 0.0
    %3261 = vmatpush1.msra.mxu0 0.0
    %3262 = vmatprep.subr.mxu0 0.0
    %3263 = vmatpush1.msra.mxu0 0.0
    %3264 = vmatprep.subr.mxu0 0.0
    %3265 = vmatpush1.msra.mxu0 0.0
    %3266 = vmatprep.mubr.f32.mxu0 0.0
    %3267 = vmatmul.mubr.f32.gmra.mrb[0].mxu0 %v3155
    %v3268 = vpop.f32.mrb[0].mxu0
    %v3269 = vadd.f32 %v3153, %v3268
    %v3270 = vpop.f32.mrb[0].mxu0
    %3271 = vmatprep.mubr.f32.mxu0 0.0
    %3272 = vmatmul.mubr.f32.gmra.mrb[0].mxu0 %v3158
    %v3273 = vpop.f32.mrb[0].mxu0
    %v3274 = vadd.f32 %v3153, %v3273
    %v3275 = vpop.f32.mrb[0].mxu0
    %3276 = vmatprep.mubr.f32.mxu0 0.0
    %3277 = vmatmul.mubr.f32.gmra.mrb[0].mxu0 %v3161
    %v3278 = vpop.f32.mrb[0].mxu0
    %v3279 = vadd.f32 %v3153, %v3278
    %v3280 = vpop.f32.mrb[0].mxu0
    %3281 = vmatprep.mubr.f32.mxu0 0.0
    %3282 = vmatmul.mubr.f32.gmra.mrb[0].mxu0 %v3164
    %v3283 = vpop.f32.mrb[0].mxu0
    %v3284 = vadd.f32 %v3153, %v3283
    %v3285 = vpop.f32.mrb[0].mxu0
    %3286 = vmatprep.mubr.f32.mxu0 0.0
    %3287 = vmatmul.mubr.f32.gmra.mrb[0].mxu0 %v3167
    %v3288 = vpop.f32.mrb[0].mxu0
    %v3289 = vadd.f32 %v3153, %v3288
    %v3290 = vpop.f32.mrb[0].mxu0
    %3291 = vmatprep.mubr.f32.mxu0 0.0
    %3292 = vmatmul.mubr.f32.gmra.mrb[0].mxu0 %v3170
    %v3293 = vpop.f32.mrb[0].mxu0
    %v3294 = vadd.f32 %v3153, %v3293
    %v3295 = vpop.f32.mrb[0].mxu0
    %3296 = vmatprep.mubr.f32.mxu0 0.0
    %3297 = vmatmul.mubr.f32.gmra.mrb[0].mxu0 %v3173
    %v3298 = vpop.f32.mrb[0].mxu0
    %v3299 = vadd.f32 %v3153, %v3298
    %v3300 = vpop.f32.mrb[0].mxu0
    %3301 = vmatprep.mubr.f32.mxu0 0.0
    %3302 = vmatmul.mubr.f32.gmra.mrb[0].mxu0 %v3176
    %v3303 = vpop.f32.mrb[0].mxu0
    %v3304 = vadd.f32 %v3153, %v3303
    %v3305 = vpop.f32.mrb[0].mxu0
    %3306 = vmatprep.mubr.f32.mxu0 0.0
    %3307 = vmatmul.mubr.f32.gmra.mrb[0].mxu0 %v3179
    %v3308 = vpop.f32.mrb[0].mxu0
    %v3309 = vadd.f32 %v3153, %v3308
    %v3310 = vpop.f32.mrb[0].mxu0
    %3311 = vmatprep.mubr.f32.mxu0 0.0
    %3312 = vmatmul.mubr.f32.gmra.mrb[0].mxu0 %v3182
    %v3313 = vpop.f32.mrb[0].mxu0
    %v3314 = vadd.f32 %v3153, %v3313
    %v3315 = vpop.f32.mrb[0].mxu0
    %3316 = vmatprep.mubr.f32.mxu0 0.0
    %3317 = vmatmul.mubr.f32.gmra.mrb[0].mxu0 %v3185
    %v3318 = vpop.f32.mrb[0].mxu0
    %v3319 = vadd.f32 %v3153, %v3318
    %v3320 = vpop.f32.mrb[0].mxu0
    %3321 = vmatprep.mubr.f32.mxu0 0.0
    %3322 = vmatmul.mubr.f32.gmra.mrb[0].mxu0 %v3188
    %v3323 = vpop.f32.mrb[0].mxu0
    %v3324 = vadd.f32 %v3153, %v3323
    %v3325 = vpop.f32.mrb[0].mxu0
    %3326 = vmatprep.mubr.f32.mxu0 0.0
    %3327 = vmatmul.mubr.f32.gmra.mrb[0].mxu0 %v3191
    %v3328 = vpop.f32.mrb[0].mxu0
    %v3329 = vadd.f32 %v3153, %v3328
    %v3330 = vpop.f32.mrb[0].mxu0
    %3331 = vmatprep.mubr.f32.mxu0 0.0
    %3332 = vmatmul.mubr.f32.gmra.mrb[0].mxu0 %v3194
    %v3333 = vpop.f32.mrb[0].mxu0
    %v3334 = vadd.f32 %v3153, %v3333
    %v3335 = vpop.f32.mrb[0].mxu0
    %3336 = vmatprep.mubr.f32.mxu0 0.0
    %3337 = vmatmul.mubr.f32.gmra.mrb[0].mxu0 %v3197
    %v3338 = vpop.f32.mrb[0].mxu0
    %v3339 = vadd.f32 %v3153, %v3338
    %v3340 = vpop.f32.mrb[0].mxu0
    %3341 = vmatprep.mubr.f32.mxu0 0.0
    %3342 = vmatmul.mubr.f32.gmra.mrb[0].mxu0 %v3200
    %v3343 = vpop.f32.mrb[0].mxu0
    %v3344 = vadd.f32 %v3153, %v3343
    %v3345 = vpop.f32.mrb[0].mxu0
    %3346 = vdwg.mxu0
    %v3347 = vmul.f32 %v3269, 0.5
    %v3348 = vmul.f32 %v3274, 0.5
    %v3349 = vmul.f32 %v3279, 0.5
    %v3350 = vmul.f32 %v3284, 0.5
    %v3351 = vmul.f32 %v3289, 0.5
    %v3352 = vmul.f32 %v3294, 0.5
    %v3353 = vmul.f32 %v3299, 0.5
    %v3354 = vmul.f32 %v3304, 0.5
    %v3355 = vmul.f32 %v3309, 0.5
    %v3356 = vmul.f32 %v3314, 0.5
    %v3357 = vmul.f32 %v3319, 0.5
    %v3358 = vmul.f32 %v3324, 0.5
    %v3359 = vmul.f32 %v3329, 0.5
    %v3360 = vmul.f32 %v3334, 0.5
    %v3361 = vmul.f32 %v3339, 0.5
    %v3362 = vmul.f32 %v3344, 0.5
    %v3363 = vmul.f32 %v3269, 0.70710677
    %v3364 = vmul.f32 %v3274, 0.70710677
    %v3365 = vmul.f32 %v3279, 0.70710677
    %v3366 = vmul.f32 %v3284, 0.70710677
    %v3367 = vmul.f32 %v3289, 0.70710677
    %v3368 = vmul.f32 %v3294, 0.70710677
    %v3369 = vmul.f32 %v3299, 0.70710677
    %v3370 = vmul.f32 %v3304, 0.70710677
    %v3371 = vmul.f32 %v3309, 0.70710677
    %v3372 = vmul.f32 %v3314, 0.70710677
    %v3373 = vmul.f32 %v3319, 0.70710677
    %v3374 = vmul.f32 %v3324, 0.70710677
    %v3375 = vmul.f32 %v3329, 0.70710677
    %v3376 = vmul.f32 %v3334, 0.70710677
    %v3377 = vmul.f32 %v3339, 0.70710677
    %v3378 = vmul.f32 %v3344, 0.70710677
    %v3379 = verf.f32.pop %v3363
    %v3380 = verf.f32.pop %v3364
    %v3381 = verf.f32.pop %v3365
    %v3382 = verf.f32.pop %v3366
    %v3383 = verf.f32.pop %v3367
    %v3384 = verf.f32.pop %v3368
    %v3385 = verf.f32.pop %v3369
    %v3386 = verf.f32.pop %v3370
    %v3387 = verf.f32.pop %v3371
    %v3388 = verf.f32.pop %v3372
    %v3389 = verf.f32.pop %v3373
    %v3390 = verf.f32.pop %v3374
    %v3391 = verf.f32.pop %v3375
    %v3392 = verf.f32.pop %v3376
    %v3393 = verf.f32.pop %v3377
    %v3394 = verf.f32.pop %v3378
    %v3395 = vadd.f32 %v3379, 1.0
    %v3396 = vadd.f32 %v3380, 1.0
    %v3397 = vadd.f32 %v3381, 1.0
    %v3398 = vadd.f32 %v3382, 1.0
    %v3399 = vadd.f32 %v3383, 1.0
    %v3400 = vadd.f32 %v3384, 1.0
    %v3401 = vadd.f32 %v3385, 1.0
    %v3402 = vadd.f32 %v3386, 1.0
    %v3403 = vadd.f32 %v3387, 1.0
    %v3404 = vadd.f32 %v3388, 1.0
    %v3405 = vadd.f32 %v3389, 1.0
    %v3406 = vadd.f32 %v3390, 1.0
    %v3407 = vadd.f32 %v3391, 1.0
    %v3408 = vadd.f32 %v3392, 1.0
    %v3409 = vadd.f32 %v3393, 1.0
    %v3410 = vadd.f32 %v3394, 1.0
    %v3411 = vmul.f32 %v3347, %v3395
    %v3412 = vmul.f32 %v3348, %v3396
    %v3413 = vmul.f32 %v3349, %v3397
    %v3414 = vmul.f32 %v3350, %v3398
    %v3415 = vmul.f32 %v3351, %v3399
    %v3416 = vmul.f32 %v3352, %v3400
    %v3417 = vmul.f32 %v3353, %v3401
    %v3418 = vmul.f32 %v3354, %v3402
    %v3419 = vmul.f32 %v3355, %v3403
    %v3420 = vmul.f32 %v3356, %v3404
    %v3421 = vmul.f32 %v3357, %v3405
    %v3422 = vmul.f32 %v3358, %v3406
    %v3423 = vmul.f32 %v3359, %v3407
    %v3424 = vmul.f32 %v3360, %v3408
    %v3425 = vmul.f32 %v3361, %v3409
    %v3426 = vmul.f32 %v3362, %v3410
    %v3427 = vld [vmem:[#allocation2 + $0x220] sm:$0xff]
    %v3428 = vld [vmem:[#allocation2 + $0x228] sm:$0xff]
    %v3429 = vld [vmem:[#allocation2 + $0x230] sm:$0xff]
    %v3430 = vld [vmem:[#allocation2 + $0x238] sm:$0xff]
    %v3431 = vld [vmem:[%s6 + $0xb] sm:$0x1]
    %v3432 = vlaneseq
    %v3433 = vshrl.u32 %v3432, 7
    %v3434 = vsub.s32 0, %v3433
    %v3435 = vrot.slane %v3431, %v3434
    %v3437 = vsel %vm184, %v3411, 0
    %v3440 = vsel %vm184, %v3412, 0
    %v3443 = vsel %vm184, %v3413, 0
    %v3446 = vsel %vm184, %v3414, 0
    %v3449 = vsel %vm184, %v3415, 0
    %v3452 = vsel %vm184, %v3416, 0
    %v3455 = vsel %vm184, %v3417, 0
    %v3458 = vsel %vm184, %v3418, 0
    %v3461 = vsel %vm184, %v3419, 0
    %v3464 = vsel %vm184, %v3420, 0
    %v3467 = vsel %vm184, %v3421, 0
    %v3470 = vsel %vm184, %v3422, 0
    %v3473 = vsel %vm184, %v3423, 0
    %v3476 = vsel %vm184, %v3424, 0
    %v3479 = vsel %vm184, %v3425, 0
    %v3482 = vsel %vm184, %v3426, 0
    %3484 = vmatprep.subr.mxu0 0.0
    %3485 = vmatpush1.msra.mxu0 %v3427
    %3486 = vmatprep.subr.mxu0 0.0
    %3487 = vmatpush1.msra.mxu0 %v3428
    %3488 = vmatprep.subr.mxu0 0.0
    %3489 = vmatpush1.msra.mxu0 %v3429
    %3490 = vmatprep.subr.mxu0 0.0
    %3491 = vmatpush1.msra.mxu0 %v3430
    %3492 = vmatprep.subr.mxu0 0.0
    %3493 = vmatpush1.msra.mxu0 0.0
    %3494 = vmatprep.subr.mxu0 0.0
    %3495 = vmatpush1.msra.mxu0 0.0
    %3496 = vmatprep.subr.mxu0 0.0
    %3497 = vmatpush1.msra.mxu0 0.0
    %3498 = vmatprep.subr.mxu0 0.0
    %3499 = vmatpush1.msra.mxu0 0.0
    %3500 = vmatprep.subr.mxu0 0.0
    %3501 = vmatpush1.msra.mxu0 0.0
    %3502 = vmatprep.subr.mxu0 0.0
    %3503 = vmatpush1.msra.mxu0 0.0
    %3504 = vmatprep.subr.mxu0 0.0
    %3505 = vmatpush1.msra.mxu0 0.0
    %3506 = vmatprep.subr.mxu0 0.0
    %3507 = vmatpush1.msra.mxu0 0.0
    %3508 = vmatprep.subr.mxu0 0.0
    %3509 = vmatpush1.msra.mxu0 0.0
    %3510 = vmatprep.subr.mxu0 0.0
    %3511 = vmatpush1.msra.mxu0 0.0
    %3512 = vmatprep.subr.mxu0 0.0
    %3513 = vmatpush1.msra.mxu0 0.0
    %3514 = vmatprep.subr.mxu0 0.0
    %3515 = vmatpush1.msra.mxu0 0.0
    %3516 = vmatprep.subr.mxu0 0.0
    %3517 = vmatpush1.msra.mxu0 0.0
    %3518 = vmatprep.subr.mxu0 0.0
    %3519 = vmatpush1.msra.mxu0 0.0
    %3520 = vmatprep.subr.mxu0 0.0
    %3521 = vmatpush1.msra.mxu0 0.0
    %3522 = vmatprep.subr.mxu0 0.0
    %3523 = vmatpush1.msra.mxu0 0.0
    %3524 = vmatprep.subr.mxu0 0.0
    %3525 = vmatpush1.msra.mxu0 0.0
    %3526 = vmatprep.subr.mxu0 0.0
    %3527 = vmatpush1.msra.mxu0 0.0
    %3528 = vmatprep.subr.mxu0 0.0
    %3529 = vmatpush1.msra.mxu0 0.0
    %3530 = vmatprep.subr.mxu0 0.0
    %3531 = vmatpush1.msra.mxu0 0.0
    %3532 = vmatprep.subr.mxu0 0.0
    %3533 = vmatpush1.msra.mxu0 0.0
    %3534 = vmatprep.subr.mxu0 0.0
    %3535 = vmatpush1.msra.mxu0 0.0
    %3536 = vmatprep.subr.mxu0 0.0
    %3537 = vmatpush1.msra.mxu0 0.0
    %3538 = vmatprep.subr.mxu0 0.0
    %3539 = vmatpush1.msra.mxu0 0.0
    %3540 = vmatprep.subr.mxu0 0.0
    %3541 = vmatpush1.msra.mxu0 0.0
    %3542 = vmatprep.subr.mxu0 0.0
    %3543 = vmatpush1.msra.mxu0 0.0
    %3544 = vmatprep.subr.mxu0 0.0
    %3545 = vmatpush1.msra.mxu0 0.0
    %3546 = vmatprep.subr.mxu0 0.0
    %3547 = vmatpush1.msra.mxu0 0.0
    %3548 = vmatprep.mubr.f32.mxu0 0.0
    %3549 = vmatmul.mubr.f32.gmra.mrb[0].mxu0 %v3437
    %v3550 = vpop.f32.mrb[0].mxu0
    %v3551 = vadd.f32 %v3435, %v3550
    %v3552 = vpop.f32.mrb[0].mxu0
    %3553 = vmatprep.mubr.f32.mxu0 0.0
    %3554 = vmatmul.mubr.f32.gmra.mrb[0].mxu0 %v3440
    %v3555 = vpop.f32.mrb[0].mxu0
    %v3556 = vadd.f32 %v3435, %v3555
    %v3557 = vpop.f32.mrb[0].mxu0
    %3558 = vmatprep.mubr.f32.mxu0 0.0
    %3559 = vmatmul.mubr.f32.gmra.mrb[0].mxu0 %v3443
    %v3560 = vpop.f32.mrb[0].mxu0
    %v3561 = vadd.f32 %v3435, %v3560
    %v3562 = vpop.f32.mrb[0].mxu0
    %3563 = vmatprep.mubr.f32.mxu0 0.0
    %3564 = vmatmul.mubr.f32.gmra.mrb[0].mxu0 %v3446
    %v3565 = vpop.f32.mrb[0].mxu0
    %v3566 = vadd.f32 %v3435, %v3565
    %v3567 = vpop.f32.mrb[0].mxu0
    %3568 = vmatprep.mubr.f32.mxu0 0.0
    %3569 = vmatmul.mubr.f32.gmra.mrb[0].mxu0 %v3449
    %v3570 = vpop.f32.mrb[0].mxu0
    %v3571 = vadd.f32 %v3435, %v3570
    %v3572 = vpop.f32.mrb[0].mxu0
    %3573 = vmatprep.mubr.f32.mxu0 0.0
    %3574 = vmatmul.mubr.f32.gmra.mrb[0].mxu0 %v3452
    %v3575 = vpop.f32.mrb[0].mxu0
    %v3576 = vadd.f32 %v3435, %v3575
    %v3577 = vpop.f32.mrb[0].mxu0
    %3578 = vmatprep.mubr.f32.mxu0 0.0
    %3579 = vmatmul.mubr.f32.gmra.mrb[0].mxu0 %v3455
    %v3580 = vpop.f32.mrb[0].mxu0
    %v3581 = vadd.f32 %v3435, %v3580
    %v3582 = vpop.f32.mrb[0].mxu0
    %3583 = vmatprep.mubr.f32.mxu0 0.0
    %3584 = vmatmul.mubr.f32.gmra.mrb[0].mxu0 %v3458
    %v3585 = vpop.f32.mrb[0].mxu0
    %v3586 = vadd.f32 %v3435, %v3585
    %v3587 = vpop.f32.mrb[0].mxu0
    %3588 = vmatprep.mubr.f32.mxu0 0.0
    %3589 = vmatmul.mubr.f32.gmra.mrb[0].mxu0 %v3461
    %v3590 = vpop.f32.mrb[0].mxu0
    %v3591 = vadd.f32 %v3435, %v3590
    %v3592 = vpop.f32.mrb[0].mxu0
    %3593 = vmatprep.mubr.f32.mxu0 0.0
    %3594 = vmatmul.mubr.f32.gmra.mrb[0].mxu0 %v3464
    %v3595 = vpop.f32.mrb[0].mxu0
    %v3596 = vadd.f32 %v3435, %v3595
    %v3597 = vpop.f32.mrb[0].mxu0
    %3598 = vmatprep.mubr.f32.mxu0 0.0
    %3599 = vmatmul.mubr.f32.gmra.mrb[0].mxu0 %v3467
    %v3600 = vpop.f32.mrb[0].mxu0
    %v3601 = vadd.f32 %v3435, %v3600
    %v3602 = vpop.f32.mrb[0].mxu0
    %3603 = vmatprep.mubr.f32.mxu0 0.0
    %3604 = vmatmul.mubr.f32.gmra.mrb[0].mxu0 %v3470
    %v3605 = vpop.f32.mrb[0].mxu0
    %v3606 = vadd.f32 %v3435, %v3605
    %v3607 = vpop.f32.mrb[0].mxu0
    %3608 = vmatprep.mubr.f32.mxu0 0.0
    %3609 = vmatmul.mubr.f32.gmra.mrb[0].mxu0 %v3473
    %v3610 = vpop.f32.mrb[0].mxu0
    %v3611 = vadd.f32 %v3435, %v3610
    %v3612 = vpop.f32.mrb[0].mxu0
    %3613 = vmatprep.mubr.f32.mxu0 0.0
    %3614 = vmatmul.mubr.f32.gmra.mrb[0].mxu0 %v3476
    %v3615 = vpop.f32.mrb[0].mxu0
    %v3616 = vadd.f32 %v3435, %v3615
    %v3617 = vpop.f32.mrb[0].mxu0
    %3618 = vmatprep.mubr.f32.mxu0 0.0
    %3619 = vmatmul.mubr.f32.gmra.mrb[0].mxu0 %v3479
    %v3620 = vpop.f32.mrb[0].mxu0
    %v3621 = vadd.f32 %v3435, %v3620
    %v3622 = vpop.f32.mrb[0].mxu0
    %3623 = vmatprep.mubr.f32.mxu0 0.0
    %3624 = vmatmul.mubr.f32.gmra.mrb[0].mxu0 %v3482
    %v3625 = vpop.f32.mrb[0].mxu0
    %v3626 = vadd.f32 %v3435, %v3625
    %v3627 = vpop.f32.mrb[0].mxu0
    %3628 = vdwg.mxu0
    %v3629 = vadd.f32 %v45, %v3551
    %v3630 = vadd.f32 %v46, %v3556
    %v3631 = vadd.f32 %v47, %v3561
    %v3632 = vadd.f32 %v48, %v3566
    %v3633 = vadd.f32 %v49, %v3571
    %v3634 = vadd.f32 %v50, %v3576
    %v3635 = vadd.f32 %v51, %v3581
    %v3636 = vadd.f32 %v52, %v3586
    %v3637 = vadd.f32 %v53, %v3591
    %v3638 = vadd.f32 %v54, %v3596
    %v3639 = vadd.f32 %v55, %v3601
    %v3640 = vadd.f32 %v56, %v3606
    %v3641 = vadd.f32 %v57, %v3611
    %v3642 = vadd.f32 %v58, %v3616
    %v3643 = vadd.f32 %v59, %v3621
    %v3644 = vadd.f32 %v60, %v3626
    %v3645 = vld [vmem:[%s6 + $0xc] sm:$0x1]
    %v3646 = vlaneseq
    %v3647 = vshrl.u32 %v3646, 7
    %v3648 = vsub.s32 0, %v3647
    %v3649 = vrot.slane %v3645, %v3648
    %v3650 = vmul.f32 %v3629, %v3649
    %v3651 = vmul.f32 %v3630, %v3649
    %v3652 = vmul.f32 %v3631, %v3649
    %v3653 = vmul.f32 %v3632, %v3649
    %v3654 = vmul.f32 %v3633, %v3649
    %v3655 = vmul.f32 %v3634, %v3649
    %v3656 = vmul.f32 %v3635, %v3649
    %v3657 = vmul.f32 %v3636, %v3649
    %v3658 = vmul.f32 %v3637, %v3649
    %v3659 = vmul.f32 %v3638, %v3649
    %v3660 = vmul.f32 %v3639, %v3649
    %v3661 = vmul.f32 %v3640, %v3649
    %v3662 = vmul.f32 %v3641, %v3649
    %v3663 = vmul.f32 %v3642, %v3649
    %v3664 = vmul.f32 %v3643, %v3649
    %v3665 = vmul.f32 %v3644, %v3649
    %v3666 = vld [vmem:[%s6 + $0xd] sm:$0x1]
    %v3667 = vlaneseq
    %v3668 = vshrl.u32 %v3667, 7
    %v3669 = vsub.s32 0, %v3668
    %v3670 = vrot.slane %v3666, %v3669
    %v3671 = vadd.f32 %v3650, %v3670
    %v3672 = vadd.f32 %v3651, %v3670
    %v3673 = vadd.f32 %v3652, %v3670
    %v3674 = vadd.f32 %v3653, %v3670
    %v3675 = vadd.f32 %v3654, %v3670
    %v3676 = vadd.f32 %v3655, %v3670
    %v3677 = vadd.f32 %v3656, %v3670
    %v3678 = vadd.f32 %v3657, %v3670
    %v3679 = vadd.f32 %v3658, %v3670
    %v3680 = vadd.f32 %v3659, %v3670
    %v3681 = vadd.f32 %v3660, %v3670
    %v3682 = vadd.f32 %v3661, %v3670
    %v3683 = vadd.f32 %v3662, %v3670
    %v3684 = vadd.f32 %v3663, %v3670
    %v3685 = vadd.f32 %v3664, %v3670
    %v3686 = vadd.f32 %v3665, %v3670
    %3687 = vst.msk [vmem:[%s8] sm:$0xff] %vm184, %v3671
    %3688 = vst.msk [vmem:[%s8 + $0x8] sm:$0xff] %vm184, %v3672
    %3689 = vst.msk [vmem:[%s8 + $0x10] sm:$0xff] %vm184, %v3673
    %3690 = vst.msk [vmem:[%s8 + $0x18] sm:$0xff] %vm184, %v3674
    %3691 = vst.msk [vmem:[%s8 + $0x20] sm:$0xff] %vm184, %v3675
    %3692 = vst.msk [vmem:[%s8 + $0x28] sm:$0xff] %vm184, %v3676
    %3693 = vst.msk [vmem:[%s8 + $0x30] sm:$0xff] %vm184, %v3677
    %3694 = vst.msk [vmem:[%s8 + $0x38] sm:$0xff] %vm184, %v3678
    %3695 = vst.msk [vmem:[%s8 + $0x40] sm:$0xff] %vm184, %v3679
    %3696 = vst.msk [vmem:[%s8 + $0x48] sm:$0xff] %vm184, %v3680
    %3697 = vst.msk [vmem:[%s8 + $0x50] sm:$0xff] %vm184, %v3681
    %3698 = vst.msk [vmem:[%s8 + $0x58] sm:$0xff] %vm184, %v3682
    %3699 = vst.msk [vmem:[%s8 + $0x60] sm:$0xff] %vm184, %v3683
    %3700 = vst.msk [vmem:[%s8 + $0x68] sm:$0xff] %vm184, %v3684
    %3701 = vst.msk [vmem:[%s8 + $0x70] sm:$0xff] %vm184, %v3685
    %3702 = vst.msk [vmem:[%s8 + $0x78] sm:$0xff] %vm184, %v3686
    %v3703 = vld [vmem:[%s4] sm:$0x3]
    %v3705 = vsel %vm529, %v3703, 0
    %3707 = vmatprep.subr.mxu0 0.0
    %3708 = vmatpush1.msra.mxu0 %v2404
    %3709 = vmatprep.subr.mxu0 0.0
    %3710 = vmatpush1.msra.mxu0 %v2405
    %3711 = vmatprep.subr.mxu0 0.0
    %3712 = vmatpush1.msra.mxu0 0.0
    %3713 = vmatprep.subr.mxu0 0.0
    %3714 = vmatpush1.msra.mxu0 0.0
    %3715 = vmatprep.subr.mxu0 0.0
    %3716 = vmatpush1.msra.mxu0 0.0
    %3717 = vmatprep.subr.mxu0 0.0
    %3718 = vmatpush1.msra.mxu0 0.0
    %3719 = vmatprep.subr.mxu0 0.0
    %3720 = vmatpush1.msra.mxu0 0.0
    %3721 = vmatprep.subr.mxu0 0.0
    %3722 = vmatpush1.msra.mxu0 0.0
    %3723 = vmatprep.subr.mxu0 0.0
    %3724 = vmatpush1.msra.mxu0 0.0
    %3725 = vmatprep.subr.mxu0 0.0
    %3726 = vmatpush1.msra.mxu0 0.0
    %3727 = vmatprep.subr.mxu0 0.0
    %3728 = vmatpush1.msra.mxu0 0.0
    %3729 = vmatprep.subr.mxu0 0.0
    %3730 = vmatpush1.msra.mxu0 0.0
    %3731 = vmatprep.subr.mxu0 0.0
    %3732 = vmatpush1.msra.mxu0 0.0
    %3733 = vmatprep.subr.mxu0 0.0
    %3734 = vmatpush1.msra.mxu0 0.0
    %3735 = vmatprep.subr.mxu0 0.0
    %3736 = vmatpush1.msra.mxu0 0.0
    %3737 = vmatprep.subr.mxu0 0.0
    %3738 = vmatpush1.msra.mxu0 0.0
    %3739 = vmatprep.subr.mxu0 0.0
    %3740 = vmatpush1.msra.mxu0 0.0
    %3741 = vmatprep.subr.mxu0 0.0
    %3742 = vmatpush1.msra.mxu0 0.0
    %3743 = vmatprep.subr.mxu0 0.0
    %3744 = vmatpush1.msra.mxu0 0.0
    %3745 = vmatprep.subr.mxu0 0.0
    %3746 = vmatpush1.msra.mxu0 0.0
    %3747 = vmatprep.subr.mxu0 0.0
    %3748 = vmatpush1.msra.mxu0 0.0
    %3749 = vmatprep.subr.mxu0 0.0
    %3750 = vmatpush1.msra.mxu0 0.0
    %3751 = vmatprep.subr.mxu0 0.0
    %3752 = vmatpush1.msra.mxu0 0.0
    %3753 = vmatprep.subr.mxu0 0.0
    %3754 = vmatpush1.msra.mxu0 0.0
    %3755 = vmatprep.subr.mxu0 0.0
    %3756 = vmatpush1.msra.mxu0 0.0
    %3757 = vmatprep.subr.mxu0 0.0
    %3758 = vmatpush1.msra.mxu0 0.0
    %3759 = vmatprep.subr.mxu0 0.0
    %3760 = vmatpush1.msra.mxu0 0.0
    %3761 = vmatprep.subr.mxu0 0.0
    %3762 = vmatpush1.msra.mxu0 0.0
    %3763 = vmatprep.subr.mxu0 0.0
    %3764 = vmatpush1.msra.mxu0 0.0
    %3765 = vmatprep.subr.mxu0 0.0
    %3766 = vmatpush1.msra.mxu0 0.0
    %3767 = vmatprep.subr.mxu0 0.0
    %3768 = vmatpush1.msra.mxu0 0.0
    %3769 = vmatprep.subr.mxu0 0.0
    %3770 = vmatpush1.msra.mxu0 0.0
    %3771 = vmatprep.mubr.f32.mxu0 0.0
    %3772 = vmatmul.mubr.f32.gmra.mrb[0].mxu0 %v3705
    %v3773 = vpop.f32.mrb[0].mxu0
    %v3774 = vadd.f32 0.0, %v3773
    %v3775 = vpop.f32.mrb[0].mxu0
    %3776 = vdwg.mxu0
    %v3777 = vld [vmem:[#allocation2 + $0x240] sm:$0xff]
    %v3778 = vld [vmem:[#allocation2 + $0x248] sm:$0xff]
    %v3779 = vld [vmem:[#allocation2 + $0x250] sm:$0xff]
    %v3780 = vld [vmem:[#allocation2 + $0x258] sm:$0xff]
    %v3781 = vld [vmem:[%s6 + $0xe] sm:$0x1]
    %v3782 = vlaneseq
    %v3783 = vshrl.u32 %v3782, 7
    %v3784 = vsub.s32 0, %v3783
    %v3785 = vrot.slane %v3781, %v3784
    %v3787 = vsel %vm184, %v3774, 0
    %3789 = vmatprep.subr.mxu0 0.0
    %3790 = vmatpush1.msra.mxu0 %v3777
    %3791 = vmatprep.subr.mxu0 0.0
    %3792 = vmatpush1.msra.mxu0 %v3778
    %3793 = vmatprep.subr.mxu0 0.0
    %3794 = vmatpush1.msra.mxu0 %v3779
    %3795 = vmatprep.subr.mxu0 0.0
    %3796 = vmatpush1.msra.mxu0 %v3780
    %3797 = vmatprep.subr.mxu0 0.0
    %3798 = vmatpush1.msra.mxu0 0.0
    %3799 = vmatprep.subr.mxu0 0.0
    %3800 = vmatpush1.msra.mxu0 0.0
    %3801 = vmatprep.subr.mxu0 0.0
    %3802 = vmatpush1.msra.mxu0 0.0
    %3803 = vmatprep.subr.mxu0 0.0
    %3804 = vmatpush1.msra.mxu0 0.0
    %3805 = vmatprep.subr.mxu0 0.0
    %3806 = vmatpush1.msra.mxu0 0.0
    %3807 = vmatprep.subr.mxu0 0.0
    %3808 = vmatpush1.msra.mxu0 0.0
    %3809 = vmatprep.subr.mxu0 0.0
    %3810 = vmatpush1.msra.mxu0 0.0
    %3811 = vmatprep.subr.mxu0 0.0
    %3812 = vmatpush1.msra.mxu0 0.0
    %3813 = vmatprep.subr.mxu0 0.0
    %3814 = vmatpush1.msra.mxu0 0.0
    %3815 = vmatprep.subr.mxu0 0.0
    %3816 = vmatpush1.msra.mxu0 0.0
    %3817 = vmatprep.subr.mxu0 0.0
    %3818 = vmatpush1.msra.mxu0 0.0
    %3819 = vmatprep.subr.mxu0 0.0
    %3820 = vmatpush1.msra.mxu0 0.0
    %3821 = vmatprep.subr.mxu0 0.0
    %3822 = vmatpush1.msra.mxu0 0.0
    %3823 = vmatprep.subr.mxu0 0.0
    %3824 = vmatpush1.msra.mxu0 0.0
    %3825 = vmatprep.subr.mxu0 0.0
    %3826 = vmatpush1.msra.mxu0 0.0
    %3827 = vmatprep.subr.mxu0 0.0
    %3828 = vmatpush1.msra.mxu0 0.0
    %3829 = vmatprep.subr.mxu0 0.0
    %3830 = vmatpush1.msra.mxu0 0.0
    %3831 = vmatprep.subr.mxu0 0.0
    %3832 = vmatpush1.msra.mxu0 0.0
    %3833 = vmatprep.subr.mxu0 0.0
    %3834 = vmatpush1.msra.mxu0 0.0
    %3835 = vmatprep.subr.mxu0 0.0
    %3836 = vmatpush1.msra.mxu0 0.0
    %3837 = vmatprep.subr.mxu0 0.0
    %3838 = vmatpush1.msra.mxu0 0.0
    %3839 = vmatprep.subr.mxu0 0.0
    %3840 = vmatpush1.msra.mxu0 0.0
    %3841 = vmatprep.subr.mxu0 0.0
    %3842 = vmatpush1.msra.mxu0 0.0
    %3843 = vmatprep.subr.mxu0 0.0
    %3844 = vmatpush1.msra.mxu0 0.0
    %3845 = vmatprep.subr.mxu0 0.0
    %3846 = vmatpush1.msra.mxu0 0.0
    %3847 = vmatprep.subr.mxu0 0.0
    %3848 = vmatpush1.msra.mxu0 0.0
    %3849 = vmatprep.subr.mxu0 0.0
    %3850 = vmatpush1.msra.mxu0 0.0
    %3851 = vmatprep.subr.mxu0 0.0
    %3852 = vmatpush1.msra.mxu0 0.0
    %3853 = vmatprep.mubr.f32.mxu0 0.0
    %3854 = vmatmul.mubr.f32.gmra.mrb[0].mxu0 %v3787
    %v3855 = vpop.f32.mrb[0].mxu0
    %v3856 = vadd.f32 %v3785, %v3855
    %v3857 = vpop.f32.mrb[0].mxu0
    %3858 = vdwg.mxu0
    %v3859 = vmax.f32 %v3856, 0.0
    %v3860 = vld [vmem:[#allocation2 + $0x260] sm:$0xff]
    %v3861 = vld [vmem:[#allocation2 + $0x268] sm:$0xff]
    %v3862 = vld [vmem:[#allocation2 + $0x270] sm:$0xff]
    %v3863 = vld [vmem:[#allocation2 + $0x278] sm:$0xff]
    %v3864 = vld [vmem:[%s6 + $0xf] sm:$0x1]
    %v3865 = vlaneseq
    %v3866 = vshrl.u32 %v3865, 7
    %v3867 = vsub.s32 0, %v3866
    %v3868 = vrot.slane %v3864, %v3867
    %v3870 = vsel %vm184, %v3859, 0
    %3872 = vmatprep.subr.mxu0 0.0
    %3873 = vmatpush1.msra.mxu0 %v3860
    %3874 = vmatprep.subr.mxu0 0.0
    %3875 = vmatpush1.msra.mxu0 %v3861
    %3876 = vmatprep.subr.mxu0 0.0
    %3877 = vmatpush1.msra.mxu0 %v3862
    %3878 = vmatprep.subr.mxu0 0.0
    %3879 = vmatpush1.msra.mxu0 %v3863
    %3880 = vmatprep.subr.mxu0 0.0
    %3881 = vmatpush1.msra.mxu0 0.0
    %3882 = vmatprep.subr.mxu0 0.0
    %3883 = vmatpush1.msra.mxu0 0.0
    %3884 = vmatprep.subr.mxu0 0.0
    %3885 = vmatpush1.msra.mxu0 0.0
    %3886 = vmatprep.subr.mxu0 0.0
    %3887 = vmatpush1.msra.mxu0 0.0
    %3888 = vmatprep.subr.mxu0 0.0
    %3889 = vmatpush1.msra.mxu0 0.0
    %3890 = vmatprep.subr.mxu0 0.0
    %3891 = vmatpush1.msra.mxu0 0.0
    %3892 = vmatprep.subr.mxu0 0.0
    %3893 = vmatpush1.msra.mxu0 0.0
    %3894 = vmatprep.subr.mxu0 0.0
    %3895 = vmatpush1.msra.mxu0 0.0
    %3896 = vmatprep.subr.mxu0 0.0
    %3897 = vmatpush1.msra.mxu0 0.0
    %3898 = vmatprep.subr.mxu0 0.0
    %3899 = vmatpush1.msra.mxu0 0.0
    %3900 = vmatprep.subr.mxu0 0.0
    %3901 = vmatpush1.msra.mxu0 0.0
    %3902 = vmatprep.subr.mxu0 0.0
    %3903 = vmatpush1.msra.mxu0 0.0
    %3904 = vmatprep.subr.mxu0 0.0
    %3905 = vmatpush1.msra.mxu0 0.0
    %3906 = vmatprep.subr.mxu0 0.0
    %3907 = vmatpush1.msra.mxu0 0.0
    %3908 = vmatprep.subr.mxu0 0.0
    %3909 = vmatpush1.msra.mxu0 0.0
    %3910 = vmatprep.subr.mxu0 0.0
    %3911 = vmatpush1.msra.mxu0 0.0
    %3912 = vmatprep.subr.mxu0 0.0
    %3913 = vmatpush1.msra.mxu0 0.0
    %3914 = vmatprep.subr.mxu0 0.0
    %3915 = vmatpush1.msra.mxu0 0.0
    %3916 = vmatprep.subr.mxu0 0.0
    %3917 = vmatpush1.msra.mxu0 0.0
    %3918 = vmatprep.subr.mxu0 0.0
    %3919 = vmatpush1.msra.mxu0 0.0
    %3920 = vmatprep.subr.mxu0 0.0
    %3921 = vmatpush1.msra.mxu0 0.0
    %3922 = vmatprep.subr.mxu0 0.0
    %3923 = vmatpush1.msra.mxu0 0.0
    %3924 = vmatprep.subr.mxu0 0.0
    %3925 = vmatpush1.msra.mxu0 0.0
    %3926 = vmatprep.subr.mxu0 0.0
    %3927 = vmatpush1.msra.mxu0 0.0
    %3928 = vmatprep.subr.mxu0 0.0
    %3929 = vmatpush1.msra.mxu0 0.0
    %3930 = vmatprep.subr.mxu0 0.0
    %3931 = vmatpush1.msra.mxu0 0.0
    %3932 = vmatprep.subr.mxu0 0.0
    %3933 = vmatpush1.msra.mxu0 0.0
    %3934 = vmatprep.subr.mxu0 0.0
    %3935 = vmatpush1.msra.mxu0 0.0
    %3936 = vmatprep.mubr.f32.mxu0 0.0
    %3937 = vmatmul.mubr.f32.gmra.mrb[0].mxu0 %v3870
    %v3938 = vpop.f32.mrb[0].mxu0
    %v3939 = vadd.f32 %v3868, %v3938
    %v3940 = vpop.f32.mrb[0].mxu0
    %3941 = vdwg.mxu0
    %v3942 = vmax.f32 %v3939, 0.0
    %v3943 = vld [vmem:[#allocation2 + $0x280] sm:$0xff]
    %v3944 = vld [vmem:[#allocation2 + $0x288] sm:$0xff]
    %v3945 = vld [vmem:[#allocation2 + $0x290] sm:$0xff]
    %v3946 = vld [vmem:[#allocation2 + $0x298] sm:$0xff]
    %v3947 = vld [vmem:[%s6 + $0x10] sm:$0x1]
    %v3948 = vlaneseq
    %v3949 = vshrl.u32 %v3948, 7
    %v3950 = vsub.s32 0, %v3949
    %v3951 = vrot.slane %v3947, %v3950
    %v3953 = vsel %vm184, %v3942, 0
    %3955 = vmatprep.subr.mxu0 0.0
    %3956 = vmatpush1.msra.mxu0 %v3943
    %3957 = vmatprep.subr.mxu0 0.0
    %3958 = vmatpush1.msra.mxu0 %v3944
    %3959 = vmatprep.subr.mxu0 0.0
    %3960 = vmatpush1.msra.mxu0 %v3945
    %3961 = vmatprep.subr.mxu0 0.0
    %3962 = vmatpush1.msra.mxu0 %v3946
    %3963 = vmatprep.subr.mxu0 0.0
    %3964 = vmatpush1.msra.mxu0 0.0
    %3965 = vmatprep.subr.mxu0 0.0
    %3966 = vmatpush1.msra.mxu0 0.0
    %3967 = vmatprep.subr.mxu0 0.0
    %3968 = vmatpush1.msra.mxu0 0.0
    %3969 = vmatprep.subr.mxu0 0.0
    %3970 = vmatpush1.msra.mxu0 0.0
    %3971 = vmatprep.subr.mxu0 0.0
    %3972 = vmatpush1.msra.mxu0 0.0
    %3973 = vmatprep.subr.mxu0 0.0
    %3974 = vmatpush1.msra.mxu0 0.0
    %3975 = vmatprep.subr.mxu0 0.0
    %3976 = vmatpush1.msra.mxu0 0.0
    %3977 = vmatprep.subr.mxu0 0.0
    %3978 = vmatpush1.msra.mxu0 0.0
    %3979 = vmatprep.subr.mxu0 0.0
    %3980 = vmatpush1.msra.mxu0 0.0
    %3981 = vmatprep.subr.mxu0 0.0
    %3982 = vmatpush1.msra.mxu0 0.0
    %3983 = vmatprep.subr.mxu0 0.0
    %3984 = vmatpush1.msra.mxu0 0.0
    %3985 = vmatprep.subr.mxu0 0.0
    %3986 = vmatpush1.msra.mxu0 0.0
    %3987 = vmatprep.subr.mxu0 0.0
    %3988 = vmatpush1.msra.mxu0 0.0
    %3989 = vmatprep.subr.mxu0 0.0
    %3990 = vmatpush1.msra.mxu0 0.0
    %3991 = vmatprep.subr.mxu0 0.0
    %3992 = vmatpush1.msra.mxu0 0.0
    %3993 = vmatprep.subr.mxu0 0.0
    %3994 = vmatpush1.msra.mxu0 0.0
    %3995 = vmatprep.subr.mxu0 0.0
    %3996 = vmatpush1.msra.mxu0 0.0
    %3997 = vmatprep.subr.mxu0 0.0
    %3998 = vmatpush1.msra.mxu0 0.0
    %3999 = vmatprep.subr.mxu0 0.0
    %4000 = vmatpush1.msra.mxu0 0.0
    %4001 = vmatprep.subr.mxu0 0.0
    %4002 = vmatpush1.msra.mxu0 0.0
    %4003 = vmatprep.subr.mxu0 0.0
    %4004 = vmatpush1.msra.mxu0 0.0
    %4005 = vmatprep.subr.mxu0 0.0
    %4006 = vmatpush1.msra.mxu0 0.0
    %4007 = vmatprep.subr.mxu0 0.0
    %4008 = vmatpush1.msra.mxu0 0.0
    %4009 = vmatprep.subr.mxu0 0.0
    %4010 = vmatpush1.msra.mxu0 0.0
    %4011 = vmatprep.subr.mxu0 0.0
    %4012 = vmatpush1.msra.mxu0 0.0
    %4013 = vmatprep.subr.mxu0 0.0
    %4014 = vmatpush1.msra.mxu0 0.0
    %4015 = vmatprep.subr.mxu0 0.0
    %4016 = vmatpush1.msra.mxu0 0.0
    %4017 = vmatprep.subr.mxu0 0.0
    %4018 = vmatpush1.msra.mxu0 0.0
    %4019 = vmatprep.mubr.f32.mxu0 0.0
    %4020 = vmatmul.mubr.f32.gmra.mrb[0].mxu0 %v3953
    %v4021 = vpop.f32.mrb[0].mxu0
    %v4022 = vadd.f32 %v3951, %v4021
    %v4023 = vpop.f32.mrb[0].mxu0
    %4024 = vdwg.mxu0
    %v4025 = vxor.u32 %v4022, 2147483648
    %v4026 = vmul.f32 %v4025, 1.442695
    %v4027 = vpow.pop %v4026
    %v4028 = vadd.f32 %v4027, 1.0
    %v4029 = vrcp.pop %v4028
    %v4030 = vmul.f32 1.0, %v4029
    %v4031 = vld [vmem:[%s3] sm:$0xff]
    %v4032 = vld [vmem:[%s3 + $0x8] sm:$0xff]
    %vm4033 = vcmask 15360
    %v4035 = vsel %vm4033, %v4031, 0
    %v4038 = vsel %vm4033, %v4032, 0
    %vm4040 = vcmask 1041408
    %v4042 = vsel %vm4040, %v4030, 0
    %4044 = vmatprep.subr.mxu0 0.0
    %4045 = vmatpush1.msra.mxu0 %v4042
    %4046 = vmatprep.subr.mxu0 0.0
    %4047 = vmatpush1.msra.mxu0 0.0
    %4048 = vmatprep.subr.mxu0 0.0
    %4049 = vmatpush1.msra.mxu0 0.0
    %4050 = vmatprep.subr.mxu0 0.0
    %4051 = vmatpush1.msra.mxu0 0.0
    %4052 = vmatprep.subr.mxu0 0.0
    %4053 = vmatpush1.msra.mxu0 0.0
    %4054 = vmatprep.subr.mxu0 0.0
    %4055 = vmatpush1.msra.mxu0 0.0
    %4056 = vmatprep.subr.mxu0 0.0
    %4057 = vmatpush1.msra.mxu0 0.0
    %4058 = vmatprep.subr.mxu0 0.0
    %4059 = vmatpush1.msra.mxu0 0.0
    %4060 = vmatprep.subr.mxu0 0.0
    %4061 = vmatpush1.msra.mxu0 0.0
    %4062 = vmatprep.subr.mxu0 0.0
    %4063 = vmatpush1.msra.mxu0 0.0
    %4064 = vmatprep.subr.mxu0 0.0
    %4065 = vmatpush1.msra.mxu0 0.0
    %4066 = vmatprep.subr.mxu0 0.0
    %4067 = vmatpush1.msra.mxu0 0.0
    %4068 = vmatprep.subr.mxu0 0.0
    %4069 = vmatpush1.msra.mxu0 0.0
    %4070 = vmatprep.subr.mxu0 0.0
    %4071 = vmatpush1.msra.mxu0 0.0
    %4072 = vmatprep.subr.mxu0 0.0
    %4073 = vmatpush1.msra.mxu0 0.0
    %4074 = vmatprep.subr.mxu0 0.0
    %4075 = vmatpush1.msra.mxu0 0.0
    %4076 = vmatprep.subr.mxu0 0.0
    %4077 = vmatpush1.msra.mxu0 0.0
    %4078 = vmatprep.subr.mxu0 0.0
    %4079 = vmatpush1.msra.mxu0 0.0
    %4080 = vmatprep.subr.mxu0 0.0
    %4081 = vmatpush1.msra.mxu0 0.0
    %4082 = vmatprep.subr.mxu0 0.0
    %4083 = vmatpush1.msra.mxu0 0.0
    %4084 = vmatprep.subr.mxu0 0.0
    %4085 = vmatpush1.msra.mxu0 0.0
    %4086 = vmatprep.subr.mxu0 0.0
    %4087 = vmatpush1.msra.mxu0 0.0
    %4088 = vmatprep.subr.mxu0 0.0
    %4089 = vmatpush1.msra.mxu0 0.0
    %4090 = vmatprep.subr.mxu0 0.0
    %4091 = vmatpush1.msra.mxu0 0.0
    %4092 = vmatprep.subr.mxu0 0.0
    %4093 = vmatpush1.msra.mxu0 0.0
    %4094 = vmatprep.subr.mxu0 0.0
    %4095 = vmatpush1.msra.mxu0 0.0
    %4096 = vmatprep.subr.mxu0 0.0
    %4097 = vmatpush1.msra.mxu0 0.0
    %4098 = vmatprep.subr.mxu0 0.0
    %4099 = vmatpush1.msra.mxu0 0.0
    %4100 = vmatprep.subr.mxu0 0.0
    %4101 = vmatpush1.msra.mxu0 0.0
    %4102 = vmatprep.subr.mxu0 0.0
    %4103 = vmatpush1.msra.mxu0 0.0
    %4104 = vmatprep.subr.mxu0 0.0
    %4105 = vmatpush1.msra.mxu0 0.0
    %4106 = vmatprep.subr.mxu0 0.0
    %4107 = vmatpush1.msra.mxu0 0.0
    %4108 = vmatprep.mubr.f32.mxu0 0.0
    %4109 = vmatmul.mubr.f32.gmra.mrb[0].mxu0 %v4035
    %v4110 = vpop.f32.mrb[0].mxu0
    %v4111 = vadd.f32 0.0, %v4110
    %v4112 = vpop.f32.mrb[0].mxu0
    %4113 = vmatprep.mubr.f32.mxu0 0.0
    %4114 = vmatmul.mubr.f32.gmra.mrb[0].mxu0 %v4038
    %v4115 = vpop.f32.mrb[0].mxu0
    %v4116 = vadd.f32 0.0, %v4115
    %v4117 = vpop.f32.mrb[0].mxu0
    %4118 = vdwg.mxu0
    %v4119 = vmul.f32 %v2404, %v4111
    %v4120 = vmul.f32 %v2405, %v4116
    %4121 = vst.msk [vmem:[#allocation5] sm:$0xff] %vm184, %v4119
    %4122 = vst.msk [vmem:[#allocation5 + $0x8] sm:$0xff] %vm184, %v4120
    // Predicated region
    $region34: #{pignn_forward.1} parent=1 // pred_check
      _
    $region35: #{pignn_forward.1} parent=1 // pred_check_branch
      %4124 = sbr.rel (0) target = $region37
    $region36: #{pignn_forward.1} parent=1 // pred_region
      %s4126 = ssub.s32 256, 256
      %4127 = vsyncadd [#allocation4], %s4126
      %s4128 = sshll.u32 [#allocation5], 4
      %s4129 = int_to_ptr.vmem [resolvable:$true] %s4128
      %4134 = dma.vmem_to_hbm [thread:$0]  %s4129, 256, %s7, [#allocation4], 128, 128, 8
    $region37: #{pignn_forward.1} parent=1 // pred_fallthru
      _
    // Predicated region
    $region38: #{pignn_forward.1} parent=1 // pred_check
      _
    $region39: #{pignn_forward.1} parent=1 // pred_check_branch
      %4136 = sbr.rel (0) target = $region41
    $region40: #{pignn_forward.1} parent=1 // pred_region
      _
    $region41: #{pignn_forward.1} parent=1 // pred_fallthru
      _
    // Predicated region
    $region42: #{pignn_forward.1} parent=1 // pred_check
      _
    $region43: #{pignn_forward.1} parent=1 // pred_check_branch
      %4138 = sbr.rel (0) target = $region45
    $region44: #{pignn_forward.1} parent=1 // pred_region
      %4139 = dma.done [#allocation4], 256
    $region45: #{pignn_forward.1} parent=1 // pred_fallthru
      _
    // Predicated region
    $region46: #{pignn_forward.1} parent=1 // pred_check
      _
    $region47: #{pignn_forward.1} parent=1 // pred_check_branch
      %4141 = sbr.rel (0) target = $region49
    $region48: #{pignn_forward.1} parent=1 // pred_region
      _
    $region49: #{pignn_forward.1} parent=1 // pred_fallthru
      _
    %4142 = vsyncpa [#allocation3], 1
    %4143 = vsyncpa [#allocation4], 1

</llo_original>
